<compile_context>
chip_gen: v5e
topology: v5e:2x2
jax: 0.10.0
libtpu: 0.0.40
codegen_flags: <defaults>
</compile_context>

<pallas_src>
import functools

import jax
import jax.numpy as jnp
from jax.experimental import pallas as pl
from jax.experimental.pallas import tpu as pltpu

EPS = 1e-5
VMEM_LIMIT = 32 * 1024 * 1024   # sized for v7x (64 MiB physical VMEM) with headroom


def _round_up(x, m):
    return (x + m - 1) // m * m


def _choose_tk(k):
    # Full-K block when small (no divisibility constraint when block == full dim);
    # otherwise pick a lane-aligned divisor, falling back to zero-padding K.
    if k <= 1024:
        return k
    for tk in (512, 384, 256, 128):
        if k % tk == 0:
            return tk
    return 512


# --------------------------------------------------------------------------- kernels
def _mm_stats_kernel(a_ref, w_ref, o_ref, csum_ref, csq_ref, acc_ref):
    """Pass 1: tiled matmul (bf16 operands, f32 accumulation) + per-channel sum/sumsq."""
    i = pl.program_id(0)          # M tile
    k = pl.program_id(1)          # K tile (reduction axis, innermost)

    @pl.when(k == 0)
    def _():
        acc_ref[...] = jnp.zeros_like(acc_ref)

    @pl.when(jnp.logical_and(i == 0, k == 0))
    def _():
        csum_ref[...] = jnp.zeros_like(csum_ref)
        csq_ref[...] = jnp.zeros_like(csq_ref)

    acc_ref[...] += jnp.dot(a_ref[...], w_ref[...],
                            preferred_element_type=jnp.float32)

    @pl.when(k == pl.num_programs(1) - 1)
    def _():
        acc = acc_ref[...]
        o_ref[...] = acc.astype(o_ref.dtype)
        # zero-padded M rows contribute 0 here, so dividing by the true M later is exact
        csum_ref[...] += jnp.sum(acc, axis=0, keepdims=True)
        csq_ref[...] += jnp.sum(acc * acc, axis=0, keepdims=True)


def _bn_act_kernel(*refs, relu, add_res, inv_m):
    """Pass 2: train-mode BatchNorm normalize + optional residual add + optional ReLU."""
    if add_res:
        x_ref, csum_ref, csq_ref, g_ref, b_ref, res_ref, o_ref = refs
    else:
        x_ref, csum_ref, csq_ref, g_ref, b_ref, o_ref = refs
    mean = csum_ref[...] * inv_m                                   # (1, Cout)
    var = jnp.maximum(csq_ref[...] * inv_m - mean * mean, 0.0)     # biased var (train BN)
    scale = g_ref[...] * jax.lax.rsqrt(var + EPS)
    y = (x_ref[...] - mean) * scale + b_ref[...]
    if add_res:
        y = y + res_ref[...]
    if relu:
        y = jnp.maximum(y, 0.0)
    o_ref[...] = y.astype(o_ref.dtype)


# --------------------------------------------------------------------------- wrappers
def _fused_conv_bn(a, w, gamma, beta, *, relu, residual=None):
    """conv (matmul over im2col rows) -> train-mode BN -> (+residual) -> (ReLU)."""
    m, k = a.shape
    cout = w.shape[1]

    tm = min(256, _round_up(m, 8))     # M tile: multiple of 8 sublanes, VMEM-friendly
    tk = _choose_tk(k)                 # K tile: lane aligned (or full K)
    mp = _round_up(m, tm)
    kp = _round_up(k, tk)
    n_m, n_k = mp // tm, kp // tk

    # bf16 MXU operands; zero padding is exact for the matmul and contributes nothing
    # to the BN sum / sumsq, so statistics below divide by the true row count m.
    a_b = jnp.pad(a.astype(jnp.bfloat16), ((0, mp - m), (0, kp - k)))
    w_b = jnp.pad(w.astype(jnp.bfloat16), ((0, kp - k), (0, 0)))

    conv_out, csum, csq = pl.pallas_call(
        _mm_stats_kernel,
        out_shape=(jax.ShapeDtypeStruct((mp, cout), jnp.float32),
                   jax.ShapeDtypeStruct((1, cout), jnp.float32),
                   jax.ShapeDtypeStruct((1, cout), jnp.float32)),
        grid_spec=pltpu.PrefetchScalarGridSpec(
            num_scalar_prefetch=0,
            grid=(n_m, n_k),
            in_specs=[pl.BlockSpec((tm, tk), lambda i, kk: (i, kk)),
                      pl.BlockSpec((tk, cout), lambda i, kk: (kk, 0))],
            out_specs=[pl.BlockSpec((tm, cout), lambda i, kk: (i, 0)),
                       pl.BlockSpec((1, cout), lambda i, kk: (0, 0)),
                       pl.BlockSpec((1, cout), lambda i, kk: (0, 0))],
            scratch_shapes=[pltpu.VMEM((tm, cout), jnp.float32)]),
        compiler_params=pltpu.CompilerParams(
            # the stats outputs are revisited across the M axis -> keep both 'arbitrary'
            dimension_semantics=("arbitrary", "arbitrary"),
            vmem_limit_bytes=VMEM_LIMIT),
        cost_estimate=pl.CostEstimate(
            flops=2 * mp * kp * cout,
            transcendentals=0,
            bytes_accessed=a_b.size * 2 + w_b.size * 2 + (mp * cout + 2 * cout) * 4),
    )(a_b, w_b)

    add_res = residual is not None
    kernel2 = functools.partial(_bn_act_kernel, relu=relu, add_res=add_res,
                                inv_m=1.0 / m)
    operands = [conv_out, csum, csq, gamma, beta]
    in_specs = [pl.BlockSpec((tm, cout), lambda i: (i, 0)),
                pl.BlockSpec((1, cout), lambda i: (0, 0)),
                pl.BlockSpec((1, cout), lambda i: (0, 0)),
                pl.BlockSpec((1, cout), lambda i: (0, 0)),
                pl.BlockSpec((1, cout), lambda i: (0, 0))]
    if add_res:
        operands.append(jnp.pad(residual.astype(jnp.float32), ((0, mp - m), (0, 0))))
        in_specs.append(pl.BlockSpec((tm, cout), lambda i: (i, 0)))

    out = pl.pallas_call(
        kernel2,
        out_shape=jax.ShapeDtypeStruct((mp, cout), jnp.float32),
        grid_spec=pltpu.PrefetchScalarGridSpec(
            num_scalar_prefetch=0,
            grid=(n_m,),
            in_specs=in_specs,
            out_specs=pl.BlockSpec((tm, cout), lambda i: (i, 0))),
        compiler_params=pltpu.CompilerParams(
            dimension_semantics=("parallel",),     # megacore sharding on v7x
            vmem_limit_bytes=VMEM_LIMIT),
        cost_estimate=pl.CostEstimate(
            flops=mp * cout * (6 if add_res else 5),
            transcendentals=n_m * cout,
            bytes_accessed=(mp * cout * (3 if add_res else 2) + 4 * cout) * 4),
    )(*operands)
    return out[:m]


def _im2col(x, k, stride, pad):
    """NHWC -> (N*Ho*Wo, k*k*C) bf16 im2col patches, columns ordered [kh, kw, cin]."""
    x = x.astype(jnp.bfloat16)
    n, h, w, c = x.shape
    xp = jnp.pad(x, ((0, 0), (pad, pad), (pad, pad), (0, 0)))
    ho = (h + 2 * pad - k) // stride + 1
    wo = (w + 2 * pad - k) // stride + 1
    cols = []
    for kh in range(k):
        for kw in range(k):
            cols.append(xp[:, kh:kh + stride * (ho - 1) + 1:stride,
                           kw:kw + stride * (wo - 1) + 1:stride, :])
    patches = jnp.concatenate(cols, axis=-1)           # (N, Ho, Wo, k*k*C)
    return patches.reshape(n * ho * wo, k * k * c), (ho, wo)


def basic_block_forward(params, x_nchw):
    """out = relu(bn2(conv2(relu(bn1(conv1(x))))) + shortcut(x)); NCHW in, NCHW out."""
    stride = params['stride']
    x = jnp.transpose(x_nchw, (0, 2, 3, 1)).astype(jnp.float32)      # NCHW -> NHWC
    n, h, w, cin = x.shape
    planes = params['w1'].shape[1]

    # conv1 (3x3, stride, pad 1) -> bn1 -> relu
    a1, (h1, w1) = _im2col(x, 3, stride, 1)
    out1 = _fused_conv_bn(a1, params['w1'], params['g1'], params['b1'], relu=True)
    out1_nhwc = out1.reshape(n, h1, w1, planes)

    # shortcut: identity, or 1x1 conv (stride) + bn
    if 'ws' in params:
        a_s, _ = _im2col(x, 1, stride, 0)
        shortcut = _fused_conv_bn(a_s, params['ws'], params['gs'], params['bs'],
                                  relu=False)
    else:
        shortcut = x.reshape(n * h * w, cin)

    # conv2 (3x3, stride 1, pad 1) -> bn2 -> (+shortcut) -> relu (fused in pass 2)
    a2, (h2, w2) = _im2col(out1_nhwc, 3, 1, 1)
    out2 = _fused_conv_bn(a2, params['w2'], params['g2'], params['b2'],
                          relu=True, residual=shortcut)
    out_nhwc = out2.reshape(n, h2, w2, planes)
    return jnp.transpose(out_nhwc, (0, 3, 1, 2))                     # NHWC -> NCHW


# --------------------------------------------------------------------------- params
def init_params(key, in_planes, planes, stride):
    k1, k2, k3 = jax.random.split(key, 3)

    def conv_w(kk, cin, cout, ks):
        fan_in = ks * ks * cin
        # stored directly in im2col layout (ks*ks*cin, cout), rows ordered [kh, kw, cin]
        return jax.random.normal(kk, (ks * ks * cin, cout), jnp.float32) * jnp.sqrt(2.0 / fan_in)

    def bn(c):
        # PyTorch BatchNorm2d default init: gamma = 1, beta = 0
        return jnp.ones((1, c), jnp.float32), jnp.zeros((1, c), jnp.float32)

    p = {'stride': stride,
         'w1': conv_w(k1, in_planes, planes, 3),
         'w2': conv_w(k2, planes, planes, 3)}
    p['g1'], p['b1'] = bn(planes)
    p['g2'], p['b2'] = bn(planes)
    if stride != 1 or in_planes != planes:
        p['ws'] = conv_w(k3, in_planes, planes, 1)
        p['gs'], p['bs'] = bn(planes)
    return p


if __name__ == "__main__":
    key = jax.random.PRNGKey(0)
    pkey, xkey = jax.random.split(key)

    in_planes, planes, stride = 64, 128, 1          # projection shortcut (64 -> 128)
    params = init_params(pkey, in_planes, planes, stride)
    x = jax.random.normal(xkey, (2, in_planes, 16, 16), jnp.float32)   # NCHW, like PyTorch

    fwd = jax.jit(functools.partial(basic_block_forward, params))
    out = jax.block_until_ready(fwd(x))

    ho = (16 + 2 - 3) // stride + 1
    assert out.shape == (2, planes, ho, ho), out.shape
    assert bool(jnp.all(jnp.isfinite(out)))
    print("KERNEL_OK")
</pallas_src>

<mosaic_0001>
module attributes {stable_mosaic.version = 11 : i64} {
  func.func @_mm_stats_kernel(%arg0: i32, %arg1: i32, %arg2: memref<256x576xbf16, #tpu.memory_space<vmem>>, %arg3: memref<576x128xbf16, #tpu.memory_space<vmem>>, %arg4: memref<256x128xf32, #tpu.memory_space<vmem>>, %arg5: memref<1x128xf32, #tpu.memory_space<vmem>>, %arg6: memref<1x128xf32, #tpu.memory_space<vmem>>, %arg7: memref<256x128xf32, #tpu.memory_space<vmem>>) attributes {dimension_semantics = [#tpu.dimension_semantics<arbitrary>, #tpu.dimension_semantics<arbitrary>], iteration_bounds = array<i64: 2, 1>, scalar_prefetch = 0 : i64, scratch_operands = 1 : i64, tpu.core_type = #tpu.core_type<tc>, window_params = [{transform_indices = @transform_0, window_bounds = array<i64: 256, 576>}, {transform_indices = @transform_1, window_bounds = array<i64: 576, 128>}, {transform_indices = @transform_2, window_bounds = array<i64: 256, 128>}, {pipeline_mode = #tpu.pipeline_mode<synchronous>, transform_indices = @transform_3, window_bounds = array<i64: 1, 128>}, {pipeline_mode = #tpu.pipeline_mode<synchronous>, transform_indices = @transform_4, window_bounds = array<i64: 1, 128>}]} {
    %c0_i32 = arith.constant 0 : i32
    %0 = arith.cmpi eq, %arg1, %c0_i32 : i32
    %1 = arith.extui %0 : i1 to i32
    %c0_i32_0 = arith.constant 0 : i32
    %2 = arith.cmpi ne, %1, %c0_i32_0 : i32
    scf.if %2 {
      %cst_13 = arith.constant 0.000000e+00 : f32
      %17 = vector.broadcast %cst_13 : f32 to vector<256x128xf32>
      %c0_14 = arith.constant 0 : index
      %c0_15 = arith.constant 0 : index
      %18 = vector.load %arg7[%c0_14, %c0_15] : memref<256x128xf32, #tpu.memory_space<vmem>>, vector<256x128xf32>
      tpu.vector_store %arg7[%c0_14, %c0_15], %17 {strides = array<i32>} : memref<256x128xf32, #tpu.memory_space<vmem>>, vector<256x128xf32>,
    } else {
    }
    %c0_i32_1 = arith.constant 0 : i32
    %3 = arith.cmpi eq, %arg0, %c0_i32_1 : i32
    %c0_i32_2 = arith.constant 0 : i32
    %4 = arith.cmpi eq, %arg1, %c0_i32_2 : i32
    %5 = arith.andi %3, %4 : i1
    %6 = arith.extui %5 : i1 to i32
    %c0_i32_3 = arith.constant 0 : i32
    %7 = arith.cmpi ne, %6, %c0_i32_3 : i32
    scf.if %7 {
      %cst_13 = arith.constant 0.000000e+00 : f32
      %17 = vector.broadcast %cst_13 : f32 to vector<1x128xf32>
      %c0_14 = arith.constant 0 : index
      %c0_15 = arith.constant 0 : index
      %18 = vector.load %arg5[%c0_14, %c0_15] : memref<1x128xf32, #tpu.memory_space<vmem>>, vector<1x128xf32>
      tpu.vector_store %arg5[%c0_14, %c0_15], %17 {strides = array<i32>} : memref<1x128xf32, #tpu.memory_space<vmem>>, vector<1x128xf32>,
      %cst_16 = arith.constant 0.000000e+00 : f32
      %19 = vector.broadcast %cst_16 : f32 to vector<1x128xf32>
      %c0_17 = arith.constant 0 : index
      %c0_18 = arith.constant 0 : index
      %20 = vector.load %arg6[%c0_17, %c0_18] : memref<1x128xf32, #tpu.memory_space<vmem>>, vector<1x128xf32>
      tpu.vector_store %arg6[%c0_17, %c0_18], %19 {strides = array<i32>} : memref<1x128xf32, #tpu.memory_space<vmem>>, vector<1x128xf32>,
    } else {
    }
    %c0 = arith.constant 0 : index
    %c0_4 = arith.constant 0 : index
    %8 = vector.load %arg7[%c0, %c0_4] : memref<256x128xf32, #tpu.memory_space<vmem>>, vector<256x128xf32>
    %c0_5 = arith.constant 0 : index
    %c0_6 = arith.constant 0 : index
    %9 = vector.load %arg2[%c0_5, %c0_6] : memref<256x576xbf16, #tpu.memory_space<vmem>>, vector<256x576xbf16>
    %c0_7 = arith.constant 0 : index
    %c0_8 = arith.constant 0 : index
    %10 = vector.load %arg3[%c0_7, %c0_8] : memref<576x128xbf16, #tpu.memory_space<vmem>>, vector<576x128xbf16>
    %cst = arith.constant dense<0.000000e+00> : vector<256x128xf32>
    %11 = tpu.matmul %9, %10, %cst {dimension_numbers = #tpu.dot_dimension_numbers<[1], [0], [0], [1], [0, 0, 1, 1], [], []>} : vector<256x576xbf16>, vector<576x128xbf16>, vector<256x128xf32> -> vector<256x128xf32>
    %12 = arith.addf %8, %11 : vector<256x128xf32>
    %c0_9 = arith.constant 0 : index
    %c0_10 = arith.constant 0 : index
    %13 = vector.load %arg7[%c0_9, %c0_10] : memref<256x128xf32, #tpu.memory_space<vmem>>, vector<256x128xf32>
    tpu.vector_store %arg7[%c0_9, %c0_10], %12 {strides = array<i32>} : memref<256x128xf32, #tpu.memory_space<vmem>>, vector<256x128xf32>,
    %c0_i32_11 = arith.constant 0 : i32
    %14 = arith.cmpi eq, %arg1, %c0_i32_11 : i32
    %15 = arith.extui %14 : i1 to i32
    %c0_i32_12 = arith.constant 0 : i32
    %16 = arith.cmpi ne, %15, %c0_i32_12 : i32
    scf.if %16 {
      %c0_13 = arith.constant 0 : index
      %c0_14 = arith.constant 0 : index
      %17 = vector.load %arg7[%c0_13, %c0_14] : memref<256x128xf32, #tpu.memory_space<vmem>>, vector<256x128xf32>
      %c0_15 = arith.constant 0 : index
      %c0_16 = arith.constant 0 : index
      %18 = vector.load %arg4[%c0_15, %c0_16] : memref<256x128xf32, #tpu.memory_space<vmem>>, vector<256x128xf32>
      tpu.vector_store %arg4[%c0_15, %c0_16], %17 {strides = array<i32>} : memref<256x128xf32, #tpu.memory_space<vmem>>, vector<256x128xf32>,
      %c0_17 = arith.constant 0 : index
      %c0_18 = arith.constant 0 : index
      %19 = vector.load %arg5[%c0_17, %c0_18] : memref<1x128xf32, #tpu.memory_space<vmem>>, vector<1x128xf32>
      %cst_19 = arith.constant dense<0.000000e+00> : vector<128xf32>
      %20 = vector.multi_reduction <add>, %17, %cst_19 [0] : vector<256x128xf32> to vector<128xf32>
      %21 = vector.shape_cast %20 : vector<128xf32> to vector<1x128xf32>
      %22 = arith.addf %19, %21 : vector<1x128xf32>
      %c0_20 = arith.constant 0 : index
      %c0_21 = arith.constant 0 : index
      %23 = vector.load %arg5[%c0_20, %c0_21] : memref<1x128xf32, #tpu.memory_space<vmem>>, vector<1x128xf32>
      tpu.vector_store %arg5[%c0_20, %c0_21], %22 {strides = array<i32>} : memref<1x128xf32, #tpu.memory_space<vmem>>, vector<1x128xf32>,
      %c0_22 = arith.constant 0 : index
      %c0_23 = arith.constant 0 : index
      %24 = vector.load %arg6[%c0_22, %c0_23] : memref<1x128xf32, #tpu.memory_space<vmem>>, vector<1x128xf32>
      %25 = arith.mulf %17, %17 : vector<256x128xf32>
      %cst_24 = arith.constant dense<0.000000e+00> : vector<128xf32>
      %26 = vector.multi_reduction <add>, %25, %cst_24 [0] : vector<256x128xf32> to vector<128xf32>
      %27 = vector.shape_cast %26 : vector<128xf32> to vector<1x128xf32>
      %28 = arith.addf %24, %27 : vector<1x128xf32>
      %c0_25 = arith.constant 0 : index
      %c0_26 = arith.constant 0 : index
      %29 = vector.load %arg6[%c0_25, %c0_26] : memref<1x128xf32, #tpu.memory_space<vmem>>, vector<1x128xf32>
      tpu.vector_store %arg6[%c0_25, %c0_26], %28 {strides = array<i32>} : memref<1x128xf32, #tpu.memory_space<vmem>>, vector<1x128xf32>,
    } else {
    }
    return
  }
  func.func @transform_0(%arg0: i32, %arg1: i32) -> (i32, i32) {
    %c0_i32 = arith.constant 0 : i32
    return %arg0, %arg1 : i32, i32
  }
  func.func @transform_1(%arg0: i32, %arg1: i32) -> (i32, i32) {
    %c0_i32 = arith.constant 0 : i32
    %c0_i32_0 = arith.constant 0 : i32
    return %arg1, %c0_i32 : i32, i32
  }
  func.func @transform_2(%arg0: i32, %arg1: i32) -> (i32, i32) {
    %c0_i32 = arith.constant 0 : i32
    %c0_i32_0 = arith.constant 0 : i32
    return %arg0, %c0_i32 : i32, i32
  }
  func.func @transform_3(%arg0: i32, %arg1: i32) -> (i32, i32) {
    %c0_i32 = arith.constant 0 : i32
    %c0_i32_0 = arith.constant 0 : i32
    %c0_i32_1 = arith.constant 0 : i32
    return %c0_i32, %c0_i32_0 : i32, i32
  }
  func.func @transform_4(%arg0: i32, %arg1: i32) -> (i32, i32) {
    %c0_i32 = arith.constant 0 : i32
    %c0_i32_0 = arith.constant 0 : i32
    %c0_i32_1 = arith.constant 0 : i32
    return %c0_i32, %c0_i32_0 : i32, i32
  }
}

module attributes {stable_mosaic.version = 11 : i64} {
  func.func @_bn_act_kernel(%arg0: i32, %arg1: memref<256x128xf32, #tpu.memory_space<vmem>>, %arg2: memref<1x128xf32, #tpu.memory_space<vmem>>, %arg3: memref<1x128xf32, #tpu.memory_space<vmem>>, %arg4: memref<1x128xf32, #tpu.memory_space<vmem>>, %arg5: memref<1x128xf32, #tpu.memory_space<vmem>>, %arg6: memref<256x128xf32, #tpu.memory_space<vmem>>) attributes {dimension_semantics = [#tpu.dimension_semantics<parallel>], iteration_bounds = array<i64: 2>, scalar_prefetch = 0 : i64, scratch_operands = 0 : i64, tpu.core_type = #tpu.core_type<tc>, window_params = [{transform_indices = @transform_0, window_bounds = array<i64: 256, 128>}, {pipeline_mode = #tpu.pipeline_mode<synchronous>, transform_indices = @transform_1, window_bounds = array<i64: 1, 128>}, {pipeline_mode = #tpu.pipeline_mode<synchronous>, transform_indices = @transform_2, window_bounds = array<i64: 1, 128>}, {pipeline_mode = #tpu.pipeline_mode<synchronous>, transform_indices = @transform_3, window_bounds = array<i64: 1, 128>}, {pipeline_mode = #tpu.pipeline_mode<synchronous>, transform_indices = @transform_4, window_bounds = array<i64: 1, 128>}, {transform_indices = @transform_5, window_bounds = array<i64: 256, 128>}]} {
    %c0 = arith.constant 0 : index
    %c0_0 = arith.constant 0 : index
    %0 = vector.load %arg2[%c0, %c0_0] : memref<1x128xf32, #tpu.memory_space<vmem>>, vector<1x128xf32>
    %cst = arith.constant 0.001953125 : f32
    %1 = vector.broadcast %cst : f32 to vector<1x128xf32>
    %2 = arith.mulf %0, %1 : vector<1x128xf32>
    %c0_1 = arith.constant 0 : index
    %c0_2 = arith.constant 0 : index
    %3 = vector.load %arg3[%c0_1, %c0_2] : memref<1x128xf32, #tpu.memory_space<vmem>>, vector<1x128xf32>
    %cst_3 = arith.constant 0.001953125 : f32
    %4 = vector.broadcast %cst_3 : f32 to vector<1x128xf32>
    %5 = arith.mulf %3, %4 : vector<1x128xf32>
    %6 = arith.mulf %2, %2 : vector<1x128xf32>
    %7 = arith.subf %5, %6 : vector<1x128xf32>
    %cst_4 = arith.constant 0.000000e+00 : f32
    %8 = vector.broadcast %cst_4 : f32 to vector<1x128xf32>
    %9 = arith.maximumf %7, %8 : vector<1x128xf32>
    %c0_5 = arith.constant 0 : index
    %c0_6 = arith.constant 0 : index
    %10 = vector.load %arg4[%c0_5, %c0_6] : memref<1x128xf32, #tpu.memory_space<vmem>>, vector<1x128xf32>
    %cst_7 = arith.constant 9.99999974E-6 : f32
    %11 = vector.broadcast %cst_7 : f32 to vector<1x128xf32>
    %12 = arith.addf %9, %11 : vector<1x128xf32>
    %13 = math.rsqrt %12 : vector<1x128xf32>
    %14 = arith.mulf %10, %13 : vector<1x128xf32>
    %c0_8 = arith.constant 0 : index
    %c0_9 = arith.constant 0 : index
    %15 = vector.load %arg1[%c0_8, %c0_9] : memref<256x128xf32, #tpu.memory_space<vmem>>, vector<256x128xf32>
    %16 = vector.broadcast %2 : vector<1x128xf32> to vector<256x128xf32>
    %17 = arith.subf %15, %16 : vector<256x128xf32>
    %18 = vector.broadcast %14 : vector<1x128xf32> to vector<256x128xf32>
    %19 = arith.mulf %17, %18 : vector<256x128xf32>
    %c0_10 = arith.constant 0 : index
    %c0_11 = arith.constant 0 : index
    %20 = vector.load %arg5[%c0_10, %c0_11] : memref<1x128xf32, #tpu.memory_space<vmem>>, vector<1x128xf32>
    %21 = vector.broadcast %20 : vector<1x128xf32> to vector<256x128xf32>
    %22 = arith.addf %19, %21 : vector<256x128xf32>
    %cst_12 = arith.constant 0.000000e+00 : f32
    %23 = vector.broadcast %cst_12 : f32 to vector<256x128xf32>
    %24 = arith.maximumf %22, %23 : vector<256x128xf32>
    %c0_13 = arith.constant 0 : index
    %c0_14 = arith.constant 0 : index
    %25 = vector.load %arg6[%c0_13, %c0_14] : memref<256x128xf32, #tpu.memory_space<vmem>>, vector<256x128xf32>
    tpu.vector_store %arg6[%c0_13, %c0_14], %24 {strides = array<i32>} : memref<256x128xf32, #tpu.memory_space<vmem>>, vector<256x128xf32>,
    return
  }
  func.func @transform_0(%arg0: i32) -> (i32, i32) {
    %c0_i32 = arith.constant 0 : i32
    %c0_i32_0 = arith.constant 0 : i32
    return %arg0, %c0_i32 : i32, i32
  }
  func.func @transform_1(%arg0: i32) -> (i32, i32) {
    %c0_i32 = arith.constant 0 : i32
    %c0_i32_0 = arith.constant 0 : i32
    %c0_i32_1 = arith.constant 0 : i32
    return %c0_i32, %c0_i32_0 : i32, i32
  }
  func.func @transform_2(%arg0: i32) -> (i32, i32) {
    %c0_i32 = arith.constant 0 : i32
    %c0_i32_0 = arith.constant 0 : i32
    %c0_i32_1 = arith.constant 0 : i32
    return %c0_i32, %c0_i32_0 : i32, i32
  }
  func.func @transform_3(%arg0: i32) -> (i32, i32) {
    %c0_i32 = arith.constant 0 : i32
    %c0_i32_0 = arith.constant 0 : i32
    %c0_i32_1 = arith.constant 0 : i32
    return %c0_i32, %c0_i32_0 : i32, i32
  }
  func.func @transform_4(%arg0: i32) -> (i32, i32) {
    %c0_i32 = arith.constant 0 : i32
    %c0_i32_0 = arith.constant 0 : i32
    %c0_i32_1 = arith.constant 0 : i32
    return %c0_i32, %c0_i32_0 : i32, i32
  }
  func.func @transform_5(%arg0: i32) -> (i32, i32) {
    %c0_i32 = arith.constant 0 : i32
    %c0_i32_0 = arith.constant 0 : i32
    return %arg0, %c0_i32 : i32, i32
  }
}

module attributes {stable_mosaic.version = 11 : i64} {
  func.func @_mm_stats_kernel(%arg0: i32, %arg1: i32, %arg2: memref<256x64xbf16, #tpu.memory_space<vmem>>, %arg3: memref<64x128xbf16, #tpu.memory_space<vmem>>, %arg4: memref<256x128xf32, #tpu.memory_space<vmem>>, %arg5: memref<1x128xf32, #tpu.memory_space<vmem>>, %arg6: memref<1x128xf32, #tpu.memory_space<vmem>>, %arg7: memref<256x128xf32, #tpu.memory_space<vmem>>) attributes {dimension_semantics = [#tpu.dimension_semantics<arbitrary>, #tpu.dimension_semantics<arbitrary>], iteration_bounds = array<i64: 2, 1>, scalar_prefetch = 0 : i64, scratch_operands = 1 : i64, tpu.core_type = #tpu.core_type<tc>, window_params = [{transform_indices = @transform_0, window_bounds = array<i64: 256, 64>}, {transform_indices = @transform_1, window_bounds = array<i64: 64, 128>}, {transform_indices = @transform_2, window_bounds = array<i64: 256, 128>}, {pipeline_mode = #tpu.pipeline_mode<synchronous>, transform_indices = @transform_3, window_bounds = array<i64: 1, 128>}, {pipeline_mode = #tpu.pipeline_mode<synchronous>, transform_indices = @transform_4, window_bounds = array<i64: 1, 128>}]} {
    %c0_i32 = arith.constant 0 : i32
    %0 = arith.cmpi eq, %arg1, %c0_i32 : i32
    %1 = arith.extui %0 : i1 to i32
    %c0_i32_0 = arith.constant 0 : i32
    %2 = arith.cmpi ne, %1, %c0_i32_0 : i32
    scf.if %2 {
      %cst_13 = arith.constant 0.000000e+00 : f32
      %17 = vector.broadcast %cst_13 : f32 to vector<256x128xf32>
      %c0_14 = arith.constant 0 : index
      %c0_15 = arith.constant 0 : index
      %18 = vector.load %arg7[%c0_14, %c0_15] : memref<256x128xf32, #tpu.memory_space<vmem>>, vector<256x128xf32>
      tpu.vector_store %arg7[%c0_14, %c0_15], %17 {strides = array<i32>} : memref<256x128xf32, #tpu.memory_space<vmem>>, vector<256x128xf32>,
    } else {
    }
    %c0_i32_1 = arith.constant 0 : i32
    %3 = arith.cmpi eq, %arg0, %c0_i32_1 : i32
    %c0_i32_2 = arith.constant 0 : i32
    %4 = arith.cmpi eq, %arg1, %c0_i32_2 : i32
    %5 = arith.andi %3, %4 : i1
    %6 = arith.extui %5 : i1 to i32
    %c0_i32_3 = arith.constant 0 : i32
    %7 = arith.cmpi ne, %6, %c0_i32_3 : i32
    scf.if %7 {
      %cst_13 = arith.constant 0.000000e+00 : f32
      %17 = vector.broadcast %cst_13 : f32 to vector<1x128xf32>
      %c0_14 = arith.constant 0 : index
      %c0_15 = arith.constant 0 : index
      %18 = vector.load %arg5[%c0_14, %c0_15] : memref<1x128xf32, #tpu.memory_space<vmem>>, vector<1x128xf32>
      tpu.vector_store %arg5[%c0_14, %c0_15], %17 {strides = array<i32>} : memref<1x128xf32, #tpu.memory_space<vmem>>, vector<1x128xf32>,
      %cst_16 = arith.constant 0.000000e+00 : f32
      %19 = vector.broadcast %cst_16 : f32 to vector<1x128xf32>
      %c0_17 = arith.constant 0 : index
      %c0_18 = arith.constant 0 : index
      %20 = vector.load %arg6[%c0_17, %c0_18] : memref<1x128xf32, #tpu.memory_space<vmem>>, vector<1x128xf32>
      tpu.vector_store %arg6[%c0_17, %c0_18], %19 {strides = array<i32>} : memref<1x128xf32, #tpu.memory_space<vmem>>, vector<1x128xf32>,
    } else {
    }
    %c0 = arith.constant 0 : index
    %c0_4 = arith.constant 0 : index
    %8 = vector.load %arg7[%c0, %c0_4] : memref<256x128xf32, #tpu.memory_space<vmem>>, vector<256x128xf32>
    %c0_5 = arith.constant 0 : index
    %c0_6 = arith.constant 0 : index
    %9 = vector.load %arg2[%c0_5, %c0_6] : memref<256x64xbf16, #tpu.memory_space<vmem>>, vector<256x64xbf16>
    %c0_7 = arith.constant 0 : index
    %c0_8 = arith.constant 0 : index
    %10 = vector.load %arg3[%c0_7, %c0_8] : memref<64x128xbf16, #tpu.memory_space<vmem>>, vector<64x128xbf16>
    %cst = arith.constant dense<0.000000e+00> : vector<256x128xf32>
    %11 = tpu.matmul %9, %10, %cst {dimension_numbers = #tpu.dot_dimension_numbers<[1], [0], [0], [1], [0, 0, 1, 1], [], []>} : vector<256x64xbf16>, vector<64x128xbf16>, vector<256x128xf32> -> vector<256x128xf32>
    %12 = arith.addf %8, %11 : vector<256x128xf32>
    %c0_9 = arith.constant 0 : index
    %c0_10 = arith.constant 0 : index
    %13 = vector.load %arg7[%c0_9, %c0_10] : memref<256x128xf32, #tpu.memory_space<vmem>>, vector<256x128xf32>
    tpu.vector_store %arg7[%c0_9, %c0_10], %12 {strides = array<i32>} : memref<256x128xf32, #tpu.memory_space<vmem>>, vector<256x128xf32>,
    %c0_i32_11 = arith.constant 0 : i32
    %14 = arith.cmpi eq, %arg1, %c0_i32_11 : i32
    %15 = arith.extui %14 : i1 to i32
    %c0_i32_12 = arith.constant 0 : i32
    %16 = arith.cmpi ne, %15, %c0_i32_12 : i32
    scf.if %16 {
      %c0_13 = arith.constant 0 : index
      %c0_14 = arith.constant 0 : index
      %17 = vector.load %arg7[%c0_13, %c0_14] : memref<256x128xf32, #tpu.memory_space<vmem>>, vector<256x128xf32>
      %c0_15 = arith.constant 0 : index
      %c0_16 = arith.constant 0 : index
      %18 = vector.load %arg4[%c0_15, %c0_16] : memref<256x128xf32, #tpu.memory_space<vmem>>, vector<256x128xf32>
      tpu.vector_store %arg4[%c0_15, %c0_16], %17 {strides = array<i32>} : memref<256x128xf32, #tpu.memory_space<vmem>>, vector<256x128xf32>,
      %c0_17 = arith.constant 0 : index
      %c0_18 = arith.constant 0 : index
      %19 = vector.load %arg5[%c0_17, %c0_18] : memref<1x128xf32, #tpu.memory_space<vmem>>, vector<1x128xf32>
      %cst_19 = arith.constant dense<0.000000e+00> : vector<128xf32>
      %20 = vector.multi_reduction <add>, %17, %cst_19 [0] : vector<256x128xf32> to vector<128xf32>
      %21 = vector.shape_cast %20 : vector<128xf32> to vector<1x128xf32>
      %22 = arith.addf %19, %21 : vector<1x128xf32>
      %c0_20 = arith.constant 0 : index
      %c0_21 = arith.constant 0 : index
      %23 = vector.load %arg5[%c0_20, %c0_21] : memref<1x128xf32, #tpu.memory_space<vmem>>, vector<1x128xf32>
      tpu.vector_store %arg5[%c0_20, %c0_21], %22 {strides = array<i32>} : memref<1x128xf32, #tpu.memory_space<vmem>>, vector<1x128xf32>,
      %c0_22 = arith.constant 0 : index
      %c0_23 = arith.constant 0 : index
      %24 = vector.load %arg6[%c0_22, %c0_23] : memref<1x128xf32, #tpu.memory_space<vmem>>, vector<1x128xf32>
      %25 = arith.mulf %17, %17 : vector<256x128xf32>
      %cst_24 = arith.constant dense<0.000000e+00> : vector<128xf32>
      %26 = vector.multi_reduction <add>, %25, %cst_24 [0] : vector<256x128xf32> to vector<128xf32>
      %27 = vector.shape_cast %26 : vector<128xf32> to vector<1x128xf32>
      %28 = arith.addf %24, %27 : vector<1x128xf32>
      %c0_25 = arith.constant 0 : index
      %c0_26 = arith.constant 0 : index
      %29 = vector.load %arg6[%c0_25, %c0_26] : memref<1x128xf32, #tpu.memory_space<vmem>>, vector<1x128xf32>
      tpu.vector_store %arg6[%c0_25, %c0_26], %28 {strides = array<i32>} : memref<1x128xf32, #tpu.memory_space<vmem>>, vector<1x128xf32>,
    } else {
    }
    return
  }
  func.func @transform_0(%arg0: i32, %arg1: i32) -> (i32, i32) {
    %c0_i32 = arith.constant 0 : i32
    return %arg0, %arg1 : i32, i32
  }
  func.func @transform_1(%arg0: i32, %arg1: i32) -> (i32, i32) {
    %c0_i32 = arith.constant 0 : i32
    %c0_i32_0 = arith.constant 0 : i32
    return %arg1, %c0_i32 : i32, i32
  }
  func.func @transform_2(%arg0: i32, %arg1: i32) -> (i32, i32) {
    %c0_i32 = arith.constant 0 : i32
    %c0_i32_0 = arith.constant 0 : i32
    return %arg0, %c0_i32 : i32, i32
  }
  func.func @transform_3(%arg0: i32, %arg1: i32) -> (i32, i32) {
    %c0_i32 = arith.constant 0 : i32
    %c0_i32_0 = arith.constant 0 : i32
    %c0_i32_1 = arith.constant 0 : i32
    return %c0_i32, %c0_i32_0 : i32, i32
  }
  func.func @transform_4(%arg0: i32, %arg1: i32) -> (i32, i32) {
    %c0_i32 = arith.constant 0 : i32
    %c0_i32_0 = arith.constant 0 : i32
    %c0_i32_1 = arith.constant 0 : i32
    return %c0_i32, %c0_i32_0 : i32, i32
  }
}

module attributes {stable_mosaic.version = 11 : i64} {
  func.func @_bn_act_kernel(%arg0: i32, %arg1: memref<256x128xf32, #tpu.memory_space<vmem>>, %arg2: memref<1x128xf32, #tpu.memory_space<vmem>>, %arg3: memref<1x128xf32, #tpu.memory_space<vmem>>, %arg4: memref<1x128xf32, #tpu.memory_space<vmem>>, %arg5: memref<1x128xf32, #tpu.memory_space<vmem>>, %arg6: memref<256x128xf32, #tpu.memory_space<vmem>>) attributes {dimension_semantics = [#tpu.dimension_semantics<parallel>], iteration_bounds = array<i64: 2>, scalar_prefetch = 0 : i64, scratch_operands = 0 : i64, tpu.core_type = #tpu.core_type<tc>, window_params = [{transform_indices = @transform_0, window_bounds = array<i64: 256, 128>}, {pipeline_mode = #tpu.pipeline_mode<synchronous>, transform_indices = @transform_1, window_bounds = array<i64: 1, 128>}, {pipeline_mode = #tpu.pipeline_mode<synchronous>, transform_indices = @transform_2, window_bounds = array<i64: 1, 128>}, {pipeline_mode = #tpu.pipeline_mode<synchronous>, transform_indices = @transform_3, window_bounds = array<i64: 1, 128>}, {pipeline_mode = #tpu.pipeline_mode<synchronous>, transform_indices = @transform_4, window_bounds = array<i64: 1, 128>}, {transform_indices = @transform_5, window_bounds = array<i64: 256, 128>}]} {
    %c0 = arith.constant 0 : index
    %c0_0 = arith.constant 0 : index
    %0 = vector.load %arg2[%c0, %c0_0] : memref<1x128xf32, #tpu.memory_space<vmem>>, vector<1x128xf32>
    %cst = arith.constant 0.001953125 : f32
    %1 = vector.broadcast %cst : f32 to vector<1x128xf32>
    %2 = arith.mulf %0, %1 : vector<1x128xf32>
    %c0_1 = arith.constant 0 : index
    %c0_2 = arith.constant 0 : index
    %3 = vector.load %arg3[%c0_1, %c0_2] : memref<1x128xf32, #tpu.memory_space<vmem>>, vector<1x128xf32>
    %cst_3 = arith.constant 0.001953125 : f32
    %4 = vector.broadcast %cst_3 : f32 to vector<1x128xf32>
    %5 = arith.mulf %3, %4 : vector<1x128xf32>
    %6 = arith.mulf %2, %2 : vector<1x128xf32>
    %7 = arith.subf %5, %6 : vector<1x128xf32>
    %cst_4 = arith.constant 0.000000e+00 : f32
    %8 = vector.broadcast %cst_4 : f32 to vector<1x128xf32>
    %9 = arith.maximumf %7, %8 : vector<1x128xf32>
    %c0_5 = arith.constant 0 : index
    %c0_6 = arith.constant 0 : index
    %10 = vector.load %arg4[%c0_5, %c0_6] : memref<1x128xf32, #tpu.memory_space<vmem>>, vector<1x128xf32>
    %cst_7 = arith.constant 9.99999974E-6 : f32
    %11 = vector.broadcast %cst_7 : f32 to vector<1x128xf32>
    %12 = arith.addf %9, %11 : vector<1x128xf32>
    %13 = math.rsqrt %12 : vector<1x128xf32>
    %14 = arith.mulf %10, %13 : vector<1x128xf32>
    %c0_8 = arith.constant 0 : index
    %c0_9 = arith.constant 0 : index
    %15 = vector.load %arg1[%c0_8, %c0_9] : memref<256x128xf32, #tpu.memory_space<vmem>>, vector<256x128xf32>
    %16 = vector.broadcast %2 : vector<1x128xf32> to vector<256x128xf32>
    %17 = arith.subf %15, %16 : vector<256x128xf32>
    %18 = vector.broadcast %14 : vector<1x128xf32> to vector<256x128xf32>
    %19 = arith.mulf %17, %18 : vector<256x128xf32>
    %c0_10 = arith.constant 0 : index
    %c0_11 = arith.constant 0 : index
    %20 = vector.load %arg5[%c0_10, %c0_11] : memref<1x128xf32, #tpu.memory_space<vmem>>, vector<1x128xf32>
    %21 = vector.broadcast %20 : vector<1x128xf32> to vector<256x128xf32>
    %22 = arith.addf %19, %21 : vector<256x128xf32>
    %c0_12 = arith.constant 0 : index
    %c0_13 = arith.constant 0 : index
    %23 = vector.load %arg6[%c0_12, %c0_13] : memref<256x128xf32, #tpu.memory_space<vmem>>, vector<256x128xf32>
    tpu.vector_store %arg6[%c0_12, %c0_13], %22 {strides = array<i32>} : memref<256x128xf32, #tpu.memory_space<vmem>>, vector<256x128xf32>,
    return
  }
  func.func @transform_0(%arg0: i32) -> (i32, i32) {
    %c0_i32 = arith.constant 0 : i32
    %c0_i32_0 = arith.constant 0 : i32
    return %arg0, %c0_i32 : i32, i32
  }
  func.func @transform_1(%arg0: i32) -> (i32, i32) {
    %c0_i32 = arith.constant 0 : i32
    %c0_i32_0 = arith.constant 0 : i32
    %c0_i32_1 = arith.constant 0 : i32
    return %c0_i32, %c0_i32_0 : i32, i32
  }
  func.func @transform_2(%arg0: i32) -> (i32, i32) {
    %c0_i32 = arith.constant 0 : i32
    %c0_i32_0 = arith.constant 0 : i32
    %c0_i32_1 = arith.constant 0 : i32
    return %c0_i32, %c0_i32_0 : i32, i32
  }
  func.func @transform_3(%arg0: i32) -> (i32, i32) {
    %c0_i32 = arith.constant 0 : i32
    %c0_i32_0 = arith.constant 0 : i32
    %c0_i32_1 = arith.constant 0 : i32
    return %c0_i32, %c0_i32_0 : i32, i32
  }
  func.func @transform_4(%arg0: i32) -> (i32, i32) {
    %c0_i32 = arith.constant 0 : i32
    %c0_i32_0 = arith.constant 0 : i32
    %c0_i32_1 = arith.constant 0 : i32
    return %c0_i32, %c0_i32_0 : i32, i32
  }
  func.func @transform_5(%arg0: i32) -> (i32, i32) {
    %c0_i32 = arith.constant 0 : i32
    %c0_i32_0 = arith.constant 0 : i32
    return %arg0, %c0_i32 : i32, i32
  }
}

module attributes {stable_mosaic.version = 11 : i64} {
  func.func @_mm_stats_kernel(%arg0: i32, %arg1: i32, %arg2: memref<256x384xbf16, #tpu.memory_space<vmem>>, %arg3: memref<384x128xbf16, #tpu.memory_space<vmem>>, %arg4: memref<256x128xf32, #tpu.memory_space<vmem>>, %arg5: memref<1x128xf32, #tpu.memory_space<vmem>>, %arg6: memref<1x128xf32, #tpu.memory_space<vmem>>, %arg7: memref<256x128xf32, #tpu.memory_space<vmem>>) attributes {dimension_semantics = [#tpu.dimension_semantics<arbitrary>, #tpu.dimension_semantics<arbitrary>], iteration_bounds = array<i64: 2, 3>, scalar_prefetch = 0 : i64, scratch_operands = 1 : i64, tpu.core_type = #tpu.core_type<tc>, window_params = [{transform_indices = @transform_0, window_bounds = array<i64: 256, 384>}, {transform_indices = @transform_1, window_bounds = array<i64: 384, 128>}, {transform_indices = @transform_2, window_bounds = array<i64: 256, 128>}, {pipeline_mode = #tpu.pipeline_mode<synchronous>, transform_indices = @transform_3, window_bounds = array<i64: 1, 128>}, {pipeline_mode = #tpu.pipeline_mode<synchronous>, transform_indices = @transform_4, window_bounds = array<i64: 1, 128>}]} {
    %c0_i32 = arith.constant 0 : i32
    %0 = arith.cmpi eq, %arg1, %c0_i32 : i32
    %1 = arith.extui %0 : i1 to i32
    %c0_i32_0 = arith.constant 0 : i32
    %2 = arith.cmpi ne, %1, %c0_i32_0 : i32
    scf.if %2 {
      %cst_12 = arith.constant 0.000000e+00 : f32
      %17 = vector.broadcast %cst_12 : f32 to vector<256x128xf32>
      %c0_13 = arith.constant 0 : index
      %c0_14 = arith.constant 0 : index
      %18 = vector.load %arg7[%c0_13, %c0_14] : memref<256x128xf32, #tpu.memory_space<vmem>>, vector<256x128xf32>
      tpu.vector_store %arg7[%c0_13, %c0_14], %17 {strides = array<i32>} : memref<256x128xf32, #tpu.memory_space<vmem>>, vector<256x128xf32>,
    } else {
    }
    %c0_i32_1 = arith.constant 0 : i32
    %3 = arith.cmpi eq, %arg0, %c0_i32_1 : i32
    %c0_i32_2 = arith.constant 0 : i32
    %4 = arith.cmpi eq, %arg1, %c0_i32_2 : i32
    %5 = arith.andi %3, %4 : i1
    %6 = arith.extui %5 : i1 to i32
    %c0_i32_3 = arith.constant 0 : i32
    %7 = arith.cmpi ne, %6, %c0_i32_3 : i32
    scf.if %7 {
      %cst_12 = arith.constant 0.000000e+00 : f32
      %17 = vector.broadcast %cst_12 : f32 to vector<1x128xf32>
      %c0_13 = arith.constant 0 : index
      %c0_14 = arith.constant 0 : index
      %18 = vector.load %arg5[%c0_13, %c0_14] : memref<1x128xf32, #tpu.memory_space<vmem>>, vector<1x128xf32>
      tpu.vector_store %arg5[%c0_13, %c0_14], %17 {strides = array<i32>} : memref<1x128xf32, #tpu.memory_space<vmem>>, vector<1x128xf32>,
      %cst_15 = arith.constant 0.000000e+00 : f32
      %19 = vector.broadcast %cst_15 : f32 to vector<1x128xf32>
      %c0_16 = arith.constant 0 : index
      %c0_17 = arith.constant 0 : index
      %20 = vector.load %arg6[%c0_16, %c0_17] : memref<1x128xf32, #tpu.memory_space<vmem>>, vector<1x128xf32>
      tpu.vector_store %arg6[%c0_16, %c0_17], %19 {strides = array<i32>} : memref<1x128xf32, #tpu.memory_space<vmem>>, vector<1x128xf32>,
    } else {
    }
    %c0 = arith.constant 0 : index
    %c0_4 = arith.constant 0 : index
    %8 = vector.load %arg7[%c0, %c0_4] : memref<256x128xf32, #tpu.memory_space<vmem>>, vector<256x128xf32>
    %c0_5 = arith.constant 0 : index
    %c0_6 = arith.constant 0 : index
    %9 = vector.load %arg2[%c0_5, %c0_6] : memref<256x384xbf16, #tpu.memory_space<vmem>>, vector<256x384xbf16>
    %c0_7 = arith.constant 0 : index
    %c0_8 = arith.constant 0 : index
    %10 = vector.load %arg3[%c0_7, %c0_8] : memref<384x128xbf16, #tpu.memory_space<vmem>>, vector<384x128xbf16>
    %cst = arith.constant dense<0.000000e+00> : vector<256x128xf32>
    %11 = tpu.matmul %9, %10, %cst {dimension_numbers = #tpu.dot_dimension_numbers<[1], [0], [0], [1], [0, 0, 1, 1], [], []>} : vector<256x384xbf16>, vector<384x128xbf16>, vector<256x128xf32> -> vector<256x128xf32>
    %12 = arith.addf %8, %11 : vector<256x128xf32>
    %c0_9 = arith.constant 0 : index
    %c0_10 = arith.constant 0 : index
    %13 = vector.load %arg7[%c0_9, %c0_10] : memref<256x128xf32, #tpu.memory_space<vmem>>, vector<256x128xf32>
    tpu.vector_store %arg7[%c0_9, %c0_10], %12 {strides = array<i32>} : memref<256x128xf32, #tpu.memory_space<vmem>>, vector<256x128xf32>,
    %c2_i32 = arith.constant 2 : i32
    %14 = arith.cmpi eq, %arg1, %c2_i32 : i32
    %15 = arith.extui %14 : i1 to i32
    %c0_i32_11 = arith.constant 0 : i32
    %16 = arith.cmpi ne, %15, %c0_i32_11 : i32
    scf.if %16 {
      %c0_12 = arith.constant 0 : index
      %c0_13 = arith.constant 0 : index
      %17 = vector.load %arg7[%c0_12, %c0_13] : memref<256x128xf32, #tpu.memory_space<vmem>>, vector<256x128xf32>
      %c0_14 = arith.constant 0 : index
      %c0_15 = arith.constant 0 : index
      %18 = vector.load %arg4[%c0_14, %c0_15] : memref<256x128xf32, #tpu.memory_space<vmem>>, vector<256x128xf32>
      tpu.vector_store %arg4[%c0_14, %c0_15], %17 {strides = array<i32>} : memref<256x128xf32, #tpu.memory_space<vmem>>, vector<256x128xf32>,
      %c0_16 = arith.constant 0 : index
      %c0_17 = arith.constant 0 : index
      %19 = vector.load %arg5[%c0_16, %c0_17] : memref<1x128xf32, #tpu.memory_space<vmem>>, vector<1x128xf32>
      %cst_18 = arith.constant dense<0.000000e+00> : vector<128xf32>
      %20 = vector.multi_reduction <add>, %17, %cst_18 [0] : vector<256x128xf32> to vector<128xf32>
      %21 = vector.shape_cast %20 : vector<128xf32> to vector<1x128xf32>
      %22 = arith.addf %19, %21 : vector<1x128xf32>
      %c0_19 = arith.constant 0 : index
      %c0_20 = arith.constant 0 : index
      %23 = vector.load %arg5[%c0_19, %c0_20] : memref<1x128xf32, #tpu.memory_space<vmem>>, vector<1x128xf32>
      tpu.vector_store %arg5[%c0_19, %c0_20], %22 {strides = array<i32>} : memref<1x128xf32, #tpu.memory_space<vmem>>, vector<1x128xf32>,
      %c0_21 = arith.constant 0 : index
      %c0_22 = arith.constant 0 : index
      %24 = vector.load %arg6[%c0_21, %c0_22] : memref<1x128xf32, #tpu.memory_space<vmem>>, vector<1x128xf32>
      %25 = arith.mulf %17, %17 : vector<256x128xf32>
      %cst_23 = arith.constant dense<0.000000e+00> : vector<128xf32>
      %26 = vector.multi_reduction <add>, %25, %cst_23 [0] : vector<256x128xf32> to vector<128xf32>
      %27 = vector.shape_cast %26 : vector<128xf32> to vector<1x128xf32>
      %28 = arith.addf %24, %27 : vector<1x128xf32>
      %c0_24 = arith.constant 0 : index
      %c0_25 = arith.constant 0 : index
      %29 = vector.load %arg6[%c0_24, %c0_25] : memref<1x128xf32, #tpu.memory_space<vmem>>, vector<1x128xf32>
      tpu.vector_store %arg6[%c0_24, %c0_25], %28 {strides = array<i32>} : memref<1x128xf32, #tpu.memory_space<vmem>>, vector<1x128xf32>,
    } else {
    }
    return
  }
  func.func @transform_0(%arg0: i32, %arg1: i32) -> (i32, i32) {
    %c0_i32 = arith.constant 0 : i32
    return %arg0, %arg1 : i32, i32
  }
  func.func @transform_1(%arg0: i32, %arg1: i32) -> (i32, i32) {
    %c0_i32 = arith.constant 0 : i32
    %c0_i32_0 = arith.constant 0 : i32
    return %arg1, %c0_i32 : i32, i32
  }
  func.func @transform_2(%arg0: i32, %arg1: i32) -> (i32, i32) {
    %c0_i32 = arith.constant 0 : i32
    %c0_i32_0 = arith.constant 0 : i32
    return %arg0, %c0_i32 : i32, i32
  }
  func.func @transform_3(%arg0: i32, %arg1: i32) -> (i32, i32) {
    %c0_i32 = arith.constant 0 : i32
    %c0_i32_0 = arith.constant 0 : i32
    %c0_i32_1 = arith.constant 0 : i32
    return %c0_i32, %c0_i32_0 : i32, i32
  }
  func.func @transform_4(%arg0: i32, %arg1: i32) -> (i32, i32) {
    %c0_i32 = arith.constant 0 : i32
    %c0_i32_0 = arith.constant 0 : i32
    %c0_i32_1 = arith.constant 0 : i32
    return %c0_i32, %c0_i32_0 : i32, i32
  }
}

module attributes {stable_mosaic.version = 11 : i64} {
  func.func @_bn_act_kernel(%arg0: i32, %arg1: memref<256x128xf32, #tpu.memory_space<vmem>>, %arg2: memref<1x128xf32, #tpu.memory_space<vmem>>, %arg3: memref<1x128xf32, #tpu.memory_space<vmem>>, %arg4: memref<1x128xf32, #tpu.memory_space<vmem>>, %arg5: memref<1x128xf32, #tpu.memory_space<vmem>>, %arg6: memref<256x128xf32, #tpu.memory_space<vmem>>, %arg7: memref<256x128xf32, #tpu.memory_space<vmem>>) attributes {dimension_semantics = [#tpu.dimension_semantics<parallel>], iteration_bounds = array<i64: 2>, scalar_prefetch = 0 : i64, scratch_operands = 0 : i64, tpu.core_type = #tpu.core_type<tc>, window_params = [{transform_indices = @transform_0, window_bounds = array<i64: 256, 128>}, {pipeline_mode = #tpu.pipeline_mode<synchronous>, transform_indices = @transform_1, window_bounds = array<i64: 1, 128>}, {pipeline_mode = #tpu.pipeline_mode<synchronous>, transform_indices = @transform_2, window_bounds = array<i64: 1, 128>}, {pipeline_mode = #tpu.pipeline_mode<synchronous>, transform_indices = @transform_3, window_bounds = array<i64: 1, 128>}, {pipeline_mode = #tpu.pipeline_mode<synchronous>, transform_indices = @transform_4, window_bounds = array<i64: 1, 128>}, {transform_indices = @transform_5, window_bounds = array<i64: 256, 128>}, {transform_indices = @transform_6, window_bounds = array<i64: 256, 128>}]} {
    %c0 = arith.constant 0 : index
    %c0_0 = arith.constant 0 : index
    %0 = vector.load %arg2[%c0, %c0_0] : memref<1x128xf32, #tpu.memory_space<vmem>>, vector<1x128xf32>
    %cst = arith.constant 0.001953125 : f32
    %1 = vector.broadcast %cst : f32 to vector<1x128xf32>
    %2 = arith.mulf %0, %1 : vector<1x128xf32>
    %c0_1 = arith.constant 0 : index
    %c0_2 = arith.constant 0 : index
    %3 = vector.load %arg3[%c0_1, %c0_2] : memref<1x128xf32, #tpu.memory_space<vmem>>, vector<1x128xf32>
    %cst_3 = arith.constant 0.001953125 : f32
    %4 = vector.broadcast %cst_3 : f32 to vector<1x128xf32>
    %5 = arith.mulf %3, %4 : vector<1x128xf32>
    %6 = arith.mulf %2, %2 : vector<1x128xf32>
    %7 = arith.subf %5, %6 : vector<1x128xf32>
    %cst_4 = arith.constant 0.000000e+00 : f32
    %8 = vector.broadcast %cst_4 : f32 to vector<1x128xf32>
    %9 = arith.maximumf %7, %8 : vector<1x128xf32>
    %c0_5 = arith.constant 0 : index
    %c0_6 = arith.constant 0 : index
    %10 = vector.load %arg4[%c0_5, %c0_6] : memref<1x128xf32, #tpu.memory_space<vmem>>, vector<1x128xf32>
    %cst_7 = arith.constant 9.99999974E-6 : f32
    %11 = vector.broadcast %cst_7 : f32 to vector<1x128xf32>
    %12 = arith.addf %9, %11 : vector<1x128xf32>
    %13 = math.rsqrt %12 : vector<1x128xf32>
    %14 = arith.mulf %10, %13 : vector<1x128xf32>
    %c0_8 = arith.constant 0 : index
    %c0_9 = arith.constant 0 : index
    %15 = vector.load %arg1[%c0_8, %c0_9] : memref<256x128xf32, #tpu.memory_space<vmem>>, vector<256x128xf32>
    %16 = vector.broadcast %2 : vector<1x128xf32> to vector<256x128xf32>
    %17 = arith.subf %15, %16 : vector<256x128xf32>
    %18 = vector.broadcast %14 : vector<1x128xf32> to vector<256x128xf32>
    %19 = arith.mulf %17, %18 : vector<256x128xf32>
    %c0_10 = arith.constant 0 : index
    %c0_11 = arith.constant 0 : index
    %20 = vector.load %arg5[%c0_10, %c0_11] : memref<1x128xf32, #tpu.memory_space<vmem>>, vector<1x128xf32>
    %21 = vector.broadcast %20 : vector<1x128xf32> to vector<256x128xf32>
    %22 = arith.addf %19, %21 : vector<256x128xf32>
    %c0_12 = arith.constant 0 : index
    %c0_13 = arith.constant 0 : index
    %23 = vector.load %arg6[%c0_12, %c0_13] : memref<256x128xf32, #tpu.memory_space<vmem>>, vector<256x128xf32>
    %24 = arith.addf %22, %23 : vector<256x128xf32>
    %cst_14 = arith.constant 0.000000e+00 : f32
    %25 = vector.broadcast %cst_14 : f32 to vector<256x128xf32>
    %26 = arith.maximumf %24, %25 : vector<256x128xf32>
    %c0_15 = arith.constant 0 : index
    %c0_16 = arith.constant 0 : index
    %27 = vector.load %arg7[%c0_15, %c0_16] : memref<256x128xf32, #tpu.memory_space<vmem>>, vector<256x128xf32>
    tpu.vector_store %arg7[%c0_15, %c0_16], %26 {strides = array<i32>} : memref<256x128xf32, #tpu.memory_space<vmem>>, vector<256x128xf32>,
    return
  }
  func.func @transform_0(%arg0: i32) -> (i32, i32) {
    %c0_i32 = arith.constant 0 : i32
    %c0_i32_0 = arith.constant 0 : i32
    return %arg0, %c0_i32 : i32, i32
  }
  func.func @transform_1(%arg0: i32) -> (i32, i32) {
    %c0_i32 = arith.constant 0 : i32
    %c0_i32_0 = arith.constant 0 : i32
    %c0_i32_1 = arith.constant 0 : i32
    return %c0_i32, %c0_i32_0 : i32, i32
  }
  func.func @transform_2(%arg0: i32) -> (i32, i32) {
    %c0_i32 = arith.constant 0 : i32
    %c0_i32_0 = arith.constant 0 : i32
    %c0_i32_1 = arith.constant 0 : i32
    return %c0_i32, %c0_i32_0 : i32, i32
  }
  func.func @transform_3(%arg0: i32) -> (i32, i32) {
    %c0_i32 = arith.constant 0 : i32
    %c0_i32_0 = arith.constant 0 : i32
    %c0_i32_1 = arith.constant 0 : i32
    return %c0_i32, %c0_i32_0 : i32, i32
  }
  func.func @transform_4(%arg0: i32) -> (i32, i32) {
    %c0_i32 = arith.constant 0 : i32
    %c0_i32_0 = arith.constant 0 : i32
    %c0_i32_1 = arith.constant 0 : i32
    return %c0_i32, %c0_i32_0 : i32, i32
  }
  func.func @transform_5(%arg0: i32) -> (i32, i32) {
    %c0_i32 = arith.constant 0 : i32
    %c0_i32_0 = arith.constant 0 : i32
    return %arg0, %c0_i32 : i32, i32
  }
  func.func @transform_6(%arg0: i32) -> (i32, i32) {
    %c0_i32 = arith.constant 0 : i32
    %c0_i32_0 = arith.constant 0 : i32
    return %arg0, %c0_i32 : i32, i32
  }
}

</mosaic_0001>

<llo_original>
// kernel: basic_block_forward.7
$region0: #{basic_block_forward.7}
  #allocation0 [shape = 'u32[]', space=smem, size = 0x4, offset = 0x4, fixed_abs, tag = 'smem constant byte address 0x4 - core index']
  #allocation1 [shape = 'u32[72,128]{1,0:T(1,128)}', space=vmem, size = 0x9000, scoped, tag = 'internal scratch']
  %s0 = inlined_call_operand.vmem [shape: f32[512,128], index: 0, kind: input, shape index: {}]
  %s1 = inlined_call_operand.vmem [shape: f32[1,128], index: 1, kind: input, shape index: {}]
  %s2 = inlined_call_operand.vmem [shape: f32[1,128], index: 2, kind: input, shape index: {}]
  %s3 = inlined_call_operand.vmem [shape: f32[1,128], index: 3, kind: input, shape index: {}]
  %s4 = inlined_call_operand.vmem [shape: f32[1,128], index: 4, kind: input, shape index: {}]
  %s5 = inlined_call_operand.vmem [shape: f32[512,128], index: 5, kind: output, shape index: {}]
  %s6 = sld [smem:[#allocation0]]
  $region53: #{basic_block_forward.7} parent=0
    _
  %s8 = ssub.s32 1, %s6
  %s9 = scalar_select 0, %s8, %s6
  loop: start=0, step=1, limit=4
  $region2: #{basic_block_forward.7} parent=0 // loop_pre_header
    _
  $region3: #{basic_block_forward.7} parent=0 // loop_header
    %s11 = sphi 0, %s15
    %p12 = scmp.ge.s32.totalorder %s11, 4
    %s21 = sphi 0, %s23
    %s24 = sphi 0, %s21
    %s25 = sphi 0, %s24
    %s41 = sphi 0, %s25
    %s45 = sphi 0, %s45
    %s47 = sphi 0, %s45
    %s48 = sphi 0, %s47
    %s62 = sphi 0, %s48
    %s66 = sphi 0, %s66
    %s68 = sphi 0, %s66
    %s69 = sphi 0, %s68
    %s83 = sphi 0, %s69
    %s87 = sphi 0, %s87
    %s89 = sphi 0, %s87
    %s90 = sphi 0, %s89
    %s104 = sphi 0, %s90
    %s108 = sphi 0, %s108
    %s110 = sphi 0, %s108
    %s111 = sphi 0, %s110
    %s125 = sphi 0, %s111
    %s131 = sphi 0, %s133
    %s134 = sphi 0, %s131
    %s135 = sphi 0, %s134
    %s151 = sphi 0, %s135
  $region4: #{basic_block_forward.7} parent=0 // loop_header_branch
    %14 = sbr.rel (%p12) target = $region8
  $region5: #{basic_block_forward.7} parent=0 // loop_body
    %s16 = ssub.s32 %s11, 1
    %s17 = ssub.s32 %s11, 2
    %s18 = sadd.s32 %s11, 1
    %s19 = ssub.s32 %s11, %s18
    %p20 = scmp.eq.s32.totalorder %s19, 0
    %s22 = sadd.s32 %s21, 1
    %s23 = scalar_select %p20, %s21, %s22
    %p26 = pneg %p20
    %p27 = scmp.eq.s32.totalorder %s11, 1
    %p28 = por %p26, %p27
    %p29 = scmp.ne.s32.totalorder %s21, %s24
    %p30 = scmp.eq.s32.totalorder %s11, 0
    %p31 = por %p29, %p30
    %p32 = scmp.ne.s32.totalorder %s21, %s24
    %p33 = scmp.eq.s32.totalorder %s16, 1
    %p34 = por %p32, %p33
    %p35 = scmp.ne.s32.totalorder %s24, %s25
    %p36 = scmp.eq.s32.totalorder %s16, 0
    %p37 = por %p35, %p36
    %p38 = scmp.ne.s32.totalorder %s24, %s25
    %p39 = scmp.eq.s32.totalorder %s17, 1
    %p40 = por %p38, %p39
    %p42 = scmp.ne.s32.totalorder %s25, %s41
    %p43 = scmp.eq.s32.totalorder %s17, 0
    %p44 = por %p42, %p43
    %s46 = sadd.s32 %s45, 1
    %p49 = scmp.eq.s32.totalorder %s11, 1
    %p50 = scmp.ne.s32.totalorder %s45, %s47
    %p51 = scmp.eq.s32.totalorder %s11, 0
    %p52 = por %p50, %p51
    %p53 = scmp.ne.s32.totalorder %s45, %s47
    %p54 = scmp.eq.s32.totalorder %s16, 1
    %p55 = por %p53, %p54
    %p56 = scmp.ne.s32.totalorder %s47, %s48
    %p57 = scmp.eq.s32.totalorder %s16, 0
    %p58 = por %p56, %p57
    %p59 = scmp.ne.s32.totalorder %s47, %s48
    %p60 = scmp.eq.s32.totalorder %s17, 1
    %p61 = por %p59, %p60
    %p63 = scmp.ne.s32.totalorder %s48, %s62
    %p64 = scmp.eq.s32.totalorder %s17, 0
    %p65 = por %p63, %p64
    %s67 = sadd.s32 %s66, 1
    %p70 = scmp.eq.s32.totalorder %s11, 1
    %p71 = scmp.ne.s32.totalorder %s66, %s68
    %p72 = scmp.eq.s32.totalorder %s11, 0
    %p73 = por %p71, %p72
    %p74 = scmp.ne.s32.totalorder %s66, %s68
    %p75 = scmp.eq.s32.totalorder %s16, 1
    %p76 = por %p74, %p75
    %p77 = scmp.ne.s32.totalorder %s68, %s69
    %p78 = scmp.eq.s32.totalorder %s16, 0
    %p79 = por %p77, %p78
    %p80 = scmp.ne.s32.totalorder %s68, %s69
    %p81 = scmp.eq.s32.totalorder %s17, 1
    %p82 = por %p80, %p81
    %p84 = scmp.ne.s32.totalorder %s69, %s83
    %p85 = scmp.eq.s32.totalorder %s17, 0
    %p86 = por %p84, %p85
    %s88 = sadd.s32 %s87, 1
    %p91 = scmp.eq.s32.totalorder %s11, 1
    %p92 = scmp.ne.s32.totalorder %s87, %s89
    %p93 = scmp.eq.s32.totalorder %s11, 0
    %p94 = por %p92, %p93
    %p95 = scmp.ne.s32.totalorder %s87, %s89
    %p96 = scmp.eq.s32.totalorder %s16, 1
    %p97 = por %p95, %p96
    %p98 = scmp.ne.s32.totalorder %s89, %s90
    %p99 = scmp.eq.s32.totalorder %s16, 0
    %p100 = por %p98, %p99
    %p101 = scmp.ne.s32.totalorder %s89, %s90
    %p102 = scmp.eq.s32.totalorder %s17, 1
    %p103 = por %p101, %p102
    %p105 = scmp.ne.s32.totalorder %s90, %s104
    %p106 = scmp.eq.s32.totalorder %s17, 0
    %p107 = por %p105, %p106
    %s109 = sadd.s32 %s108, 1
    %p112 = scmp.eq.s32.totalorder %s11, 1
    %p113 = scmp.ne.s32.totalorder %s108, %s110
    %p114 = scmp.eq.s32.totalorder %s11, 0
    %p115 = por %p113, %p114
    %p116 = scmp.ne.s32.totalorder %s108, %s110
    %p117 = scmp.eq.s32.totalorder %s16, 1
    %p118 = por %p116, %p117
    %p119 = scmp.ne.s32.totalorder %s110, %s111
    %p120 = scmp.eq.s32.totalorder %s16, 0
    %p121 = por %p119, %p120
    %p122 = scmp.ne.s32.totalorder %s110, %s111
    %p123 = scmp.eq.s32.totalorder %s17, 1
    %p124 = por %p122, %p123
    %p126 = scmp.ne.s32.totalorder %s111, %s125
    %p127 = scmp.eq.s32.totalorder %s17, 0
    %p128 = por %p126, %p127
    %s129 = ssub.s32 %s11, %s18
    %p130 = scmp.eq.s32.totalorder %s129, 0
    %s132 = sadd.s32 %s131, 1
    %s133 = scalar_select %p130, %s131, %s132
    %p136 = pneg %p130
    %p137 = scmp.eq.s32.totalorder %s11, 1
    %p138 = por %p136, %p137
    %p139 = scmp.ne.s32.totalorder %s131, %s134
    %p140 = scmp.eq.s32.totalorder %s11, 0
    %p141 = por %p139, %p140
    %p142 = scmp.ne.s32.totalorder %s131, %s134
    %p143 = scmp.eq.s32.totalorder %s16, 1
    %p144 = por %p142, %p143
    %p145 = scmp.ne.s32.totalorder %s134, %s135
    %p146 = scmp.eq.s32.totalorder %s16, 0
    %p147 = por %p145, %p146
    %p148 = scmp.ne.s32.totalorder %s134, %s135
    %p149 = scmp.eq.s32.totalorder %s17, 1
    %p150 = por %p148, %p149
    %p152 = scmp.ne.s32.totalorder %s135, %s151
    %p153 = scmp.eq.s32.totalorder %s17, 0
    %p154 = por %p152, %p153
    %p155 = scmp.le.s32.totalorder 1, %s11
    %p156 = scmp.lt.s32.totalorder %s11, 3
    %p157 = pnand %p155, %p156
    %p158 = pneg %p157
    // Predicated region
    $region9: #{basic_block_forward.7} parent=5 // pred_check
      _
    $region10: #{basic_block_forward.7} parent=5 // pred_check_branch
      %160 = sbr.rel (%p157) target = $region12
    $region11: #{basic_block_forward.7} parent=5 // pred_region
      %s161 = ssub.s32 %s11, 1
      // Predicated region
      $region13: #{basic_block_forward.7} parent=11 // pred_check
        %p162 = pneg %p58
      $region14: #{basic_block_forward.7} parent=11 // pred_check_branch
        %164 = sbr.rel (%p162) target = $region16
      $region15: #{basic_block_forward.7} parent=11 // pred_region
        _
      $region16: #{basic_block_forward.7} parent=11 // pred_fallthru
        _
      // Predicated region
      $region17: #{basic_block_forward.7} parent=11 // pred_check
        %p165 = pneg %p79
      $region18: #{basic_block_forward.7} parent=11 // pred_check_branch
        %167 = sbr.rel (%p165) target = $region20
      $region19: #{basic_block_forward.7} parent=11 // pred_region
        _
      $region20: #{basic_block_forward.7} parent=11 // pred_fallthru
        _
      // Predicated region
      $region21: #{basic_block_forward.7} parent=11 // pred_check
        %p168 = pneg %p100
      $region22: #{basic_block_forward.7} parent=11 // pred_check_branch
        %170 = sbr.rel (%p168) target = $region24
      $region23: #{basic_block_forward.7} parent=11 // pred_region
        _
      $region24: #{basic_block_forward.7} parent=11 // pred_fallthru
        _
      // Predicated region
      $region25: #{basic_block_forward.7} parent=11 // pred_check
        %p171 = pneg %p121
      $region26: #{basic_block_forward.7} parent=11 // pred_check_branch
        %173 = sbr.rel (%p171) target = $region28
      $region27: #{basic_block_forward.7} parent=11 // pred_region
        _
      $region28: #{basic_block_forward.7} parent=11 // pred_fallthru
        _
    $region12: #{basic_block_forward.7} parent=5 // pred_fallthru
      _
    %p174 = scmp.lt.s32.totalorder %s11, 2
    // Predicated region
    $region29: #{basic_block_forward.7} parent=5 // pred_check
      %p175 = pneg %p174
    $region30: #{basic_block_forward.7} parent=5 // pred_check_branch
      %177 = sbr.rel (%p175) target = $region32
    $region31: #{basic_block_forward.7} parent=5 // pred_region
      // Predicated region
      $region33: #{basic_block_forward.7} parent=31 // pred_check
        %p178 = pneg %p31
      $region34: #{basic_block_forward.7} parent=31 // pred_check_branch
        %180 = sbr.rel (%p178) target = $region36
      $region35: #{basic_block_forward.7} parent=31 // pred_region
        %s181 = smul.u32 32, %s11
        %p182 = scmp.lt.s32.totalorder %s181, 63
        %s183 = scalar_select %p182, %s181, 63
        %s184 = smul.addr %s183, 8
        %s185 = scalar_lea.vmem %s0, %s184
        %s186 = smul.u32 32, %s11
      $region36: #{basic_block_forward.7} parent=31 // pred_fallthru
        _
    $region32: #{basic_block_forward.7} parent=5 // pred_fallthru
      _
    %p187 = scmp.le.s32.totalorder 1, %s11
    %p188 = scmp.lt.s32.totalorder %s11, 3
    %p189 = pnand %p187, %p188
    %p190 = pneg %p189
    // Predicated region
    $region37: #{basic_block_forward.7} parent=5 // pred_check
      _
    $region38: #{basic_block_forward.7} parent=5 // pred_check_branch
      %192 = sbr.rel (%p189) target = $region40
    $region39: #{basic_block_forward.7} parent=5 // pred_region
      %s193 = ssub.s32 %s11, 1
      %s194 = smul.u32 32, %s16
      %p195 = scmp.lt.s32.totalorder %s194, 63
      %s196 = scalar_select %p195, %s194, 63
      %s197 = smul.addr %s196, 8
      %s198 = scalar_lea.vmem %s0, %s197
      %p199 = pneg %p37
      %p200 = pneg %p34
      %p201 = pneg %p58
      %p202 = pneg %p55
      %p203 = pneg %p79
      %p204 = pneg %p76
      %p205 = pneg %p100
      %p206 = pneg %p97
      %p207 = pneg %p121
      %p208 = pneg %p118
      %p209 = pneg %p147
      %p210 = pneg %p144
      %s211 = smul.u32 32, %s16
      %p212 = scmp.lt.s32.totalorder %s211, 63
      %s213 = scalar_select %p212, %s211, 63
      %s214 = smul.addr %s213, 8
      %s215 = scalar_lea.vmem %s5, %s214
      %s216 = smul.u32 32, %s16
      %p217 = scmp.lt.s32.totalorder %s216, 63
      %s218 = scalar_select %p217, %s216, 63
      %s219 = smul.addr %s218, 8
      %s220 = scalar_lea.vmem %s0, %s219
      %s221 = smul.u32 32, %s16
      %s222 = smul.u32 32, %s16
      %p223 = scmp.lt.s32.totalorder %s222, 63
      %s224 = scalar_select %p223, %s222, 63
      %s225 = smul.addr %s224, 8
      %s226 = scalar_lea.vmem %s5, %s225
      %s227 = smul.u32 32, %s16
      %v228 = vld [vmem:[%s1] sm:$0x1]
      %v229 = vmul.f32 %v228, 0.001953125
      %v230 = vld [vmem:[%s2] sm:$0x1]
      %v231 = vmul.f32 %v230, 0.001953125
      %v232 = vmul.f32 %v229, %v229
      %v233 = vsub.f32 %v231, %v232
      %v234 = vmax.f32 %v233, 0.0
      %v235 = vld [vmem:[%s3] sm:$0x1]
      %v236 = vadd.f32 %v234, 1e-05
      %v237 = vrsqrt.pop %v236
      %v238 = vmul.f32 %v237, %v236
      %v239 = vmul.f32 %v238, %v237
      %v240 = vmul.f32 0.5, %v239
      %v241 = vsub.f32 1.5, %v240
      %v242 = vmul.f32 %v237, %v241
      %vm243 = vweird.f32 %v236
      %vm244 = vweird.f32 %v237
      %vm245 = vmor %vm243, %vm244
      %v246 = vsel %vm245, %v237, %v242
      %v247 = vmul.f32 %v235, %v246
      %v248 = vld [vmem:[%s220] sm:$0xff]
      %v249 = vld [vmem:[%s220 + $0x8] sm:$0xff]
      %v250 = vld [vmem:[%s220 + $0x10] sm:$0xff]
      %v251 = vld [vmem:[%s220 + $0x18] sm:$0xff]
      %v252 = vld [vmem:[%s220 + $0x20] sm:$0xff]
      %v253 = vld [vmem:[%s220 + $0x28] sm:$0xff]
      %v254 = vld [vmem:[%s220 + $0x30] sm:$0xff]
      %v255 = vld [vmem:[%s220 + $0x38] sm:$0xff]
      %v256 = vld [vmem:[%s220 + $0x40] sm:$0xff]
      %v257 = vld [vmem:[%s220 + $0x48] sm:$0xff]
      %v258 = vld [vmem:[%s220 + $0x50] sm:$0xff]
      %v259 = vld [vmem:[%s220 + $0x58] sm:$0xff]
      %v260 = vld [vmem:[%s220 + $0x60] sm:$0xff]
      %v261 = vld [vmem:[%s220 + $0x68] sm:$0xff]
      %v262 = vld [vmem:[%s220 + $0x70] sm:$0xff]
      %v263 = vld [vmem:[%s220 + $0x78] sm:$0xff]
      %v264 = vld [vmem:[%s220 + $0x80] sm:$0xff]
      %v265 = vld [vmem:[%s220 + $0x88] sm:$0xff]
      %v266 = vld [vmem:[%s220 + $0x90] sm:$0xff]
      %v267 = vld [vmem:[%s220 + $0x98] sm:$0xff]
      %v268 = vld [vmem:[%s220 + $0xa0] sm:$0xff]
      %v269 = vld [vmem:[%s220 + $0xa8] sm:$0xff]
      %v270 = vld [vmem:[%s220 + $0xb0] sm:$0xff]
      %v271 = vld [vmem:[%s220 + $0xb8] sm:$0xff]
      %v272 = vld [vmem:[%s220 + $0xc0] sm:$0xff]
      %v273 = vld [vmem:[%s220 + $0xc8] sm:$0xff]
      %v274 = vld [vmem:[%s220 + $0xd0] sm:$0xff]
      %v275 = vld [vmem:[%s220 + $0xd8] sm:$0xff]
      %v276 = vld [vmem:[%s220 + $0xe0] sm:$0xff]
      %v277 = vld [vmem:[%s220 + $0xe8] sm:$0xff]
      %v278 = vld [vmem:[%s220 + $0xf0] sm:$0xff]
      %v279 = vld [vmem:[%s220 + $0xf8] sm:$0xff]
      %v281 = vperm.slane %v229, 0
      %v283 = vsub.f32 %v248, %v281
      %v284 = vsub.f32 %v249, %v281
      %v285 = vsub.f32 %v250, %v281
      %v286 = vsub.f32 %v251, %v281
      %v287 = vsub.f32 %v252, %v281
      %v288 = vsub.f32 %v253, %v281
      %v289 = vsub.f32 %v254, %v281
      %v290 = vsub.f32 %v255, %v281
      %v291 = vsub.f32 %v256, %v281
      %v292 = vsub.f32 %v257, %v281
      %v293 = vsub.f32 %v258, %v281
      %v294 = vsub.f32 %v259, %v281
      %v295 = vsub.f32 %v260, %v281
      %v296 = vsub.f32 %v261, %v281
      %v297 = vsub.f32 %v262, %v281
      %v298 = vsub.f32 %v263, %v281
      %v299 = vsub.f32 %v264, %v281
      %v300 = vsub.f32 %v265, %v281
      %v301 = vsub.f32 %v266, %v281
      %v302 = vsub.f32 %v267, %v281
      %v303 = vsub.f32 %v268, %v281
      %v304 = vsub.f32 %v269, %v281
      %v305 = vsub.f32 %v270, %v281
      %v306 = vsub.f32 %v271, %v281
      %v307 = vsub.f32 %v272, %v281
      %v308 = vsub.f32 %v273, %v281
      %v309 = vsub.f32 %v274, %v281
      %v310 = vsub.f32 %v275, %v281
      %v311 = vsub.f32 %v276, %v281
      %v312 = vsub.f32 %v277, %v281
      %v313 = vsub.f32 %v278, %v281
      %v314 = vsub.f32 %v279, %v281
      %v316 = vperm.slane %v247, 0
      %v318 = vmul.f32 %v283, %v316
      %v319 = vmul.f32 %v284, %v316
      %v320 = vmul.f32 %v285, %v316
      %v321 = vmul.f32 %v286, %v316
      %v322 = vmul.f32 %v287, %v316
      %v323 = vmul.f32 %v288, %v316
      %v324 = vmul.f32 %v289, %v316
      %v325 = vmul.f32 %v290, %v316
      %v326 = vmul.f32 %v291, %v316
      %v327 = vmul.f32 %v292, %v316
      %v328 = vmul.f32 %v293, %v316
      %v329 = vmul.f32 %v294, %v316
      %v330 = vmul.f32 %v295, %v316
      %v331 = vmul.f32 %v296, %v316
      %v332 = vmul.f32 %v297, %v316
      %v333 = vmul.f32 %v298, %v316
      %v334 = vmul.f32 %v299, %v316
      %v335 = vmul.f32 %v300, %v316
      %v336 = vmul.f32 %v301, %v316
      %v337 = vmul.f32 %v302, %v316
      %v338 = vmul.f32 %v303, %v316
      %v339 = vmul.f32 %v304, %v316
      %v340 = vmul.f32 %v305, %v316
      %v341 = vmul.f32 %v306, %v316
      %v342 = vmul.f32 %v307, %v316
      %v343 = vmul.f32 %v308, %v316
      %v344 = vmul.f32 %v309, %v316
      %v345 = vmul.f32 %v310, %v316
      %v346 = vmul.f32 %v311, %v316
      %v347 = vmul.f32 %v312, %v316
      %v348 = vmul.f32 %v313, %v316
      %v349 = vmul.f32 %v314, %v316
      %v350 = vld [vmem:[%s4] sm:$0x1]
      %v352 = vperm.slane %v350, 0
      %v354 = vadd.f32 %v318, %v352
      %v355 = vadd.f32 %v319, %v352
      %v356 = vadd.f32 %v320, %v352
      %v357 = vadd.f32 %v321, %v352
      %v358 = vadd.f32 %v322, %v352
      %v359 = vadd.f32 %v323, %v352
      %v360 = vadd.f32 %v324, %v352
      %v361 = vadd.f32 %v325, %v352
      %v362 = vadd.f32 %v326, %v352
      %v363 = vadd.f32 %v327, %v352
      %v364 = vadd.f32 %v328, %v352
      %v365 = vadd.f32 %v329, %v352
      %v366 = vadd.f32 %v330, %v352
      %v367 = vadd.f32 %v331, %v352
      %v368 = vadd.f32 %v332, %v352
      %v369 = vadd.f32 %v333, %v352
      %v370 = vadd.f32 %v334, %v352
      %v371 = vadd.f32 %v335, %v352
      %v372 = vadd.f32 %v336, %v352
      %v373 = vadd.f32 %v337, %v352
      %v374 = vadd.f32 %v338, %v352
      %v375 = vadd.f32 %v339, %v352
      %v376 = vadd.f32 %v340, %v352
      %v377 = vadd.f32 %v341, %v352
      %v378 = vadd.f32 %v342, %v352
      %v379 = vadd.f32 %v343, %v352
      %v380 = vadd.f32 %v344, %v352
      %v381 = vadd.f32 %v345, %v352
      %v382 = vadd.f32 %v346, %v352
      %v383 = vadd.f32 %v347, %v352
      %v384 = vadd.f32 %v348, %v352
      %v385 = vadd.f32 %v349, %v352
      %v386 = vmax.f32 %v354, 0.0
      %v387 = vmax.f32 %v355, 0.0
      %v388 = vmax.f32 %v356, 0.0
      %v389 = vmax.f32 %v357, 0.0
      %v390 = vmax.f32 %v358, 0.0
      %v391 = vmax.f32 %v359, 0.0
      %v392 = vmax.f32 %v360, 0.0
      %v393 = vmax.f32 %v361, 0.0
      %v394 = vmax.f32 %v362, 0.0
      %v395 = vmax.f32 %v363, 0.0
      %v396 = vmax.f32 %v364, 0.0
      %v397 = vmax.f32 %v365, 0.0
      %v398 = vmax.f32 %v366, 0.0
      %v399 = vmax.f32 %v367, 0.0
      %v400 = vmax.f32 %v368, 0.0
      %v401 = vmax.f32 %v369, 0.0
      %v402 = vmax.f32 %v370, 0.0
      %v403 = vmax.f32 %v371, 0.0
      %v404 = vmax.f32 %v372, 0.0
      %v405 = vmax.f32 %v373, 0.0
      %v406 = vmax.f32 %v374, 0.0
      %v407 = vmax.f32 %v375, 0.0
      %v408 = vmax.f32 %v376, 0.0
      %v409 = vmax.f32 %v377, 0.0
      %v410 = vmax.f32 %v378, 0.0
      %v411 = vmax.f32 %v379, 0.0
      %v412 = vmax.f32 %v380, 0.0
      %v413 = vmax.f32 %v381, 0.0
      %v414 = vmax.f32 %v382, 0.0
      %v415 = vmax.f32 %v383, 0.0
      %v416 = vmax.f32 %v384, 0.0
      %v417 = vmax.f32 %v385, 0.0
      %418 = vst [vmem:[%s226] sm:$0xff] %v386
      %419 = vst [vmem:[%s226 + $0x8] sm:$0xff] %v387
      %420 = vst [vmem:[%s226 + $0x10] sm:$0xff] %v388
      %421 = vst [vmem:[%s226 + $0x18] sm:$0xff] %v389
      %422 = vst [vmem:[%s226 + $0x20] sm:$0xff] %v390
      %423 = vst [vmem:[%s226 + $0x28] sm:$0xff] %v391
      %424 = vst [vmem:[%s226 + $0x30] sm:$0xff] %v392
      %425 = vst [vmem:[%s226 + $0x38] sm:$0xff] %v393
      %426 = vst [vmem:[%s226 + $0x40] sm:$0xff] %v394
      %427 = vst [vmem:[%s226 + $0x48] sm:$0xff] %v395
      %428 = vst [vmem:[%s226 + $0x50] sm:$0xff] %v396
      %429 = vst [vmem:[%s226 + $0x58] sm:$0xff] %v397
      %430 = vst [vmem:[%s226 + $0x60] sm:$0xff] %v398
      %431 = vst [vmem:[%s226 + $0x68] sm:$0xff] %v399
      %432 = vst [vmem:[%s226 + $0x70] sm:$0xff] %v400
      %433 = vst [vmem:[%s226 + $0x78] sm:$0xff] %v401
      %434 = vst [vmem:[%s226 + $0x80] sm:$0xff] %v402
      %435 = vst [vmem:[%s226 + $0x88] sm:$0xff] %v403
      %436 = vst [vmem:[%s226 + $0x90] sm:$0xff] %v404
      %437 = vst [vmem:[%s226 + $0x98] sm:$0xff] %v405
      %438 = vst [vmem:[%s226 + $0xa0] sm:$0xff] %v406
      %439 = vst [vmem:[%s226 + $0xa8] sm:$0xff] %v407
      %440 = vst [vmem:[%s226 + $0xb0] sm:$0xff] %v408
      %441 = vst [vmem:[%s226 + $0xb8] sm:$0xff] %v409
      %442 = vst [vmem:[%s226 + $0xc0] sm:$0xff] %v410
      %443 = vst [vmem:[%s226 + $0xc8] sm:$0xff] %v411
      %444 = vst [vmem:[%s226 + $0xd0] sm:$0xff] %v412
      %445 = vst [vmem:[%s226 + $0xd8] sm:$0xff] %v413
      %446 = vst [vmem:[%s226 + $0xe0] sm:$0xff] %v414
      %447 = vst [vmem:[%s226 + $0xe8] sm:$0xff] %v415
      %448 = vst [vmem:[%s226 + $0xf0] sm:$0xff] %v416
      %449 = vst [vmem:[%s226 + $0xf8] sm:$0xff] %v417
      %s450 = smul.u32 32, %s16
      %p451 = scmp.lt.s32.totalorder %s450, 63
      %s452 = scalar_select %p451, %s450, 63
      %s453 = smul.addr %s452, 8
      %s454 = scalar_lea.vmem %s5, %s453
      // Predicated region
      $region41: #{basic_block_forward.7} parent=39 // pred_check
        %p455 = pneg %p144
      $region42: #{basic_block_forward.7} parent=39 // pred_check_branch
        %457 = sbr.rel (%p455) target = $region44
      $region43: #{basic_block_forward.7} parent=39 // pred_region
        %s458 = smul.u32 32, %s16
      $region44: #{basic_block_forward.7} parent=39 // pred_fallthru
        _
    $region40: #{basic_block_forward.7} parent=5 // pred_fallthru
      _
    %p459 = scmp.le.s32.totalorder 2, %s11
    // Predicated region
    $region45: #{basic_block_forward.7} parent=5 // pred_check
      %p460 = pneg %p459
    $region46: #{basic_block_forward.7} parent=5 // pred_check_branch
      %462 = sbr.rel (%p460) target = $region48
    $region47: #{basic_block_forward.7} parent=5 // pred_region
      %s463 = ssub.s32 %s11, 2
      // Predicated region
      $region49: #{basic_block_forward.7} parent=47 // pred_check
        %p464 = pneg %p150
      $region50: #{basic_block_forward.7} parent=47 // pred_check_branch
        %466 = sbr.rel (%p464) target = $region52
      $region51: #{basic_block_forward.7} parent=47 // pred_region
        %s467 = smul.u32 32, %s17
        %p468 = scmp.lt.s32.totalorder %s467, 63
        %s469 = scalar_select %p468, %s467, 63
        %s470 = smul.addr %s469, 8
        %s471 = scalar_lea.vmem %s5, %s470
      $region52: #{basic_block_forward.7} parent=47 // pred_fallthru
        _
    $region48: #{basic_block_forward.7} parent=5 // pred_fallthru
      _
  $region6: #{basic_block_forward.7} parent=0 // loop_footer
    %s15 = sadd.s32 1, %s11
  $region7: #{basic_block_forward.7} parent=0 // loop_footer_branch
    %10 = sbr.rel target = $region3
  $region8: #{basic_block_forward.7} parent=0 // loop_exit
    _

// kernel: basic_block_forward.6
$region0: #{basic_block_forward.6}
  #allocation0 [shape = 'u32[]', space=smem, size = 0x4, offset = 0x4, fixed_abs, tag = 'smem constant byte address 0x4 - core index']
  #allocation1 [shape = 'u32[72,128]{1,0:T(1,128)}', space=vmem, size = 0x9000, scoped, tag = 'internal scratch']
  #allocation2 [shape = 'f32[256,128]{1,0:T(8,128)}', space=vmem, size = 0x20000, scoped, tag = 'scratch operand']
  %s0 = inlined_call_operand.vmem [shape: bf16[512,576], index: 0, kind: input, shape index: {}]
  %s1 = inlined_call_operand.vmem [shape: bf16[576,128], index: 1, kind: input, shape index: {}]
  %s2 = inlined_call_operand.vmem [shape: f32[512,128], index: 2, kind: output, shape index: {0}]
  %s3 = inlined_call_operand.vmem [shape: f32[1,128], index: 3, kind: output, shape index: {1}]
  %s4 = inlined_call_operand.vmem [shape: f32[1,128], index: 4, kind: output, shape index: {2}]
  %5 = xla_tuple %s2, %s3, %s4
  %s6 = sld [smem:[#allocation0]]
  $region69: #{basic_block_forward.6} parent=0
    _
  %s8 = ssub.s32 1, %s6
  %s9 = scalar_select 0, %s8, %s6
  loop: start=0, step=1, limit=4
  $region2: #{basic_block_forward.6} parent=0 // loop_pre_header
    _
  $region3: #{basic_block_forward.6} parent=0 // loop_header
    %s11 = sphi 0, %s15
    %p12 = scmp.ge.s32.totalorder %s11, 4
    %s18 = sphi 0, %s30
    %s19 = sphi 0, %s26
    %s20 = sphi 0, %s18
    %s21 = sphi 0, %s19
    %s22 = sphi 0, %s20
    %s23 = sphi 0, %s21
    %s35 = sphi 0, %s37
    %s38 = sphi 0, %s35
    %s39 = sphi 0, %s38
    %s55 = sphi 0, %s39
    %s61 = sphi 0, %s63
    %s64 = sphi 0, %s61
    %s65 = sphi 0, %s64
    %s81 = sphi 0, %s65
    %s87 = sphi 0, %s89
    %s90 = sphi 0, %s87
    %s91 = sphi 0, %s90
    %s107 = sphi 0, %s91
    %s111 = sphi 0, %s111
    %s113 = sphi 0, %s111
    %s114 = sphi 0, %s113
    %s128 = sphi 0, %s114
    %s132 = sphi 0, %s132
    %s134 = sphi 0, %s132
    %s135 = sphi 0, %s134
    %s149 = sphi 0, %s135
  $region4: #{basic_block_forward.6} parent=0 // loop_header_branch
    %14 = sbr.rel (%p12) target = $region8
  $region5: #{basic_block_forward.6} parent=0 // loop_body
    %s16 = ssub.s32 %s11, 1
    %s17 = ssub.s32 %s11, 2
    %s24 = sadd.s32 1, %s19
    %p25 = scmp.ge.s32.totalorder %s24, 1
    %s26 = scalar_select %p25, 0, %s24
    %s27 = sadd.s32 1, %s18
    %s28 = scalar_select %p25, %s27, %s18
    %p29 = scmp.ge.s32.totalorder %s28, 2
    %s30 = scalar_select %p29, 0, %s28
    %s31 = ssub.s32 %s18, %s30
    %s32 = ssub.s32 %s19, %s26
    %s33 = sor.u32 %s31, %s32
    %p34 = scmp.eq.s32.totalorder %s33, 0
    %s36 = sadd.s32 %s35, 1
    %s37 = scalar_select %p34, %s35, %s36
    %p40 = pneg %p34
    %p41 = scmp.eq.s32.totalorder %s11, 1
    %p42 = por %p40, %p41
    %p43 = scmp.ne.s32.totalorder %s35, %s38
    %p44 = scmp.eq.s32.totalorder %s11, 0
    %p45 = por %p43, %p44
    %p46 = scmp.ne.s32.totalorder %s35, %s38
    %p47 = scmp.eq.s32.totalorder %s16, 1
    %p48 = por %p46, %p47
    %p49 = scmp.ne.s32.totalorder %s38, %s39
    %p50 = scmp.eq.s32.totalorder %s16, 0
    %p51 = por %p49, %p50
    %p52 = scmp.ne.s32.totalorder %s38, %s39
    %p53 = scmp.eq.s32.totalorder %s17, 1
    %p54 = por %p52, %p53
    %p56 = scmp.ne.s32.totalorder %s39, %s55
    %p57 = scmp.eq.s32.totalorder %s17, 0
    %p58 = por %p56, %p57
    %s59 = ssub.s32 %s19, %s26
    %p60 = scmp.eq.s32.totalorder %s59, 0
    %s62 = sadd.s32 %s61, 1
    %s63 = scalar_select %p60, %s61, %s62
    %p66 = pneg %p60
    %p67 = scmp.eq.s32.totalorder %s11, 1
    %p68 = por %p66, %p67
    %p69 = scmp.ne.s32.totalorder %s61, %s64
    %p70 = scmp.eq.s32.totalorder %s11, 0
    %p71 = por %p69, %p70
    %p72 = scmp.ne.s32.totalorder %s61, %s64
    %p73 = scmp.eq.s32.totalorder %s16, 1
    %p74 = por %p72, %p73
    %p75 = scmp.ne.s32.totalorder %s64, %s65
    %p76 = scmp.eq.s32.totalorder %s16, 0
    %p77 = por %p75, %p76
    %p78 = scmp.ne.s32.totalorder %s64, %s65
    %p79 = scmp.eq.s32.totalorder %s17, 1
    %p80 = por %p78, %p79
    %p82 = scmp.ne.s32.totalorder %s65, %s81
    %p83 = scmp.eq.s32.totalorder %s17, 0
    %p84 = por %p82, %p83
    %s85 = ssub.s32 %s18, %s30
    %p86 = scmp.eq.s32.totalorder %s85, 0
    %s88 = sadd.s32 %s87, 1
    %s89 = scalar_select %p86, %s87, %s88
    %p92 = pneg %p86
    %p93 = scmp.eq.s32.totalorder %s11, 1
    %p94 = por %p92, %p93
    %p95 = scmp.ne.s32.totalorder %s87, %s90
    %p96 = scmp.eq.s32.totalorder %s11, 0
    %p97 = por %p95, %p96
    %p98 = scmp.ne.s32.totalorder %s87, %s90
    %p99 = scmp.eq.s32.totalorder %s16, 1
    %p100 = por %p98, %p99
    %p101 = scmp.ne.s32.totalorder %s90, %s91
    %p102 = scmp.eq.s32.totalorder %s16, 0
    %p103 = por %p101, %p102
    %p104 = scmp.ne.s32.totalorder %s90, %s91
    %p105 = scmp.eq.s32.totalorder %s17, 1
    %p106 = por %p104, %p105
    %p108 = scmp.ne.s32.totalorder %s91, %s107
    %p109 = scmp.eq.s32.totalorder %s17, 0
    %p110 = por %p108, %p109
    %s112 = sadd.s32 %s111, 1
    %p115 = scmp.eq.s32.totalorder %s11, 1
    %p116 = scmp.ne.s32.totalorder %s111, %s113
    %p117 = scmp.eq.s32.totalorder %s11, 0
    %p118 = por %p116, %p117
    %p119 = scmp.ne.s32.totalorder %s111, %s113
    %p120 = scmp.eq.s32.totalorder %s16, 1
    %p121 = por %p119, %p120
    %p122 = scmp.ne.s32.totalorder %s113, %s114
    %p123 = scmp.eq.s32.totalorder %s16, 0
    %p124 = por %p122, %p123
    %p125 = scmp.ne.s32.totalorder %s113, %s114
    %p126 = scmp.eq.s32.totalorder %s17, 1
    %p127 = por %p125, %p126
    %p129 = scmp.ne.s32.totalorder %s114, %s128
    %p130 = scmp.eq.s32.totalorder %s17, 0
    %p131 = por %p129, %p130
    %s133 = sadd.s32 %s132, 1
    %p136 = scmp.eq.s32.totalorder %s11, 1
    %p137 = scmp.ne.s32.totalorder %s132, %s134
    %p138 = scmp.eq.s32.totalorder %s11, 0
    %p139 = por %p137, %p138
    %p140 = scmp.ne.s32.totalorder %s132, %s134
    %p141 = scmp.eq.s32.totalorder %s16, 1
    %p142 = por %p140, %p141
    %p143 = scmp.ne.s32.totalorder %s134, %s135
    %p144 = scmp.eq.s32.totalorder %s16, 0
    %p145 = por %p143, %p144
    %p146 = scmp.ne.s32.totalorder %s134, %s135
    %p147 = scmp.eq.s32.totalorder %s17, 1
    %p148 = por %p146, %p147
    %p150 = scmp.ne.s32.totalorder %s135, %s149
    %p151 = scmp.eq.s32.totalorder %s17, 0
    %p152 = por %p150, %p151
    %p153 = scmp.le.s32.totalorder 1, %s11
    %p154 = scmp.lt.s32.totalorder %s11, 3
    %p155 = pnand %p153, %p154
    %p156 = pneg %p155
    // Predicated region
    $region9: #{basic_block_forward.6} parent=5 // pred_check
      _
    $region10: #{basic_block_forward.6} parent=5 // pred_check_branch
      %158 = sbr.rel (%p155) target = $region12
    $region11: #{basic_block_forward.6} parent=5 // pred_region
      %s159 = ssub.s32 %s11, 1
      // Predicated region
      $region13: #{basic_block_forward.6} parent=11 // pred_check
        %p160 = pneg %p77
      $region14: #{basic_block_forward.6} parent=11 // pred_check_branch
        %162 = sbr.rel (%p160) target = $region16
      $region15: #{basic_block_forward.6} parent=11 // pred_region
        %s163 = smul.u32 72, %s21
        %p164 = scmp.lt.s32.totalorder %s163, 71
        %s165 = scalar_select %p164, %s163, 71
        %s166 = smul.addr %s165, 4
        %s167 = scalar_lea.vmem %s1, %s166
        %s168 = smul.u32 72, %s21
      $region16: #{basic_block_forward.6} parent=11 // pred_fallthru
        _
    $region12: #{basic_block_forward.6} parent=5 // pred_fallthru
      _
    %p169 = scmp.lt.s32.totalorder %s11, 2
    // Predicated region
    $region17: #{basic_block_forward.6} parent=5 // pred_check
      %p170 = pneg %p169
    $region18: #{basic_block_forward.6} parent=5 // pred_check_branch
      %172 = sbr.rel (%p170) target = $region20
    $region19: #{basic_block_forward.6} parent=5 // pred_region
      // Predicated region
      $region21: #{basic_block_forward.6} parent=19 // pred_check
        %p173 = pneg %p45
      $region22: #{basic_block_forward.6} parent=19 // pred_check_branch
        %175 = sbr.rel (%p173) target = $region24
      $region23: #{basic_block_forward.6} parent=19 // pred_region
        %s176 = smul.u32 32, %s18
        %s177 = smul.u32 5, %s19
        %p178 = scmp.lt.s32.totalorder %s176, 63
        %s179 = scalar_select %p178, %s176, 63
        %p180 = scmp.lt.s32.totalorder %s177, 4
        %s181 = scalar_select %p180, %s177, 4
        %s182 = smul.addr %s179, 5
        %s183 = sadd.s32 %s181, %s182
        %s184 = smul.addr %s183, 4
        %s185 = scalar_lea.vmem %s0, %s184
        %s186 = smul.u32 32, %s18
        %s187 = smul.u32 5, %s19
      $region24: #{basic_block_forward.6} parent=19 // pred_fallthru
        _
    $region20: #{basic_block_forward.6} parent=5 // pred_fallthru
      _
    %p188 = scmp.le.s32.totalorder 1, %s11
    %p189 = scmp.lt.s32.totalorder %s11, 3
    %p190 = pnand %p188, %p189
    %p191 = pneg %p190
    // Predicated region
    $region25: #{basic_block_forward.6} parent=5 // pred_check
      _
    $region26: #{basic_block_forward.6} parent=5 // pred_check_branch
      %193 = sbr.rel (%p190) target = $region28
    $region27: #{basic_block_forward.6} parent=5 // pred_region
      %s194 = ssub.s32 %s11, 1
      %s195 = smul.u32 32, %s20
      %s196 = smul.u32 5, %s21
      %p197 = scmp.lt.s32.totalorder %s195, 63
      %s198 = scalar_select %p197, %s195, 63
      %p199 = scmp.lt.s32.totalorder %s196, 4
      %s200 = scalar_select %p199, %s196, 4
      %s201 = smul.addr %s198, 5
      %s202 = sadd.s32 %s200, %s201
      %s203 = smul.addr %s202, 4
      %s204 = scalar_lea.vmem %s0, %s203
      %p205 = pneg %p51
      %p206 = pneg %p48
      %s207 = smul.u32 72, %s21
      %p208 = scmp.lt.s32.totalorder %s207, 71
      %s209 = scalar_select %p208, %s207, 71
      %s210 = smul.addr %s209, 4
      %s211 = scalar_lea.vmem %s1, %s210
      %p212 = pneg %p77
      %p213 = pneg %p74
      %p214 = pneg %p103
      %p215 = pneg %p100
      %s216 = smul.u32 32, %s20
      %p217 = scmp.lt.s32.totalorder %s216, 63
      %s218 = scalar_select %p217, %s216, 63
      %s219 = smul.addr %s218, 8
      %s220 = scalar_lea.vmem %s2, %s219
      %p221 = pneg %p124
      %p222 = pneg %p121
      %p223 = pneg %p145
      %p224 = pneg %p142
      %s225 = smul.u32 32, %s20
      %s226 = smul.u32 5, %s21
      %p227 = scmp.lt.s32.totalorder %s225, 63
      %s228 = scalar_select %p227, %s225, 63
      %p229 = scmp.lt.s32.totalorder %s226, 4
      %s230 = scalar_select %p229, %s226, 4
      %s231 = smul.addr %s228, 5
      %s232 = sadd.s32 %s230, %s231
      %s233 = smul.addr %s232, 4
      %s234 = scalar_lea.vmem %s0, %s233
      %s235 = smul.u32 32, %s20
      %s236 = smul.u32 5, %s21
      %s237 = smul.u32 72, %s21
      %p238 = scmp.lt.s32.totalorder %s237, 71
      %s239 = scalar_select %p238, %s237, 71
      %s240 = smul.addr %s239, 4
      %s241 = scalar_lea.vmem %s1, %s240
      %s242 = smul.u32 72, %s21
      %s243 = smul.u32 32, %s20
      %p244 = scmp.lt.s32.totalorder %s243, 63
      %s245 = scalar_select %p244, %s243, 63
      %s246 = smul.addr %s245, 8
      %s247 = scalar_lea.vmem %s2, %s246
      %s248 = smul.u32 32, %s20
      %p250 = scmp.eq.s32.totalorder %s21, 0
      // Predicated region
      $region29: #{basic_block_forward.6} parent=27 // pred_check
        %p251 = pneg %p250
      $region30: #{basic_block_forward.6} parent=27 // pred_check_branch
        %253 = sbr.rel (%p251) target = $region32
      $region31: #{basic_block_forward.6} parent=27 // pred_region
        %254 = vst [vmem:[#allocation2] sm:$0xff] 0.0
        %255 = vst [vmem:[#allocation2 + $0x8] sm:$0xff] 0.0
        %256 = vst [vmem:[#allocation2 + $0x10] sm:$0xff] 0.0
        %257 = vst [vmem:[#allocation2 + $0x18] sm:$0xff] 0.0
        %258 = vst [vmem:[#allocation2 + $0x20] sm:$0xff] 0.0
        %259 = vst [vmem:[#allocation2 + $0x28] sm:$0xff] 0.0
        %260 = vst [vmem:[#allocation2 + $0x30] sm:$0xff] 0.0
        %261 = vst [vmem:[#allocation2 + $0x38] sm:$0xff] 0.0
        %262 = vst [vmem:[#allocation2 + $0x40] sm:$0xff] 0.0
        %263 = vst [vmem:[#allocation2 + $0x48] sm:$0xff] 0.0
        %264 = vst [vmem:[#allocation2 + $0x50] sm:$0xff] 0.0
        %265 = vst [vmem:[#allocation2 + $0x58] sm:$0xff] 0.0
        %266 = vst [vmem:[#allocation2 + $0x60] sm:$0xff] 0.0
        %267 = vst [vmem:[#allocation2 + $0x68] sm:$0xff] 0.0
        %268 = vst [vmem:[#allocation2 + $0x70] sm:$0xff] 0.0
        %269 = vst [vmem:[#allocation2 + $0x78] sm:$0xff] 0.0
        %270 = vst [vmem:[#allocation2 + $0x80] sm:$0xff] 0.0
        %271 = vst [vmem:[#allocation2 + $0x88] sm:$0xff] 0.0
        %272 = vst [vmem:[#allocation2 + $0x90] sm:$0xff] 0.0
        %273 = vst [vmem:[#allocation2 + $0x98] sm:$0xff] 0.0
        %274 = vst [vmem:[#allocation2 + $0xa0] sm:$0xff] 0.0
        %275 = vst [vmem:[#allocation2 + $0xa8] sm:$0xff] 0.0
        %276 = vst [vmem:[#allocation2 + $0xb0] sm:$0xff] 0.0
        %277 = vst [vmem:[#allocation2 + $0xb8] sm:$0xff] 0.0
        %278 = vst [vmem:[#allocation2 + $0xc0] sm:$0xff] 0.0
        %279 = vst [vmem:[#allocation2 + $0xc8] sm:$0xff] 0.0
        %280 = vst [vmem:[#allocation2 + $0xd0] sm:$0xff] 0.0
        %281 = vst [vmem:[#allocation2 + $0xd8] sm:$0xff] 0.0
        %282 = vst [vmem:[#allocation2 + $0xe0] sm:$0xff] 0.0
        %283 = vst [vmem:[#allocation2 + $0xe8] sm:$0xff] 0.0
        %284 = vst [vmem:[#allocation2 + $0xf0] sm:$0xff] 0.0
        %285 = vst [vmem:[#allocation2 + $0xf8] sm:$0xff] 0.0
      $region32: #{basic_block_forward.6} parent=27 // pred_fallthru
        _
      %p286 = scmp.eq.s32.totalorder %s20, 0
      %p287 = pnand %p286, %p250
      %p288 = pneg %p287
      // Predicated region
      $region33: #{basic_block_forward.6} parent=27 // pred_check
        _
      $region34: #{basic_block_forward.6} parent=27 // pred_check_branch
        %290 = sbr.rel (%p287) target = $region36
      $region35: #{basic_block_forward.6} parent=27 // pred_region
        %291 = vst [vmem:[%s3] sm:$0x1] 0.0
        %292 = vst [vmem:[%s4] sm:$0x1] 0.0
      $region36: #{basic_block_forward.6} parent=27 // pred_fallthru
        _
      %v293 = vld [vmem:[#allocation2] sm:$0xff]
      %v294 = vld [vmem:[#allocation2 + $0x8] sm:$0xff]
      %v295 = vld [vmem:[#allocation2 + $0x10] sm:$0xff]
      %v296 = vld [vmem:[#allocation2 + $0x18] sm:$0xff]
      %v297 = vld [vmem:[#allocation2 + $0x20] sm:$0xff]
      %v298 = vld [vmem:[#allocation2 + $0x28] sm:$0xff]
      %v299 = vld [vmem:[#allocation2 + $0x30] sm:$0xff]
      %v300 = vld [vmem:[#allocation2 + $0x38] sm:$0xff]
      %v301 = vld [vmem:[#allocation2 + $0x40] sm:$0xff]
      %v302 = vld [vmem:[#allocation2 + $0x48] sm:$0xff]
      %v303 = vld [vmem:[#allocation2 + $0x50] sm:$0xff]
      %v304 = vld [vmem:[#allocation2 + $0x58] sm:$0xff]
      %v305 = vld [vmem:[#allocation2 + $0x60] sm:$0xff]
      %v306 = vld [vmem:[#allocation2 + $0x68] sm:$0xff]
      %v307 = vld [vmem:[#allocation2 + $0x70] sm:$0xff]
      %v308 = vld [vmem:[#allocation2 + $0x78] sm:$0xff]
      %v309 = vld [vmem:[#allocation2 + $0x80] sm:$0xff]
      %v310 = vld [vmem:[#allocation2 + $0x88] sm:$0xff]
      %v311 = vld [vmem:[#allocation2 + $0x90] sm:$0xff]
      %v312 = vld [vmem:[#allocation2 + $0x98] sm:$0xff]
      %v313 = vld [vmem:[#allocation2 + $0xa0] sm:$0xff]
      %v314 = vld [vmem:[#allocation2 + $0xa8] sm:$0xff]
      %v315 = vld [vmem:[#allocation2 + $0xb0] sm:$0xff]
      %v316 = vld [vmem:[#allocation2 + $0xb8] sm:$0xff]
      %v317 = vld [vmem:[#allocation2 + $0xc0] sm:$0xff]
      %v318 = vld [vmem:[#allocation2 + $0xc8] sm:$0xff]
      %v319 = vld [vmem:[#allocation2 + $0xd0] sm:$0xff]
      %v320 = vld [vmem:[#allocation2 + $0xd8] sm:$0xff]
      %v321 = vld [vmem:[#allocation2 + $0xe0] sm:$0xff]
      %v322 = vld [vmem:[#allocation2 + $0xe8] sm:$0xff]
      %v323 = vld [vmem:[#allocation2 + $0xf0] sm:$0xff]
      %v324 = vld [vmem:[#allocation2 + $0xf8] sm:$0xff]
      %v325 = vld [vmem:[%s234] sm:$0xff]
      %v326 = vld [vmem:[%s234 + $0x8] sm:$0xff]
      %v327 = vld [vmem:[%s234 + $0x10] sm:$0xf]
      %v328 = vld [vmem:[%s234 + $0x14] sm:$0xff]
      %v329 = vld [vmem:[%s234 + $0x1c] sm:$0xff]
      %v330 = vld [vmem:[%s234 + $0x24] sm:$0xf]
      %v331 = vld [vmem:[%s234 + $0x28] sm:$0xff]
      %v332 = vld [vmem:[%s234 + $0x30] sm:$0xff]
      %v333 = vld [vmem:[%s234 + $0x38] sm:$0xf]
      %v334 = vld [vmem:[%s234 + $0x3c] sm:$0xff]
      %v335 = vld [vmem:[%s234 + $0x44] sm:$0xff]
      %v336 = vld [vmem:[%s234 + $0x4c] sm:$0xf]
      %v337 = vld [vmem:[%s234 + $0x50] sm:$0xff]
      %v338 = vld [vmem:[%s234 + $0x58] sm:$0xff]
      %v339 = vld [vmem:[%s234 + $0x60] sm:$0xf]
      %v340 = vld [vmem:[%s234 + $0x64] sm:$0xff]
      %v341 = vld [vmem:[%s234 + $0x6c] sm:$0xff]
      %v342 = vld [vmem:[%s234 + $0x74] sm:$0xf]
      %v343 = vld [vmem:[%s234 + $0x78] sm:$0xff]
      %v344 = vld [vmem:[%s234 + $0x80] sm:$0xff]
      %v345 = vld [vmem:[%s234 + $0x88] sm:$0xf]
      %v346 = vld [vmem:[%s234 + $0x8c] sm:$0xff]
      %v347 = vld [vmem:[%s234 + $0x94] sm:$0xff]
      %v348 = vld [vmem:[%s234 + $0x9c] sm:$0xf]
      %v349 = vld [vmem:[%s234 + $0xa0] sm:$0xff]
      %v350 = vld [vmem:[%s234 + $0xa8] sm:$0xff]
      %v351 = vld [vmem:[%s234 + $0xb0] sm:$0xf]
      %v352 = vld [vmem:[%s234 + $0xb4] sm:$0xff]
      %v353 = vld [vmem:[%s234 + $0xbc] sm:$0xff]
      %v354 = vld [vmem:[%s234 + $0xc4] sm:$0xf]
      %v355 = vld [vmem:[%s234 + $0xc8] sm:$0xff]
      %v356 = vld [vmem:[%s234 + $0xd0] sm:$0xff]
      %v357 = vld [vmem:[%s234 + $0xd8] sm:$0xf]
      %v358 = vld [vmem:[%s234 + $0xdc] sm:$0xff]
      %v359 = vld [vmem:[%s234 + $0xe4] sm:$0xff]
      %v360 = vld [vmem:[%s234 + $0xec] sm:$0xf]
      %v361 = vld [vmem:[%s234 + $0xf0] sm:$0xff]
      %v362 = vld [vmem:[%s234 + $0xf8] sm:$0xff]
      %v363 = vld [vmem:[%s234 + $0x100] sm:$0xf]
      %v364 = vld [vmem:[%s234 + $0x104] sm:$0xff]
      %v365 = vld [vmem:[%s234 + $0x10c] sm:$0xff]
      %v366 = vld [vmem:[%s234 + $0x114] sm:$0xf]
      %v367 = vld [vmem:[%s234 + $0x118] sm:$0xff]
      %v368 = vld [vmem:[%s234 + $0x120] sm:$0xff]
      %v369 = vld [vmem:[%s234 + $0x128] sm:$0xf]
      %v370 = vld [vmem:[%s234 + $0x12c] sm:$0xff]
      %v371 = vld [vmem:[%s234 + $0x134] sm:$0xff]
      %v372 = vld [vmem:[%s234 + $0x13c] sm:$0xf]
      %v373 = vld [vmem:[%s234 + $0x140] sm:$0xff]
      %v374 = vld [vmem:[%s234 + $0x148] sm:$0xff]
      %v375 = vld [vmem:[%s234 + $0x150] sm:$0xf]
      %v376 = vld [vmem:[%s234 + $0x154] sm:$0xff]
      %v377 = vld [vmem:[%s234 + $0x15c] sm:$0xff]
      %v378 = vld [vmem:[%s234 + $0x164] sm:$0xf]
      %v379 = vld [vmem:[%s234 + $0x168] sm:$0xff]
      %v380 = vld [vmem:[%s234 + $0x170] sm:$0xff]
      %v381 = vld [vmem:[%s234 + $0x178] sm:$0xf]
      %v382 = vld [vmem:[%s234 + $0x17c] sm:$0xff]
      %v383 = vld [vmem:[%s234 + $0x184] sm:$0xff]
      %v384 = vld [vmem:[%s234 + $0x18c] sm:$0xf]
      %v385 = vld [vmem:[%s234 + $0x190] sm:$0xff]
      %v386 = vld [vmem:[%s234 + $0x198] sm:$0xff]
      %v387 = vld [vmem:[%s234 + $0x1a0] sm:$0xf]
      %v388 = vld [vmem:[%s234 + $0x1a4] sm:$0xff]
      %v389 = vld [vmem:[%s234 + $0x1ac] sm:$0xff]
      %v390 = vld [vmem:[%s234 + $0x1b4] sm:$0xf]
      %v391 = vld [vmem:[%s234 + $0x1b8] sm:$0xff]
      %v392 = vld [vmem:[%s234 + $0x1c0] sm:$0xff]
      %v393 = vld [vmem:[%s234 + $0x1c8] sm:$0xf]
      %v394 = vld [vmem:[%s234 + $0x1cc] sm:$0xff]
      %v395 = vld [vmem:[%s234 + $0x1d4] sm:$0xff]
      %v396 = vld [vmem:[%s234 + $0x1dc] sm:$0xf]
      %v397 = vld [vmem:[%s234 + $0x1e0] sm:$0xff]
      %v398 = vld [vmem:[%s234 + $0x1e8] sm:$0xff]
      %v399 = vld [vmem:[%s234 + $0x1f0] sm:$0xf]
      %v400 = vld [vmem:[%s234 + $0x1f4] sm:$0xff]
      %v401 = vld [vmem:[%s234 + $0x1fc] sm:$0xff]
      %v402 = vld [vmem:[%s234 + $0x204] sm:$0xf]
      %v403 = vld [vmem:[%s234 + $0x208] sm:$0xff]
      %v404 = vld [vmem:[%s234 + $0x210] sm:$0xff]
      %v405 = vld [vmem:[%s234 + $0x218] sm:$0xf]
      %v406 = vld [vmem:[%s234 + $0x21c] sm:$0xff]
      %v407 = vld [vmem:[%s234 + $0x224] sm:$0xff]
      %v408 = vld [vmem:[%s234 + $0x22c] sm:$0xf]
      %v409 = vld [vmem:[%s234 + $0x230] sm:$0xff]
      %v410 = vld [vmem:[%s234 + $0x238] sm:$0xff]
      %v411 = vld [vmem:[%s234 + $0x240] sm:$0xf]
      %v412 = vld [vmem:[%s234 + $0x244] sm:$0xff]
      %v413 = vld [vmem:[%s234 + $0x24c] sm:$0xff]
      %v414 = vld [vmem:[%s234 + $0x254] sm:$0xf]
      %v415 = vld [vmem:[%s234 + $0x258] sm:$0xff]
      %v416 = vld [vmem:[%s234 + $0x260] sm:$0xff]
      %v417 = vld [vmem:[%s234 + $0x268] sm:$0xf]
      %v418 = vld [vmem:[%s234 + $0x26c] sm:$0xff]
      %v419 = vld [vmem:[%s234 + $0x274] sm:$0xff]
      %v420 = vld [vmem:[%s234 + $0x27c] sm:$0xf]
      %v421 = vld [vmem:[%s241] sm:$0xf]
      %v422 = vld [vmem:[%s241 + $0x4] sm:$0xf]
      %v423 = vld [vmem:[%s241 + $0x8] sm:$0xf]
      %v424 = vld [vmem:[%s241 + $0xc] sm:$0xf]
      %v425 = vld [vmem:[%s241 + $0x10] sm:$0xf]
      %v426 = vld [vmem:[%s241 + $0x14] sm:$0xf]
      %v427 = vld [vmem:[%s241 + $0x18] sm:$0xf]
      %v428 = vld [vmem:[%s241 + $0x1c] sm:$0xf]
      %v429 = vld [vmem:[%s241 + $0x20] sm:$0xf]
      %v430 = vld [vmem:[%s241 + $0x24] sm:$0xf]
      %v431 = vld [vmem:[%s241 + $0x28] sm:$0xf]
      %v432 = vld [vmem:[%s241 + $0x2c] sm:$0xf]
      %v433 = vld [vmem:[%s241 + $0x30] sm:$0xf]
      %v434 = vld [vmem:[%s241 + $0x34] sm:$0xf]
      %v435 = vld [vmem:[%s241 + $0x38] sm:$0xf]
      %v436 = vld [vmem:[%s241 + $0x3c] sm:$0xf]
      %v437 = vld [vmem:[%s241 + $0x40] sm:$0xf]
      %v438 = vld [vmem:[%s241 + $0x44] sm:$0xf]
      %v439 = vld [vmem:[%s241 + $0x48] sm:$0xf]
      %v440 = vld [vmem:[%s241 + $0x4c] sm:$0xf]
      %v441 = vld [vmem:[%s241 + $0x50] sm:$0xf]
      %v442 = vld [vmem:[%s241 + $0x54] sm:$0xf]
      %v443 = vld [vmem:[%s241 + $0x58] sm:$0xf]
      %v444 = vld [vmem:[%s241 + $0x5c] sm:$0xf]
      %v445 = vld [vmem:[%s241 + $0x60] sm:$0xf]
      %v446 = vld [vmem:[%s241 + $0x64] sm:$0xf]
      %v447 = vld [vmem:[%s241 + $0x68] sm:$0xf]
      %v448 = vld [vmem:[%s241 + $0x6c] sm:$0xf]
      %v449 = vld [vmem:[%s241 + $0x70] sm:$0xf]
      %v450 = vld [vmem:[%s241 + $0x74] sm:$0xf]
      %v451 = vld [vmem:[%s241 + $0x78] sm:$0xf]
      %v452 = vld [vmem:[%s241 + $0x7c] sm:$0xf]
      %v453 = vld [vmem:[%s241 + $0x80] sm:$0xf]
      %v454 = vld [vmem:[%s241 + $0x84] sm:$0xf]
      %v455 = vld [vmem:[%s241 + $0x88] sm:$0xf]
      %v456 = vld [vmem:[%s241 + $0x8c] sm:$0xf]
      %v457 = vld [vmem:[%s241 + $0x90] sm:$0xf]
      %v458 = vld [vmem:[%s241 + $0x94] sm:$0xf]
      %v459 = vld [vmem:[%s241 + $0x98] sm:$0xf]
      %v460 = vld [vmem:[%s241 + $0x9c] sm:$0xf]
      %v461 = vld [vmem:[%s241 + $0xa0] sm:$0xf]
      %v462 = vld [vmem:[%s241 + $0xa4] sm:$0xf]
      %v463 = vld [vmem:[%s241 + $0xa8] sm:$0xf]
      %v464 = vld [vmem:[%s241 + $0xac] sm:$0xf]
      %v465 = vld [vmem:[%s241 + $0xb0] sm:$0xf]
      %v466 = vld [vmem:[%s241 + $0xb4] sm:$0xf]
      %v467 = vld [vmem:[%s241 + $0xb8] sm:$0xf]
      %v468 = vld [vmem:[%s241 + $0xbc] sm:$0xf]
      %v469 = vld [vmem:[%s241 + $0xc0] sm:$0xf]
      %v470 = vld [vmem:[%s241 + $0xc4] sm:$0xf]
      %v471 = vld [vmem:[%s241 + $0xc8] sm:$0xf]
      %v472 = vld [vmem:[%s241 + $0xcc] sm:$0xf]
      %v473 = vld [vmem:[%s241 + $0xd0] sm:$0xf]
      %v474 = vld [vmem:[%s241 + $0xd4] sm:$0xf]
      %v475 = vld [vmem:[%s241 + $0xd8] sm:$0xf]
      %v476 = vld [vmem:[%s241 + $0xdc] sm:$0xf]
      %v477 = vld [vmem:[%s241 + $0xe0] sm:$0xf]
      %v478 = vld [vmem:[%s241 + $0xe4] sm:$0xf]
      %v479 = vld [vmem:[%s241 + $0xe8] sm:$0xf]
      %v480 = vld [vmem:[%s241 + $0xec] sm:$0xf]
      %v481 = vld [vmem:[%s241 + $0xf0] sm:$0xf]
      %v482 = vld [vmem:[%s241 + $0xf4] sm:$0xf]
      %v483 = vld [vmem:[%s241 + $0xf8] sm:$0xf]
      %v484 = vld [vmem:[%s241 + $0xfc] sm:$0xf]
      %v485 = vld [vmem:[%s241 + $0x100] sm:$0xf]
      %v486 = vld [vmem:[%s241 + $0x104] sm:$0xf]
      %v487 = vld [vmem:[%s241 + $0x108] sm:$0xf]
      %v488 = vld [vmem:[%s241 + $0x10c] sm:$0xf]
      %v489 = vld [vmem:[%s241 + $0x110] sm:$0xf]
      %v490 = vld [vmem:[%s241 + $0x114] sm:$0xf]
      %v491 = vld [vmem:[%s241 + $0x118] sm:$0xf]
      %v492 = vld [vmem:[%s241 + $0x11c] sm:$0xf]
      %v589 = vunpack.c.l.b16 %v325
      %v590 = vunpack.c.h.b16 %v325
      %v591 = vunpack.c.l.b16 %v326
      %v592 = vunpack.c.h.b16 %v326
      %v593 = vunpack.c.l.b16 %v327
      %v594 = vunpack.c.l.b16 %v328
      %v595 = vunpack.c.h.b16 %v328
      %v596 = vunpack.c.l.b16 %v329
      %v597 = vunpack.c.h.b16 %v329
      %v598 = vunpack.c.l.b16 %v330
      %v599 = vunpack.c.l.b16 %v331
      %v600 = vunpack.c.h.b16 %v331
      %v601 = vunpack.c.l.b16 %v332
      %v602 = vunpack.c.h.b16 %v332
      %v603 = vunpack.c.l.b16 %v333
      %v604 = vunpack.c.l.b16 %v334
      %v605 = vunpack.c.h.b16 %v334
      %v606 = vunpack.c.l.b16 %v335
      %v607 = vunpack.c.h.b16 %v335
      %v608 = vunpack.c.l.b16 %v336
      %v609 = vunpack.c.l.b16 %v337
      %v610 = vunpack.c.h.b16 %v337
      %v611 = vunpack.c.l.b16 %v338
      %v612 = vunpack.c.h.b16 %v338
      %v613 = vunpack.c.l.b16 %v339
      %v614 = vunpack.c.l.b16 %v340
      %v615 = vunpack.c.h.b16 %v340
      %v616 = vunpack.c.l.b16 %v341
      %v617 = vunpack.c.h.b16 %v341
      %v618 = vunpack.c.l.b16 %v342
      %v619 = vunpack.c.l.b16 %v343
      %v620 = vunpack.c.h.b16 %v343
      %v621 = vunpack.c.l.b16 %v344
      %v622 = vunpack.c.h.b16 %v344
      %v623 = vunpack.c.l.b16 %v345
      %v624 = vunpack.c.l.b16 %v346
      %v625 = vunpack.c.h.b16 %v346
      %v626 = vunpack.c.l.b16 %v347
      %v627 = vunpack.c.h.b16 %v347
      %v628 = vunpack.c.l.b16 %v348
      %v629 = vunpack.c.l.b16 %v349
      %v630 = vunpack.c.h.b16 %v349
      %v631 = vunpack.c.l.b16 %v350
      %v632 = vunpack.c.h.b16 %v350
      %v633 = vunpack.c.l.b16 %v351
      %v634 = vunpack.c.l.b16 %v352
      %v635 = vunpack.c.h.b16 %v352
      %v636 = vunpack.c.l.b16 %v353
      %v637 = vunpack.c.h.b16 %v353
      %v638 = vunpack.c.l.b16 %v354
      %v639 = vunpack.c.l.b16 %v355
      %v640 = vunpack.c.h.b16 %v355
      %v641 = vunpack.c.l.b16 %v356
      %v642 = vunpack.c.h.b16 %v356
      %v643 = vunpack.c.l.b16 %v357
      %v644 = vunpack.c.l.b16 %v358
      %v645 = vunpack.c.h.b16 %v358
      %v646 = vunpack.c.l.b16 %v359
      %v647 = vunpack.c.h.b16 %v359
      %v648 = vunpack.c.l.b16 %v360
      %v649 = vunpack.c.l.b16 %v361
      %v650 = vunpack.c.h.b16 %v361
      %v651 = vunpack.c.l.b16 %v362
      %v652 = vunpack.c.h.b16 %v362
      %v653 = vunpack.c.l.b16 %v363
      %v654 = vunpack.c.l.b16 %v364
      %v655 = vunpack.c.h.b16 %v364
      %v656 = vunpack.c.l.b16 %v365
      %v657 = vunpack.c.h.b16 %v365
      %v658 = vunpack.c.l.b16 %v366
      %v659 = vunpack.c.l.b16 %v367
      %v660 = vunpack.c.h.b16 %v367
      %v661 = vunpack.c.l.b16 %v368
      %v662 = vunpack.c.h.b16 %v368
      %v663 = vunpack.c.l.b16 %v369
      %v664 = vunpack.c.l.b16 %v370
      %v665 = vunpack.c.h.b16 %v370
      %v666 = vunpack.c.l.b16 %v371
      %v667 = vunpack.c.h.b16 %v371
      %v668 = vunpack.c.l.b16 %v372
      %v669 = vunpack.c.l.b16 %v373
      %v670 = vunpack.c.h.b16 %v373
      %v671 = vunpack.c.l.b16 %v374
      %v672 = vunpack.c.h.b16 %v374
      %v673 = vunpack.c.l.b16 %v375
      %v674 = vunpack.c.l.b16 %v376
      %v675 = vunpack.c.h.b16 %v376
      %v676 = vunpack.c.l.b16 %v377
      %v677 = vunpack.c.h.b16 %v377
      %v678 = vunpack.c.l.b16 %v378
      %v679 = vunpack.c.l.b16 %v379
      %v680 = vunpack.c.h.b16 %v379
      %v681 = vunpack.c.l.b16 %v380
      %v682 = vunpack.c.h.b16 %v380
      %v683 = vunpack.c.l.b16 %v381
      %v684 = vunpack.c.l.b16 %v382
      %v685 = vunpack.c.h.b16 %v382
      %v686 = vunpack.c.l.b16 %v383
      %v687 = vunpack.c.h.b16 %v383
      %v688 = vunpack.c.l.b16 %v384
      %v689 = vunpack.c.l.b16 %v385
      %v690 = vunpack.c.h.b16 %v385
      %v691 = vunpack.c.l.b16 %v386
      %v692 = vunpack.c.h.b16 %v386
      %v693 = vunpack.c.l.b16 %v387
      %v694 = vunpack.c.l.b16 %v388
      %v695 = vunpack.c.h.b16 %v388
      %v696 = vunpack.c.l.b16 %v389
      %v697 = vunpack.c.h.b16 %v389
      %v698 = vunpack.c.l.b16 %v390
      %v699 = vunpack.c.l.b16 %v391
      %v700 = vunpack.c.h.b16 %v391
      %v701 = vunpack.c.l.b16 %v392
      %v702 = vunpack.c.h.b16 %v392
      %v703 = vunpack.c.l.b16 %v393
      %v704 = vunpack.c.l.b16 %v394
      %v705 = vunpack.c.h.b16 %v394
      %v706 = vunpack.c.l.b16 %v395
      %v707 = vunpack.c.h.b16 %v395
      %v708 = vunpack.c.l.b16 %v396
      %v709 = vunpack.c.l.b16 %v397
      %v710 = vunpack.c.h.b16 %v397
      %v711 = vunpack.c.l.b16 %v398
      %v712 = vunpack.c.h.b16 %v398
      %v713 = vunpack.c.l.b16 %v399
      %v714 = vunpack.c.l.b16 %v400
      %v715 = vunpack.c.h.b16 %v400
      %v716 = vunpack.c.l.b16 %v401
      %v717 = vunpack.c.h.b16 %v401
      %v718 = vunpack.c.l.b16 %v402
      %v719 = vunpack.c.l.b16 %v403
      %v720 = vunpack.c.h.b16 %v403
      %v721 = vunpack.c.l.b16 %v404
      %v722 = vunpack.c.h.b16 %v404
      %v723 = vunpack.c.l.b16 %v405
      %v724 = vunpack.c.l.b16 %v406
      %v725 = vunpack.c.h.b16 %v406
      %v726 = vunpack.c.l.b16 %v407
      %v727 = vunpack.c.h.b16 %v407
      %v728 = vunpack.c.l.b16 %v408
      %v729 = vunpack.c.l.b16 %v409
      %v730 = vunpack.c.h.b16 %v409
      %v731 = vunpack.c.l.b16 %v410
      %v732 = vunpack.c.h.b16 %v410
      %v733 = vunpack.c.l.b16 %v411
      %v734 = vunpack.c.l.b16 %v412
      %v735 = vunpack.c.h.b16 %v412
      %v736 = vunpack.c.l.b16 %v413
      %v737 = vunpack.c.h.b16 %v413
      %v738 = vunpack.c.l.b16 %v414
      %v739 = vunpack.c.l.b16 %v415
      %v740 = vunpack.c.h.b16 %v415
      %v741 = vunpack.c.l.b16 %v416
      %v742 = vunpack.c.h.b16 %v416
      %v743 = vunpack.c.l.b16 %v417
      %v744 = vunpack.c.l.b16 %v418
      %v745 = vunpack.c.h.b16 %v418
      %v746 = vunpack.c.l.b16 %v419
      %v747 = vunpack.c.h.b16 %v419
      %v748 = vunpack.c.l.b16 %v420
      %v749 = vpack.c.b16 %v594, %v589
      %v750 = vpack.c.b16 %v595, %v590
      %v751 = vpack.c.b16 %v596, %v591
      %v752 = vpack.c.b16 %v597, %v592
      %v753 = vpack.c.b16 %v598, %v593
      %v754 = vpack.c.b16 %v604, %v599
      %v755 = vpack.c.b16 %v605, %v600
      %v756 = vpack.c.b16 %v606, %v601
      %v757 = vpack.c.b16 %v607, %v602
      %v758 = vpack.c.b16 %v608, %v603
      %v759 = vpack.c.b16 %v614, %v609
      %v760 = vpack.c.b16 %v615, %v610
      %v761 = vpack.c.b16 %v616, %v611
      %v762 = vpack.c.b16 %v617, %v612
      %v763 = vpack.c.b16 %v618, %v613
      %v764 = vpack.c.b16 %v624, %v619
      %v765 = vpack.c.b16 %v625, %v620
      %v766 = vpack.c.b16 %v626, %v621
      %v767 = vpack.c.b16 %v627, %v622
      %v768 = vpack.c.b16 %v628, %v623
      %v769 = vpack.c.b16 %v634, %v629
      %v770 = vpack.c.b16 %v635, %v630
      %v771 = vpack.c.b16 %v636, %v631
      %v772 = vpack.c.b16 %v637, %v632
      %v773 = vpack.c.b16 %v638, %v633
      %v774 = vpack.c.b16 %v644, %v639
      %v775 = vpack.c.b16 %v645, %v640
      %v776 = vpack.c.b16 %v646, %v641
      %v777 = vpack.c.b16 %v647, %v642
      %v778 = vpack.c.b16 %v648, %v643
      %v779 = vpack.c.b16 %v654, %v649
      %v780 = vpack.c.b16 %v655, %v650
      %v781 = vpack.c.b16 %v656, %v651
      %v782 = vpack.c.b16 %v657, %v652
      %v783 = vpack.c.b16 %v658, %v653
      %v784 = vpack.c.b16 %v664, %v659
      %v785 = vpack.c.b16 %v665, %v660
      %v786 = vpack.c.b16 %v666, %v661
      %v787 = vpack.c.b16 %v667, %v662
      %v788 = vpack.c.b16 %v668, %v663
      %v789 = vpack.c.b16 %v674, %v669
      %v790 = vpack.c.b16 %v675, %v670
      %v791 = vpack.c.b16 %v676, %v671
      %v792 = vpack.c.b16 %v677, %v672
      %v793 = vpack.c.b16 %v678, %v673
      %v794 = vpack.c.b16 %v684, %v679
      %v795 = vpack.c.b16 %v685, %v680
      %v796 = vpack.c.b16 %v686, %v681
      %v797 = vpack.c.b16 %v687, %v682
      %v798 = vpack.c.b16 %v688, %v683
      %v799 = vpack.c.b16 %v694, %v689
      %v800 = vpack.c.b16 %v695, %v690
      %v801 = vpack.c.b16 %v696, %v691
      %v802 = vpack.c.b16 %v697, %v692
      %v803 = vpack.c.b16 %v698, %v693
      %v804 = vpack.c.b16 %v704, %v699
      %v805 = vpack.c.b16 %v705, %v700
      %v806 = vpack.c.b16 %v706, %v701
      %v807 = vpack.c.b16 %v707, %v702
      %v808 = vpack.c.b16 %v708, %v703
      %v809 = vpack.c.b16 %v714, %v709
      %v810 = vpack.c.b16 %v715, %v710
      %v811 = vpack.c.b16 %v716, %v711
      %v812 = vpack.c.b16 %v717, %v712
      %v813 = vpack.c.b16 %v718, %v713
      %v814 = vpack.c.b16 %v724, %v719
      %v815 = vpack.c.b16 %v725, %v720
      %v816 = vpack.c.b16 %v726, %v721
      %v817 = vpack.c.b16 %v727, %v722
      %v818 = vpack.c.b16 %v728, %v723
      %v819 = vpack.c.b16 %v734, %v729
      %v820 = vpack.c.b16 %v735, %v730
      %v821 = vpack.c.b16 %v736, %v731
      %v822 = vpack.c.b16 %v737, %v732
      %v823 = vpack.c.b16 %v738, %v733
      %v824 = vpack.c.b16 %v744, %v739
      %v825 = vpack.c.b16 %v745, %v740
      %v826 = vpack.c.b16 %v746, %v741
      %v827 = vpack.c.b16 %v747, %v742
      %v828 = vpack.c.b16 %v748, %v743
      %v965 = vunpack.c.l.b16 %v421
      %v966 = vunpack.c.l.b16 %v422
      %v967 = vunpack.c.l.b16 %v423
      %v968 = vunpack.c.l.b16 %v424
      %v969 = vunpack.c.l.b16 %v425
      %v970 = vunpack.c.l.b16 %v426
      %v971 = vunpack.c.l.b16 %v427
      %v972 = vunpack.c.l.b16 %v428
      %v973 = vunpack.c.l.b16 %v429
      %v974 = vunpack.c.l.b16 %v430
      %v975 = vunpack.c.l.b16 %v431
      %v976 = vunpack.c.l.b16 %v432
      %v977 = vunpack.c.l.b16 %v433
      %v978 = vunpack.c.l.b16 %v434
      %v979 = vunpack.c.l.b16 %v435
      %v980 = vunpack.c.l.b16 %v436
      %v981 = vunpack.c.l.b16 %v437
      %v982 = vunpack.c.l.b16 %v438
      %v983 = vunpack.c.l.b16 %v439
      %v984 = vunpack.c.l.b16 %v440
      %v985 = vunpack.c.l.b16 %v441
      %v986 = vunpack.c.l.b16 %v442
      %v987 = vunpack.c.l.b16 %v443
      %v988 = vunpack.c.l.b16 %v444
      %v989 = vunpack.c.l.b16 %v445
      %v990 = vunpack.c.l.b16 %v446
      %v991 = vunpack.c.l.b16 %v447
      %v992 = vunpack.c.l.b16 %v448
      %v993 = vunpack.c.l.b16 %v449
      %v994 = vunpack.c.l.b16 %v450
      %v995 = vunpack.c.l.b16 %v451
      %v996 = vunpack.c.l.b16 %v452
      %v997 = vunpack.c.l.b16 %v453
      %v998 = vunpack.c.l.b16 %v454
      %v999 = vunpack.c.l.b16 %v455
      %v1000 = vunpack.c.l.b16 %v456
      %v1001 = vunpack.c.l.b16 %v457
      %v1002 = vunpack.c.l.b16 %v458
      %v1003 = vunpack.c.l.b16 %v459
      %v1004 = vunpack.c.l.b16 %v460
      %v1005 = vunpack.c.l.b16 %v461
      %v1006 = vunpack.c.l.b16 %v462
      %v1007 = vunpack.c.l.b16 %v463
      %v1008 = vunpack.c.l.b16 %v464
      %v1009 = vunpack.c.l.b16 %v465
      %v1010 = vunpack.c.l.b16 %v466
      %v1011 = vunpack.c.l.b16 %v467
      %v1012 = vunpack.c.l.b16 %v468
      %v1013 = vunpack.c.l.b16 %v469
      %v1014 = vunpack.c.l.b16 %v470
      %v1015 = vunpack.c.l.b16 %v471
      %v1016 = vunpack.c.l.b16 %v472
      %v1017 = vunpack.c.l.b16 %v473
      %v1018 = vunpack.c.l.b16 %v474
      %v1019 = vunpack.c.l.b16 %v475
      %v1020 = vunpack.c.l.b16 %v476
      %v1021 = vunpack.c.l.b16 %v477
      %v1022 = vunpack.c.l.b16 %v478
      %v1023 = vunpack.c.l.b16 %v479
      %v1024 = vunpack.c.l.b16 %v480
      %v1025 = vunpack.c.l.b16 %v481
      %v1026 = vunpack.c.l.b16 %v482
      %v1027 = vunpack.c.l.b16 %v483
      %v1028 = vunpack.c.l.b16 %v484
      %v1029 = vunpack.c.l.b16 %v485
      %v1030 = vunpack.c.l.b16 %v486
      %v1031 = vunpack.c.l.b16 %v487
      %v1032 = vunpack.c.l.b16 %v488
      %v1033 = vunpack.c.l.b16 %v489
      %v1034 = vunpack.c.l.b16 %v490
      %v1035 = vunpack.c.l.b16 %v491
      %v1036 = vunpack.c.l.b16 %v492
      %v1037 = vpack.c.b16 %v966, %v965
      %v1038 = vpack.c.b16 %v968, %v967
      %v1039 = vpack.c.b16 %v970, %v969
      %v1040 = vpack.c.b16 %v972, %v971
      %v1041 = vpack.c.b16 %v974, %v973
      %v1042 = vpack.c.b16 %v976, %v975
      %v1043 = vpack.c.b16 %v978, %v977
      %v1044 = vpack.c.b16 %v980, %v979
      %v1045 = vpack.c.b16 %v982, %v981
      %v1046 = vpack.c.b16 %v984, %v983
      %v1047 = vpack.c.b16 %v986, %v985
      %v1048 = vpack.c.b16 %v988, %v987
      %v1049 = vpack.c.b16 %v990, %v989
      %v1050 = vpack.c.b16 %v992, %v991
      %v1051 = vpack.c.b16 %v994, %v993
      %v1052 = vpack.c.b16 %v996, %v995
      %v1053 = vpack.c.b16 %v998, %v997
      %v1054 = vpack.c.b16 %v1000, %v999
      %v1055 = vpack.c.b16 %v1002, %v1001
      %v1056 = vpack.c.b16 %v1004, %v1003
      %v1057 = vpack.c.b16 %v1006, %v1005
      %v1058 = vpack.c.b16 %v1008, %v1007
      %v1059 = vpack.c.b16 %v1010, %v1009
      %v1060 = vpack.c.b16 %v1012, %v1011
      %v1061 = vpack.c.b16 %v1014, %v1013
      %v1062 = vpack.c.b16 %v1016, %v1015
      %v1063 = vpack.c.b16 %v1018, %v1017
      %v1064 = vpack.c.b16 %v1020, %v1019
      %v1065 = vpack.c.b16 %v1022, %v1021
      %v1066 = vpack.c.b16 %v1024, %v1023
      %v1067 = vpack.c.b16 %v1026, %v1025
      %v1068 = vpack.c.b16 %v1028, %v1027
      %v1069 = vpack.c.b16 %v1030, %v1029
      %v1070 = vpack.c.b16 %v1032, %v1031
      %v1071 = vpack.c.b16 %v1034, %v1033
      %v1072 = vpack.c.b16 %v1036, %v1035
      %vm1109 = vcmask 523264
      %v1111 = vsel %vm1109, %v753, 0
      %v1114 = vsel %vm1109, %v758, 0
      %v1117 = vsel %vm1109, %v763, 0
      %v1120 = vsel %vm1109, %v768, 0
      %v1123 = vsel %vm1109, %v773, 0
      %v1126 = vsel %vm1109, %v778, 0
      %v1129 = vsel %vm1109, %v783, 0
      %v1132 = vsel %vm1109, %v788, 0
      %v1135 = vsel %vm1109, %v793, 0
      %v1138 = vsel %vm1109, %v798, 0
      %v1141 = vsel %vm1109, %v803, 0
      %v1144 = vsel %vm1109, %v808, 0
      %v1147 = vsel %vm1109, %v813, 0
      %v1150 = vsel %vm1109, %v818, 0
      %v1153 = vsel %vm1109, %v823, 0
      %v1156 = vsel %vm1109, %v828, 0
      %1158 = vmatpush.bf16.msra.mxu0 %v1044
      %1159 = vmatpush.bf16.msra.mxu0 %v1043
      %1160 = vmatpush.bf16.msra.mxu0 %v1042
      %1161 = vmatpush.bf16.msra.mxu0 %v1041
      %1162 = vmatpush.bf16.msra.mxu0 %v1040
      %1163 = vmatpush.bf16.msra.mxu0 %v1039
      %1164 = vmatpush.bf16.msra.mxu0 %v1038
      %1165 = vmatpush.bf16.msra.mxu0 %v1037
      %1166 = vmatmul.bf16.gmra.mxu0 %v749
      %v1167 = vpop.f32.mrf.mxu0
      %v1168 = vadd.f32 0.0, %v1167
      %v1169 = vpop.f32.mrf.mxu0
      %v1170 = vadd.f32 0.0, %v1169
      %1171 = vmatmul.bf16.gmra.mxu0 %v754
      %v1172 = vpop.f32.mrf.mxu0
      %v1173 = vadd.f32 0.0, %v1172
      %v1174 = vpop.f32.mrf.mxu0
      %v1175 = vadd.f32 0.0, %v1174
      %1176 = vmatmul.bf16.gmra.mxu0 %v759
      %v1177 = vpop.f32.mrf.mxu0
      %v1178 = vadd.f32 0.0, %v1177
      %v1179 = vpop.f32.mrf.mxu0
      %v1180 = vadd.f32 0.0, %v1179
      %1181 = vmatmul.bf16.gmra.mxu0 %v764
      %v1182 = vpop.f32.mrf.mxu0
      %v1183 = vadd.f32 0.0, %v1182
      %v1184 = vpop.f32.mrf.mxu0
      %v1185 = vadd.f32 0.0, %v1184
      %1186 = vmatmul.bf16.gmra.mxu0 %v769
      %v1187 = vpop.f32.mrf.mxu0
      %v1188 = vadd.f32 0.0, %v1187
      %v1189 = vpop.f32.mrf.mxu0
      %v1190 = vadd.f32 0.0, %v1189
      %1191 = vmatmul.bf16.gmra.mxu0 %v774
      %v1192 = vpop.f32.mrf.mxu0
      %v1193 = vadd.f32 0.0, %v1192
      %v1194 = vpop.f32.mrf.mxu0
      %v1195 = vadd.f32 0.0, %v1194
      %1196 = vmatmul.bf16.gmra.mxu0 %v779
      %v1197 = vpop.f32.mrf.mxu0
      %v1198 = vadd.f32 0.0, %v1197
      %v1199 = vpop.f32.mrf.mxu0
      %v1200 = vadd.f32 0.0, %v1199
      %1201 = vmatmul.bf16.gmra.mxu0 %v784
      %v1202 = vpop.f32.mrf.mxu0
      %v1203 = vadd.f32 0.0, %v1202
      %v1204 = vpop.f32.mrf.mxu0
      %v1205 = vadd.f32 0.0, %v1204
      %1206 = vmatmul.bf16.gmra.mxu0 %v789
      %v1207 = vpop.f32.mrf.mxu0
      %v1208 = vadd.f32 0.0, %v1207
      %v1209 = vpop.f32.mrf.mxu0
      %v1210 = vadd.f32 0.0, %v1209
      %1211 = vmatmul.bf16.gmra.mxu0 %v794
      %v1212 = vpop.f32.mrf.mxu0
      %v1213 = vadd.f32 0.0, %v1212
      %v1214 = vpop.f32.mrf.mxu0
      %v1215 = vadd.f32 0.0, %v1214
      %1216 = vmatmul.bf16.gmra.mxu0 %v799
      %v1217 = vpop.f32.mrf.mxu0
      %v1218 = vadd.f32 0.0, %v1217
      %v1219 = vpop.f32.mrf.mxu0
      %v1220 = vadd.f32 0.0, %v1219
      %1221 = vmatmul.bf16.gmra.mxu0 %v804
      %v1222 = vpop.f32.mrf.mxu0
      %v1223 = vadd.f32 0.0, %v1222
      %v1224 = vpop.f32.mrf.mxu0
      %v1225 = vadd.f32 0.0, %v1224
      %1226 = vmatmul.bf16.gmra.mxu0 %v809
      %v1227 = vpop.f32.mrf.mxu0
      %v1228 = vadd.f32 0.0, %v1227
      %v1229 = vpop.f32.mrf.mxu0
      %v1230 = vadd.f32 0.0, %v1229
      %1231 = vmatmul.bf16.gmra.mxu0 %v814
      %v1232 = vpop.f32.mrf.mxu0
      %v1233 = vadd.f32 0.0, %v1232
      %v1234 = vpop.f32.mrf.mxu0
      %v1235 = vadd.f32 0.0, %v1234
      %1236 = vmatmul.bf16.gmra.mxu0 %v819
      %v1237 = vpop.f32.mrf.mxu0
      %v1238 = vadd.f32 0.0, %v1237
      %v1239 = vpop.f32.mrf.mxu0
      %v1240 = vadd.f32 0.0, %v1239
      %1241 = vmatmul.bf16.gmra.mxu0 %v824
      %v1242 = vpop.f32.mrf.mxu0
      %v1243 = vadd.f32 0.0, %v1242
      %v1244 = vpop.f32.mrf.mxu0
      %v1245 = vadd.f32 0.0, %v1244
      %1246 = vdwg.mxu0
      %1247 = vmatpush.bf16.msra.mxu0 %v1052
      %1248 = vmatpush.bf16.msra.mxu0 %v1051
      %1249 = vmatpush.bf16.msra.mxu0 %v1050
      %1250 = vmatpush.bf16.msra.mxu0 %v1049
      %1251 = vmatpush.bf16.msra.mxu0 %v1048
      %1252 = vmatpush.bf16.msra.mxu0 %v1047
      %1253 = vmatpush.bf16.msra.mxu0 %v1046
      %1254 = vmatpush.bf16.msra.mxu0 %v1045
      %1255 = vmatmul.bf16.gmra.mxu0 %v750
      %v1256 = vpop.f32.mrf.mxu0
      %v1257 = vadd.f32 %v1168, %v1256
      %v1258 = vpop.f32.mrf.mxu0
      %v1259 = vadd.f32 %v1170, %v1258
      %1260 = vmatmul.bf16.gmra.mxu0 %v755
      %v1261 = vpop.f32.mrf.mxu0
      %v1262 = vadd.f32 %v1173, %v1261
      %v1263 = vpop.f32.mrf.mxu0
      %v1264 = vadd.f32 %v1175, %v1263
      %1265 = vmatmul.bf16.gmra.mxu0 %v760
      %v1266 = vpop.f32.mrf.mxu0
      %v1267 = vadd.f32 %v1178, %v1266
      %v1268 = vpop.f32.mrf.mxu0
      %v1269 = vadd.f32 %v1180, %v1268
      %1270 = vmatmul.bf16.gmra.mxu0 %v765
      %v1271 = vpop.f32.mrf.mxu0
      %v1272 = vadd.f32 %v1183, %v1271
      %v1273 = vpop.f32.mrf.mxu0
      %v1274 = vadd.f32 %v1185, %v1273
      %1275 = vmatmul.bf16.gmra.mxu0 %v770
      %v1276 = vpop.f32.mrf.mxu0
      %v1277 = vadd.f32 %v1188, %v1276
      %v1278 = vpop.f32.mrf.mxu0
      %v1279 = vadd.f32 %v1190, %v1278
      %1280 = vmatmul.bf16.gmra.mxu0 %v775
      %v1281 = vpop.f32.mrf.mxu0
      %v1282 = vadd.f32 %v1193, %v1281
      %v1283 = vpop.f32.mrf.mxu0
      %v1284 = vadd.f32 %v1195, %v1283
      %1285 = vmatmul.bf16.gmra.mxu0 %v780
      %v1286 = vpop.f32.mrf.mxu0
      %v1287 = vadd.f32 %v1198, %v1286
      %v1288 = vpop.f32.mrf.mxu0
      %v1289 = vadd.f32 %v1200, %v1288
      %1290 = vmatmul.bf16.gmra.mxu0 %v785
      %v1291 = vpop.f32.mrf.mxu0
      %v1292 = vadd.f32 %v1203, %v1291
      %v1293 = vpop.f32.mrf.mxu0
      %v1294 = vadd.f32 %v1205, %v1293
      %1295 = vmatmul.bf16.gmra.mxu0 %v790
      %v1296 = vpop.f32.mrf.mxu0
      %v1297 = vadd.f32 %v1208, %v1296
      %v1298 = vpop.f32.mrf.mxu0
      %v1299 = vadd.f32 %v1210, %v1298
      %1300 = vmatmul.bf16.gmra.mxu0 %v795
      %v1301 = vpop.f32.mrf.mxu0
      %v1302 = vadd.f32 %v1213, %v1301
      %v1303 = vpop.f32.mrf.mxu0
      %v1304 = vadd.f32 %v1215, %v1303
      %1305 = vmatmul.bf16.gmra.mxu0 %v800
      %v1306 = vpop.f32.mrf.mxu0
      %v1307 = vadd.f32 %v1218, %v1306
      %v1308 = vpop.f32.mrf.mxu0
      %v1309 = vadd.f32 %v1220, %v1308
      %1310 = vmatmul.bf16.gmra.mxu0 %v805
      %v1311 = vpop.f32.mrf.mxu0
      %v1312 = vadd.f32 %v1223, %v1311
      %v1313 = vpop.f32.mrf.mxu0
      %v1314 = vadd.f32 %v1225, %v1313
      %1315 = vmatmul.bf16.gmra.mxu0 %v810
      %v1316 = vpop.f32.mrf.mxu0
      %v1317 = vadd.f32 %v1228, %v1316
      %v1318 = vpop.f32.mrf.mxu0
      %v1319 = vadd.f32 %v1230, %v1318
      %1320 = vmatmul.bf16.gmra.mxu0 %v815
      %v1321 = vpop.f32.mrf.mxu0
      %v1322 = vadd.f32 %v1233, %v1321
      %v1323 = vpop.f32.mrf.mxu0
      %v1324 = vadd.f32 %v1235, %v1323
      %1325 = vmatmul.bf16.gmra.mxu0 %v820
      %v1326 = vpop.f32.mrf.mxu0
      %v1327 = vadd.f32 %v1238, %v1326
      %v1328 = vpop.f32.mrf.mxu0
      %v1329 = vadd.f32 %v1240, %v1328
      %1330 = vmatmul.bf16.gmra.mxu0 %v825
      %v1331 = vpop.f32.mrf.mxu0
      %v1332 = vadd.f32 %v1243, %v1331
      %v1333 = vpop.f32.mrf.mxu0
      %v1334 = vadd.f32 %v1245, %v1333
      %1335 = vdwg.mxu0
      %1336 = vmatpush.bf16.msra.mxu0 %v1060
      %1337 = vmatpush.bf16.msra.mxu0 %v1059
      %1338 = vmatpush.bf16.msra.mxu0 %v1058
      %1339 = vmatpush.bf16.msra.mxu0 %v1057
      %1340 = vmatpush.bf16.msra.mxu0 %v1056
      %1341 = vmatpush.bf16.msra.mxu0 %v1055
      %1342 = vmatpush.bf16.msra.mxu0 %v1054
      %1343 = vmatpush.bf16.msra.mxu0 %v1053
      %1344 = vmatmul.bf16.gmra.mxu0 %v751
      %v1345 = vpop.f32.mrf.mxu0
      %v1346 = vadd.f32 %v1257, %v1345
      %v1347 = vpop.f32.mrf.mxu0
      %v1348 = vadd.f32 %v1259, %v1347
      %1349 = vmatmul.bf16.gmra.mxu0 %v756
      %v1350 = vpop.f32.mrf.mxu0
      %v1351 = vadd.f32 %v1262, %v1350
      %v1352 = vpop.f32.mrf.mxu0
      %v1353 = vadd.f32 %v1264, %v1352
      %1354 = vmatmul.bf16.gmra.mxu0 %v761
      %v1355 = vpop.f32.mrf.mxu0
      %v1356 = vadd.f32 %v1267, %v1355
      %v1357 = vpop.f32.mrf.mxu0
      %v1358 = vadd.f32 %v1269, %v1357
      %1359 = vmatmul.bf16.gmra.mxu0 %v766
      %v1360 = vpop.f32.mrf.mxu0
      %v1361 = vadd.f32 %v1272, %v1360
      %v1362 = vpop.f32.mrf.mxu0
      %v1363 = vadd.f32 %v1274, %v1362
      %1364 = vmatmul.bf16.gmra.mxu0 %v771
      %v1365 = vpop.f32.mrf.mxu0
      %v1366 = vadd.f32 %v1277, %v1365
      %v1367 = vpop.f32.mrf.mxu0
      %v1368 = vadd.f32 %v1279, %v1367
      %1369 = vmatmul.bf16.gmra.mxu0 %v776
      %v1370 = vpop.f32.mrf.mxu0
      %v1371 = vadd.f32 %v1282, %v1370
      %v1372 = vpop.f32.mrf.mxu0
      %v1373 = vadd.f32 %v1284, %v1372
      %1374 = vmatmul.bf16.gmra.mxu0 %v781
      %v1375 = vpop.f32.mrf.mxu0
      %v1376 = vadd.f32 %v1287, %v1375
      %v1377 = vpop.f32.mrf.mxu0
      %v1378 = vadd.f32 %v1289, %v1377
      %1379 = vmatmul.bf16.gmra.mxu0 %v786
      %v1380 = vpop.f32.mrf.mxu0
      %v1381 = vadd.f32 %v1292, %v1380
      %v1382 = vpop.f32.mrf.mxu0
      %v1383 = vadd.f32 %v1294, %v1382
      %1384 = vmatmul.bf16.gmra.mxu0 %v791
      %v1385 = vpop.f32.mrf.mxu0
      %v1386 = vadd.f32 %v1297, %v1385
      %v1387 = vpop.f32.mrf.mxu0
      %v1388 = vadd.f32 %v1299, %v1387
      %1389 = vmatmul.bf16.gmra.mxu0 %v796
      %v1390 = vpop.f32.mrf.mxu0
      %v1391 = vadd.f32 %v1302, %v1390
      %v1392 = vpop.f32.mrf.mxu0
      %v1393 = vadd.f32 %v1304, %v1392
      %1394 = vmatmul.bf16.gmra.mxu0 %v801
      %v1395 = vpop.f32.mrf.mxu0
      %v1396 = vadd.f32 %v1307, %v1395
      %v1397 = vpop.f32.mrf.mxu0
      %v1398 = vadd.f32 %v1309, %v1397
      %1399 = vmatmul.bf16.gmra.mxu0 %v806
      %v1400 = vpop.f32.mrf.mxu0
      %v1401 = vadd.f32 %v1312, %v1400
      %v1402 = vpop.f32.mrf.mxu0
      %v1403 = vadd.f32 %v1314, %v1402
      %1404 = vmatmul.bf16.gmra.mxu0 %v811
      %v1405 = vpop.f32.mrf.mxu0
      %v1406 = vadd.f32 %v1317, %v1405
      %v1407 = vpop.f32.mrf.mxu0
      %v1408 = vadd.f32 %v1319, %v1407
      %1409 = vmatmul.bf16.gmra.mxu0 %v816
      %v1410 = vpop.f32.mrf.mxu0
      %v1411 = vadd.f32 %v1322, %v1410
      %v1412 = vpop.f32.mrf.mxu0
      %v1413 = vadd.f32 %v1324, %v1412
      %1414 = vmatmul.bf16.gmra.mxu0 %v821
      %v1415 = vpop.f32.mrf.mxu0
      %v1416 = vadd.f32 %v1327, %v1415
      %v1417 = vpop.f32.mrf.mxu0
      %v1418 = vadd.f32 %v1329, %v1417
      %1419 = vmatmul.bf16.gmra.mxu0 %v826
      %v1420 = vpop.f32.mrf.mxu0
      %v1421 = vadd.f32 %v1332, %v1420
      %v1422 = vpop.f32.mrf.mxu0
      %v1423 = vadd.f32 %v1334, %v1422
      %1424 = vdwg.mxu0
      %1425 = vmatpush.bf16.msra.mxu0 %v1068
      %1426 = vmatpush.bf16.msra.mxu0 %v1067
      %1427 = vmatpush.bf16.msra.mxu0 %v1066
      %1428 = vmatpush.bf16.msra.mxu0 %v1065
      %1429 = vmatpush.bf16.msra.mxu0 %v1064
      %1430 = vmatpush.bf16.msra.mxu0 %v1063
      %1431 = vmatpush.bf16.msra.mxu0 %v1062
      %1432 = vmatpush.bf16.msra.mxu0 %v1061
      %1433 = vmatmul.bf16.gmra.mxu0 %v752
      %v1434 = vpop.f32.mrf.mxu0
      %v1435 = vadd.f32 %v1346, %v1434
      %v1436 = vpop.f32.mrf.mxu0
      %v1437 = vadd.f32 %v1348, %v1436
      %1438 = vmatmul.bf16.gmra.mxu0 %v757
      %v1439 = vpop.f32.mrf.mxu0
      %v1440 = vadd.f32 %v1351, %v1439
      %v1441 = vpop.f32.mrf.mxu0
      %v1442 = vadd.f32 %v1353, %v1441
      %1443 = vmatmul.bf16.gmra.mxu0 %v762
      %v1444 = vpop.f32.mrf.mxu0
      %v1445 = vadd.f32 %v1356, %v1444
      %v1446 = vpop.f32.mrf.mxu0
      %v1447 = vadd.f32 %v1358, %v1446
      %1448 = vmatmul.bf16.gmra.mxu0 %v767
      %v1449 = vpop.f32.mrf.mxu0
      %v1450 = vadd.f32 %v1361, %v1449
      %v1451 = vpop.f32.mrf.mxu0
      %v1452 = vadd.f32 %v1363, %v1451
      %1453 = vmatmul.bf16.gmra.mxu0 %v772
      %v1454 = vpop.f32.mrf.mxu0
      %v1455 = vadd.f32 %v1366, %v1454
      %v1456 = vpop.f32.mrf.mxu0
      %v1457 = vadd.f32 %v1368, %v1456
      %1458 = vmatmul.bf16.gmra.mxu0 %v777
      %v1459 = vpop.f32.mrf.mxu0
      %v1460 = vadd.f32 %v1371, %v1459
      %v1461 = vpop.f32.mrf.mxu0
      %v1462 = vadd.f32 %v1373, %v1461
      %1463 = vmatmul.bf16.gmra.mxu0 %v782
      %v1464 = vpop.f32.mrf.mxu0
      %v1465 = vadd.f32 %v1376, %v1464
      %v1466 = vpop.f32.mrf.mxu0
      %v1467 = vadd.f32 %v1378, %v1466
      %1468 = vmatmul.bf16.gmra.mxu0 %v787
      %v1469 = vpop.f32.mrf.mxu0
      %v1470 = vadd.f32 %v1381, %v1469
      %v1471 = vpop.f32.mrf.mxu0
      %v1472 = vadd.f32 %v1383, %v1471
      %1473 = vmatmul.bf16.gmra.mxu0 %v792
      %v1474 = vpop.f32.mrf.mxu0
      %v1475 = vadd.f32 %v1386, %v1474
      %v1476 = vpop.f32.mrf.mxu0
      %v1477 = vadd.f32 %v1388, %v1476
      %1478 = vmatmul.bf16.gmra.mxu0 %v797
      %v1479 = vpop.f32.mrf.mxu0
      %v1480 = vadd.f32 %v1391, %v1479
      %v1481 = vpop.f32.mrf.mxu0
      %v1482 = vadd.f32 %v1393, %v1481
      %1483 = vmatmul.bf16.gmra.mxu0 %v802
      %v1484 = vpop.f32.mrf.mxu0
      %v1485 = vadd.f32 %v1396, %v1484
      %v1486 = vpop.f32.mrf.mxu0
      %v1487 = vadd.f32 %v1398, %v1486
      %1488 = vmatmul.bf16.gmra.mxu0 %v807
      %v1489 = vpop.f32.mrf.mxu0
      %v1490 = vadd.f32 %v1401, %v1489
      %v1491 = vpop.f32.mrf.mxu0
      %v1492 = vadd.f32 %v1403, %v1491
      %1493 = vmatmul.bf16.gmra.mxu0 %v812
      %v1494 = vpop.f32.mrf.mxu0
      %v1495 = vadd.f32 %v1406, %v1494
      %v1496 = vpop.f32.mrf.mxu0
      %v1497 = vadd.f32 %v1408, %v1496
      %1498 = vmatmul.bf16.gmra.mxu0 %v817
      %v1499 = vpop.f32.mrf.mxu0
      %v1500 = vadd.f32 %v1411, %v1499
      %v1501 = vpop.f32.mrf.mxu0
      %v1502 = vadd.f32 %v1413, %v1501
      %1503 = vmatmul.bf16.gmra.mxu0 %v822
      %v1504 = vpop.f32.mrf.mxu0
      %v1505 = vadd.f32 %v1416, %v1504
      %v1506 = vpop.f32.mrf.mxu0
      %v1507 = vadd.f32 %v1418, %v1506
      %1508 = vmatmul.bf16.gmra.mxu0 %v827
      %v1509 = vpop.f32.mrf.mxu0
      %v1510 = vadd.f32 %v1421, %v1509
      %v1511 = vpop.f32.mrf.mxu0
      %v1512 = vadd.f32 %v1423, %v1511
      %1513 = vdwg.mxu0
      %1514 = vmatpush.bf16.msra.mxu0 0
      %1515 = vmatpush.bf16.msra.mxu0 0
      %1516 = vmatpush.bf16.msra.mxu0 0
      %1517 = vmatpush.bf16.msra.mxu0 0
      %1518 = vmatpush.bf16.msra.mxu0 %v1072
      %1519 = vmatpush.bf16.msra.mxu0 %v1071
      %1520 = vmatpush.bf16.msra.mxu0 %v1070
      %1521 = vmatpush.bf16.msra.mxu0 %v1069
      %1522 = vmatmul.bf16.gmra.mxu0 %v1111
      %v1523 = vpop.f32.mrf.mxu0
      %v1524 = vadd.f32 %v1435, %v1523
      %v1525 = vpop.f32.mrf.mxu0
      %v1526 = vadd.f32 %v1437, %v1525
      %1527 = vmatmul.bf16.gmra.mxu0 %v1114
      %v1528 = vpop.f32.mrf.mxu0
      %v1529 = vadd.f32 %v1440, %v1528
      %v1530 = vpop.f32.mrf.mxu0
      %v1531 = vadd.f32 %v1442, %v1530
      %1532 = vmatmul.bf16.gmra.mxu0 %v1117
      %v1533 = vpop.f32.mrf.mxu0
      %v1534 = vadd.f32 %v1445, %v1533
      %v1535 = vpop.f32.mrf.mxu0
      %v1536 = vadd.f32 %v1447, %v1535
      %1537 = vmatmul.bf16.gmra.mxu0 %v1120
      %v1538 = vpop.f32.mrf.mxu0
      %v1539 = vadd.f32 %v1450, %v1538
      %v1540 = vpop.f32.mrf.mxu0
      %v1541 = vadd.f32 %v1452, %v1540
      %1542 = vmatmul.bf16.gmra.mxu0 %v1123
      %v1543 = vpop.f32.mrf.mxu0
      %v1544 = vadd.f32 %v1455, %v1543
      %v1545 = vpop.f32.mrf.mxu0
      %v1546 = vadd.f32 %v1457, %v1545
      %1547 = vmatmul.bf16.gmra.mxu0 %v1126
      %v1548 = vpop.f32.mrf.mxu0
      %v1549 = vadd.f32 %v1460, %v1548
      %v1550 = vpop.f32.mrf.mxu0
      %v1551 = vadd.f32 %v1462, %v1550
      %1552 = vmatmul.bf16.gmra.mxu0 %v1129
      %v1553 = vpop.f32.mrf.mxu0
      %v1554 = vadd.f32 %v1465, %v1553
      %v1555 = vpop.f32.mrf.mxu0
      %v1556 = vadd.f32 %v1467, %v1555
      %1557 = vmatmul.bf16.gmra.mxu0 %v1132
      %v1558 = vpop.f32.mrf.mxu0
      %v1559 = vadd.f32 %v1470, %v1558
      %v1560 = vpop.f32.mrf.mxu0
      %v1561 = vadd.f32 %v1472, %v1560
      %1562 = vmatmul.bf16.gmra.mxu0 %v1135
      %v1563 = vpop.f32.mrf.mxu0
      %v1564 = vadd.f32 %v1475, %v1563
      %v1565 = vpop.f32.mrf.mxu0
      %v1566 = vadd.f32 %v1477, %v1565
      %1567 = vmatmul.bf16.gmra.mxu0 %v1138
      %v1568 = vpop.f32.mrf.mxu0
      %v1569 = vadd.f32 %v1480, %v1568
      %v1570 = vpop.f32.mrf.mxu0
      %v1571 = vadd.f32 %v1482, %v1570
      %1572 = vmatmul.bf16.gmra.mxu0 %v1141
      %v1573 = vpop.f32.mrf.mxu0
      %v1574 = vadd.f32 %v1485, %v1573
      %v1575 = vpop.f32.mrf.mxu0
      %v1576 = vadd.f32 %v1487, %v1575
      %1577 = vmatmul.bf16.gmra.mxu0 %v1144
      %v1578 = vpop.f32.mrf.mxu0
      %v1579 = vadd.f32 %v1490, %v1578
      %v1580 = vpop.f32.mrf.mxu0
      %v1581 = vadd.f32 %v1492, %v1580
      %1582 = vmatmul.bf16.gmra.mxu0 %v1147
      %v1583 = vpop.f32.mrf.mxu0
      %v1584 = vadd.f32 %v1495, %v1583
      %v1585 = vpop.f32.mrf.mxu0
      %v1586 = vadd.f32 %v1497, %v1585
      %1587 = vmatmul.bf16.gmra.mxu0 %v1150
      %v1588 = vpop.f32.mrf.mxu0
      %v1589 = vadd.f32 %v1500, %v1588
      %v1590 = vpop.f32.mrf.mxu0
      %v1591 = vadd.f32 %v1502, %v1590
      %1592 = vmatmul.bf16.gmra.mxu0 %v1153
      %v1593 = vpop.f32.mrf.mxu0
      %v1594 = vadd.f32 %v1505, %v1593
      %v1595 = vpop.f32.mrf.mxu0
      %v1596 = vadd.f32 %v1507, %v1595
      %1597 = vmatmul.bf16.gmra.mxu0 %v1156
      %v1598 = vpop.f32.mrf.mxu0
      %v1599 = vadd.f32 %v1510, %v1598
      %v1600 = vpop.f32.mrf.mxu0
      %v1601 = vadd.f32 %v1512, %v1600
      %1602 = vdwg.mxu0
      %v1603 = vadd.f32 %v293, %v1524
      %v1604 = vadd.f32 %v294, %v1526
      %v1605 = vadd.f32 %v295, %v1529
      %v1606 = vadd.f32 %v296, %v1531
      %v1607 = vadd.f32 %v297, %v1534
      %v1608 = vadd.f32 %v298, %v1536
      %v1609 = vadd.f32 %v299, %v1539
      %v1610 = vadd.f32 %v300, %v1541
      %v1611 = vadd.f32 %v301, %v1544
      %v1612 = vadd.f32 %v302, %v1546
      %v1613 = vadd.f32 %v303, %v1549
      %v1614 = vadd.f32 %v304, %v1551
      %v1615 = vadd.f32 %v305, %v1554
      %v1616 = vadd.f32 %v306, %v1556
      %v1617 = vadd.f32 %v307, %v1559
      %v1618 = vadd.f32 %v308, %v1561
      %v1619 = vadd.f32 %v309, %v1564
      %v1620 = vadd.f32 %v310, %v1566
      %v1621 = vadd.f32 %v311, %v1569
      %v1622 = vadd.f32 %v312, %v1571
      %v1623 = vadd.f32 %v313, %v1574
      %v1624 = vadd.f32 %v314, %v1576
      %v1625 = vadd.f32 %v315, %v1579
      %v1626 = vadd.f32 %v316, %v1581
      %v1627 = vadd.f32 %v317, %v1584
      %v1628 = vadd.f32 %v318, %v1586
      %v1629 = vadd.f32 %v319, %v1589
      %v1630 = vadd.f32 %v320, %v1591
      %v1631 = vadd.f32 %v321, %v1594
      %v1632 = vadd.f32 %v322, %v1596
      %v1633 = vadd.f32 %v323, %v1599
      %v1634 = vadd.f32 %v324, %v1601
      %1635 = vst [vmem:[#allocation2] sm:$0xff] %v1603
      %1636 = vst [vmem:[#allocation2 + $0x8] sm:$0xff] %v1604
      %1637 = vst [vmem:[#allocation2 + $0x10] sm:$0xff] %v1605
      %1638 = vst [vmem:[#allocation2 + $0x18] sm:$0xff] %v1606
      %1639 = vst [vmem:[#allocation2 + $0x20] sm:$0xff] %v1607
      %1640 = vst [vmem:[#allocation2 + $0x28] sm:$0xff] %v1608
      %1641 = vst [vmem:[#allocation2 + $0x30] sm:$0xff] %v1609
      %1642 = vst [vmem:[#allocation2 + $0x38] sm:$0xff] %v1610
      %1643 = vst [vmem:[#allocation2 + $0x40] sm:$0xff] %v1611
      %1644 = vst [vmem:[#allocation2 + $0x48] sm:$0xff] %v1612
      %1645 = vst [vmem:[#allocation2 + $0x50] sm:$0xff] %v1613
      %1646 = vst [vmem:[#allocation2 + $0x58] sm:$0xff] %v1614
      %1647 = vst [vmem:[#allocation2 + $0x60] sm:$0xff] %v1615
      %1648 = vst [vmem:[#allocation2 + $0x68] sm:$0xff] %v1616
      %1649 = vst [vmem:[#allocation2 + $0x70] sm:$0xff] %v1617
      %1650 = vst [vmem:[#allocation2 + $0x78] sm:$0xff] %v1618
      %1651 = vst [vmem:[#allocation2 + $0x80] sm:$0xff] %v1619
      %1652 = vst [vmem:[#allocation2 + $0x88] sm:$0xff] %v1620
      %1653 = vst [vmem:[#allocation2 + $0x90] sm:$0xff] %v1621
      %1654 = vst [vmem:[#allocation2 + $0x98] sm:$0xff] %v1622
      %1655 = vst [vmem:[#allocation2 + $0xa0] sm:$0xff] %v1623
      %1656 = vst [vmem:[#allocation2 + $0xa8] sm:$0xff] %v1624
      %1657 = vst [vmem:[#allocation2 + $0xb0] sm:$0xff] %v1625
      %1658 = vst [vmem:[#allocation2 + $0xb8] sm:$0xff] %v1626
      %1659 = vst [vmem:[#allocation2 + $0xc0] sm:$0xff] %v1627
      %1660 = vst [vmem:[#allocation2 + $0xc8] sm:$0xff] %v1628
      %1661 = vst [vmem:[#allocation2 + $0xd0] sm:$0xff] %v1629
      %1662 = vst [vmem:[#allocation2 + $0xd8] sm:$0xff] %v1630
      %1663 = vst [vmem:[#allocation2 + $0xe0] sm:$0xff] %v1631
      %1664 = vst [vmem:[#allocation2 + $0xe8] sm:$0xff] %v1632
      %1665 = vst [vmem:[#allocation2 + $0xf0] sm:$0xff] %v1633
      %1666 = vst [vmem:[#allocation2 + $0xf8] sm:$0xff] %v1634
      // Predicated region
      $region37: #{basic_block_forward.6} parent=27 // pred_check
        %p1667 = pneg %p250
      $region38: #{basic_block_forward.6} parent=27 // pred_check_branch
        %1669 = sbr.rel (%p1667) target = $region40
      $region39: #{basic_block_forward.6} parent=27 // pred_region
        %v1670 = vld [vmem:[#allocation2] sm:$0xff]
        %v1671 = vld [vmem:[#allocation2 + $0x8] sm:$0xff]
        %v1672 = vld [vmem:[#allocation2 + $0x10] sm:$0xff]
        %v1673 = vld [vmem:[#allocation2 + $0x18] sm:$0xff]
        %v1674 = vld [vmem:[#allocation2 + $0x20] sm:$0xff]
        %v1675 = vld [vmem:[#allocation2 + $0x28] sm:$0xff]
        %v1676 = vld [vmem:[#allocation2 + $0x30] sm:$0xff]
        %v1677 = vld [vmem:[#allocation2 + $0x38] sm:$0xff]
        %v1678 = vld [vmem:[#allocation2 + $0x40] sm:$0xff]
        %v1679 = vld [vmem:[#allocation2 + $0x48] sm:$0xff]
        %v1680 = vld [vmem:[#allocation2 + $0x50] sm:$0xff]
        %v1681 = vld [vmem:[#allocation2 + $0x58] sm:$0xff]
        %v1682 = vld [vmem:[#allocation2 + $0x60] sm:$0xff]
        %v1683 = vld [vmem:[#allocation2 + $0x68] sm:$0xff]
        %v1684 = vld [vmem:[#allocation2 + $0x70] sm:$0xff]
        %v1685 = vld [vmem:[#allocation2 + $0x78] sm:$0xff]
        %v1686 = vld [vmem:[#allocation2 + $0x80] sm:$0xff]
        %v1687 = vld [vmem:[#allocation2 + $0x88] sm:$0xff]
        %v1688 = vld [vmem:[#allocation2 + $0x90] sm:$0xff]
        %v1689 = vld [vmem:[#allocation2 + $0x98] sm:$0xff]
        %v1690 = vld [vmem:[#allocation2 + $0xa0] sm:$0xff]
        %v1691 = vld [vmem:[#allocation2 + $0xa8] sm:$0xff]
        %v1692 = vld [vmem:[#allocation2 + $0xb0] sm:$0xff]
        %v1693 = vld [vmem:[#allocation2 + $0xb8] sm:$0xff]
        %v1694 = vld [vmem:[#allocation2 + $0xc0] sm:$0xff]
        %v1695 = vld [vmem:[#allocation2 + $0xc8] sm:$0xff]
        %v1696 = vld [vmem:[#allocation2 + $0xd0] sm:$0xff]
        %v1697 = vld [vmem:[#allocation2 + $0xd8] sm:$0xff]
        %v1698 = vld [vmem:[#allocation2 + $0xe0] sm:$0xff]
        %v1699 = vld [vmem:[#allocation2 + $0xe8] sm:$0xff]
        %v1700 = vld [vmem:[#allocation2 + $0xf0] sm:$0xff]
        %v1701 = vld [vmem:[#allocation2 + $0xf8] sm:$0xff]
        %1702 = vst [vmem:[%s247] sm:$0xff] %v1670
        %1703 = vst [vmem:[%s247 + $0x8] sm:$0xff] %v1671
        %1704 = vst [vmem:[%s247 + $0x10] sm:$0xff] %v1672
        %1705 = vst [vmem:[%s247 + $0x18] sm:$0xff] %v1673
        %1706 = vst [vmem:[%s247 + $0x20] sm:$0xff] %v1674
        %1707 = vst [vmem:[%s247 + $0x28] sm:$0xff] %v1675
        %1708 = vst [vmem:[%s247 + $0x30] sm:$0xff] %v1676
        %1709 = vst [vmem:[%s247 + $0x38] sm:$0xff] %v1677
        %1710 = vst [vmem:[%s247 + $0x40] sm:$0xff] %v1678
        %1711 = vst [vmem:[%s247 + $0x48] sm:$0xff] %v1679
        %1712 = vst [vmem:[%s247 + $0x50] sm:$0xff] %v1680
        %1713 = vst [vmem:[%s247 + $0x58] sm:$0xff] %v1681
        %1714 = vst [vmem:[%s247 + $0x60] sm:$0xff] %v1682
        %1715 = vst [vmem:[%s247 + $0x68] sm:$0xff] %v1683
        %1716 = vst [vmem:[%s247 + $0x70] sm:$0xff] %v1684
        %1717 = vst [vmem:[%s247 + $0x78] sm:$0xff] %v1685
        %1718 = vst [vmem:[%s247 + $0x80] sm:$0xff] %v1686
        %1719 = vst [vmem:[%s247 + $0x88] sm:$0xff] %v1687
        %1720 = vst [vmem:[%s247 + $0x90] sm:$0xff] %v1688
        %1721 = vst [vmem:[%s247 + $0x98] sm:$0xff] %v1689
        %1722 = vst [vmem:[%s247 + $0xa0] sm:$0xff] %v1690
        %1723 = vst [vmem:[%s247 + $0xa8] sm:$0xff] %v1691
        %1724 = vst [vmem:[%s247 + $0xb0] sm:$0xff] %v1692
        %1725 = vst [vmem:[%s247 + $0xb8] sm:$0xff] %v1693
        %1726 = vst [vmem:[%s247 + $0xc0] sm:$0xff] %v1694
        %1727 = vst [vmem:[%s247 + $0xc8] sm:$0xff] %v1695
        %1728 = vst [vmem:[%s247 + $0xd0] sm:$0xff] %v1696
        %1729 = vst [vmem:[%s247 + $0xd8] sm:$0xff] %v1697
        %1730 = vst [vmem:[%s247 + $0xe0] sm:$0xff] %v1698
        %1731 = vst [vmem:[%s247 + $0xe8] sm:$0xff] %v1699
        %1732 = vst [vmem:[%s247 + $0xf0] sm:$0xff] %v1700
        %1733 = vst [vmem:[%s247 + $0xf8] sm:$0xff] %v1701
        %v1734 = vld [vmem:[%s3] sm:$0x1]
        %v1735 = vadd.f32 %v1670, %v1671
        %v1736 = vadd.f32 %v1735, %v1672
        %v1737 = vadd.f32 %v1736, %v1673
        %v1738 = vadd.f32 %v1737, %v1674
        %v1739 = vadd.f32 %v1738, %v1675
        %v1740 = vadd.f32 %v1739, %v1676
        %v1741 = vadd.f32 %v1740, %v1677
        %v1742 = vadd.f32 %v1741, %v1678
        %v1743 = vadd.f32 %v1742, %v1679
        %v1744 = vadd.f32 %v1743, %v1680
        %v1745 = vadd.f32 %v1744, %v1681
        %v1746 = vadd.f32 %v1745, %v1682
        %v1747 = vadd.f32 %v1746, %v1683
        %v1748 = vadd.f32 %v1747, %v1684
        %v1749 = vadd.f32 %v1748, %v1685
        %v1750 = vadd.f32 %v1749, %v1686
        %v1751 = vadd.f32 %v1750, %v1687
        %v1752 = vadd.f32 %v1751, %v1688
        %v1753 = vadd.f32 %v1752, %v1689
        %v1754 = vadd.f32 %v1753, %v1690
        %v1755 = vadd.f32 %v1754, %v1691
        %v1756 = vadd.f32 %v1755, %v1692
        %v1757 = vadd.f32 %v1756, %v1693
        %v1758 = vadd.f32 %v1757, %v1694
        %v1759 = vadd.f32 %v1758, %v1695
        %v1760 = vadd.f32 %v1759, %v1696
        %v1761 = vadd.f32 %v1760, %v1697
        %v1762 = vadd.f32 %v1761, %v1698
        %v1763 = vadd.f32 %v1762, %v1699
        %v1764 = vadd.f32 %v1763, %v1700
        %v1765 = vadd.f32 %v1764, %v1701
        %v1766 = vrot.slane %v1765, 4
        %v1767 = vadd.f32 %v1765, %v1766
        %v1768 = vrot.slane %v1767, 2
        %v1769 = vadd.f32 %v1767, %v1768
        %v1770 = vrot.slane %v1769, 1
        %v1771 = vadd.f32 %v1769, %v1770
        %v1772 = vadd.f32 %v1734, %v1771
        %1773 = vst [vmem:[%s3] sm:$0x1] %v1772
        %v1774 = vld [vmem:[%s4] sm:$0x1]
        %v1775 = vmul.f32 %v1670, %v1670
        %v1776 = vmul.f32 %v1671, %v1671
        %v1777 = vmul.f32 %v1672, %v1672
        %v1778 = vmul.f32 %v1673, %v1673
        %v1779 = vmul.f32 %v1674, %v1674
        %v1780 = vmul.f32 %v1675, %v1675
        %v1781 = vmul.f32 %v1676, %v1676
        %v1782 = vmul.f32 %v1677, %v1677
        %v1783 = vmul.f32 %v1678, %v1678
        %v1784 = vmul.f32 %v1679, %v1679
        %v1785 = vmul.f32 %v1680, %v1680
        %v1786 = vmul.f32 %v1681, %v1681
        %v1787 = vmul.f32 %v1682, %v1682
        %v1788 = vmul.f32 %v1683, %v1683
        %v1789 = vmul.f32 %v1684, %v1684
        %v1790 = vmul.f32 %v1685, %v1685
        %v1791 = vmul.f32 %v1686, %v1686
        %v1792 = vmul.f32 %v1687, %v1687
        %v1793 = vmul.f32 %v1688, %v1688
        %v1794 = vmul.f32 %v1689, %v1689
        %v1795 = vmul.f32 %v1690, %v1690
        %v1796 = vmul.f32 %v1691, %v1691
        %v1797 = vmul.f32 %v1692, %v1692
        %v1798 = vmul.f32 %v1693, %v1693
        %v1799 = vmul.f32 %v1694, %v1694
        %v1800 = vmul.f32 %v1695, %v1695
        %v1801 = vmul.f32 %v1696, %v1696
        %v1802 = vmul.f32 %v1697, %v1697
        %v1803 = vmul.f32 %v1698, %v1698
        %v1804 = vmul.f32 %v1699, %v1699
        %v1805 = vmul.f32 %v1700, %v1700
        %v1806 = vmul.f32 %v1701, %v1701
        %v1807 = vadd.f32 %v1775, %v1776
        %v1808 = vadd.f32 %v1807, %v1777
        %v1809 = vadd.f32 %v1808, %v1778
        %v1810 = vadd.f32 %v1809, %v1779
        %v1811 = vadd.f32 %v1810, %v1780
        %v1812 = vadd.f32 %v1811, %v1781
        %v1813 = vadd.f32 %v1812, %v1782
        %v1814 = vadd.f32 %v1813, %v1783
        %v1815 = vadd.f32 %v1814, %v1784
        %v1816 = vadd.f32 %v1815, %v1785
        %v1817 = vadd.f32 %v1816, %v1786
        %v1818 = vadd.f32 %v1817, %v1787
        %v1819 = vadd.f32 %v1818, %v1788
        %v1820 = vadd.f32 %v1819, %v1789
        %v1821 = vadd.f32 %v1820, %v1790
        %v1822 = vadd.f32 %v1821, %v1791
        %v1823 = vadd.f32 %v1822, %v1792
        %v1824 = vadd.f32 %v1823, %v1793
        %v1825 = vadd.f32 %v1824, %v1794
        %v1826 = vadd.f32 %v1825, %v1795
        %v1827 = vadd.f32 %v1826, %v1796
        %v1828 = vadd.f32 %v1827, %v1797
        %v1829 = vadd.f32 %v1828, %v1798
        %v1830 = vadd.f32 %v1829, %v1799
        %v1831 = vadd.f32 %v1830, %v1800
        %v1832 = vadd.f32 %v1831, %v1801
        %v1833 = vadd.f32 %v1832, %v1802
        %v1834 = vadd.f32 %v1833, %v1803
        %v1835 = vadd.f32 %v1834, %v1804
        %v1836 = vadd.f32 %v1835, %v1805
        %v1837 = vadd.f32 %v1836, %v1806
        %v1838 = vrot.slane %v1837, 4
        %v1839 = vadd.f32 %v1837, %v1838
        %v1840 = vrot.slane %v1839, 2
        %v1841 = vadd.f32 %v1839, %v1840
        %v1842 = vrot.slane %v1841, 1
        %v1843 = vadd.f32 %v1841, %v1842
        %v1844 = vadd.f32 %v1774, %v1843
        %1845 = vst [vmem:[%s4] sm:$0x1] %v1844
      $region40: #{basic_block_forward.6} parent=27 // pred_fallthru
        _
      %s1846 = smul.u32 32, %s20
      %p1847 = scmp.lt.s32.totalorder %s1846, 63
      %s1848 = scalar_select %p1847, %s1846, 63
      %s1849 = smul.addr %s1848, 8
      %s1850 = scalar_lea.vmem %s2, %s1849
      // Predicated region
      $region41: #{basic_block_forward.6} parent=27 // pred_check
        %p1851 = pneg %p100
      $region42: #{basic_block_forward.6} parent=27 // pred_check_branch
        %1853 = sbr.rel (%p1851) target = $region44
      $region43: #{basic_block_forward.6} parent=27 // pred_region
        %s1854 = smul.u32 32, %s20
      $region44: #{basic_block_forward.6} parent=27 // pred_fallthru
        _
      // Predicated region
      $region45: #{basic_block_forward.6} parent=27 // pred_check
        %p1855 = pneg %p121
      $region46: #{basic_block_forward.6} parent=27 // pred_check_branch
        %1857 = sbr.rel (%p1855) target = $region48
      $region47: #{basic_block_forward.6} parent=27 // pred_region
        _
      $region48: #{basic_block_forward.6} parent=27 // pred_fallthru
        _
      // Predicated region
      $region49: #{basic_block_forward.6} parent=27 // pred_check
        %p1858 = pneg %p142
      $region50: #{basic_block_forward.6} parent=27 // pred_check_branch
        %1860 = sbr.rel (%p1858) target = $region52
      $region51: #{basic_block_forward.6} parent=27 // pred_region
        _
      $region52: #{basic_block_forward.6} parent=27 // pred_fallthru
        _
      // Predicated region
      $region53: #{basic_block_forward.6} parent=27 // pred_check
        %p1861 = pneg %p121
      $region54: #{basic_block_forward.6} parent=27 // pred_check_branch
        %1863 = sbr.rel (%p1861) target = $region56
      $region55: #{basic_block_forward.6} parent=27 // pred_region
        _
      $region56: #{basic_block_forward.6} parent=27 // pred_fallthru
        _
      // Predicated region
      $region57: #{basic_block_forward.6} parent=27 // pred_check
        %p1864 = pneg %p142
      $region58: #{basic_block_forward.6} parent=27 // pred_check_branch
        %1866 = sbr.rel (%p1864) target = $region60
      $region59: #{basic_block_forward.6} parent=27 // pred_region
        _
      $region60: #{basic_block_forward.6} parent=27 // pred_fallthru
        _
    $region28: #{basic_block_forward.6} parent=5 // pred_fallthru
      _
    %p1867 = scmp.le.s32.totalorder 2, %s11
    // Predicated region
    $region61: #{basic_block_forward.6} parent=5 // pred_check
      %p1868 = pneg %p1867
    $region62: #{basic_block_forward.6} parent=5 // pred_check_branch
      %1870 = sbr.rel (%p1868) target = $region64
    $region63: #{basic_block_forward.6} parent=5 // pred_region
      %s1871 = ssub.s32 %s11, 2
      // Predicated region
      $region65: #{basic_block_forward.6} parent=63 // pred_check
        %p1872 = pneg %p106
      $region66: #{basic_block_forward.6} parent=63 // pred_check_branch
        %1874 = sbr.rel (%p1872) target = $region68
      $region67: #{basic_block_forward.6} parent=63 // pred_region
        %s1875 = smul.u32 32, %s22
        %p1876 = scmp.lt.s32.totalorder %s1875, 63
        %s1877 = scalar_select %p1876, %s1875, 63
        %s1878 = smul.addr %s1877, 8
        %s1879 = scalar_lea.vmem %s2, %s1878
      $region68: #{basic_block_forward.6} parent=63 // pred_fallthru
        _
    $region64: #{basic_block_forward.6} parent=5 // pred_fallthru
      _
  $region6: #{basic_block_forward.6} parent=0 // loop_footer
    %s15 = sadd.s32 1, %s11
  $region7: #{basic_block_forward.6} parent=0 // loop_footer_branch
    %10 = sbr.rel target = $region3
  $region8: #{basic_block_forward.6} parent=0 // loop_exit
    _

// kernel: basic_block_forward.9
$region0: #{basic_block_forward.9}
  #allocation0 [shape = 'u32[]', space=smem, size = 0x4, offset = 0x4, fixed_abs, tag = 'smem constant byte address 0x4 - core index']
  #allocation1 [shape = 'u32[72,128]{1,0:T(1,128)}', space=vmem, size = 0x9000, scoped, tag = 'internal scratch']
  %s0 = inlined_call_operand.vmem [shape: f32[512,128], index: 0, kind: input, shape index: {}]
  %s1 = inlined_call_operand.vmem [shape: f32[1,128], index: 1, kind: input, shape index: {}]
  %s2 = inlined_call_operand.vmem [shape: f32[1,128], index: 2, kind: input, shape index: {}]
  %s3 = inlined_call_operand.vmem [shape: f32[1,128], index: 3, kind: input, shape index: {}]
  %s4 = inlined_call_operand.vmem [shape: f32[1,128], index: 4, kind: input, shape index: {}]
  %s5 = inlined_call_operand.vmem [shape: f32[512,128], index: 5, kind: output, shape index: {}]
  %s6 = sld [smem:[#allocation0]]
  $region53: #{basic_block_forward.9} parent=0
    _
  %s8 = ssub.s32 1, %s6
  %s9 = scalar_select 0, %s8, %s6
  loop: start=0, step=1, limit=4
  $region2: #{basic_block_forward.9} parent=0 // loop_pre_header
    _
  $region3: #{basic_block_forward.9} parent=0 // loop_header
    %s11 = sphi 0, %s15
    %p12 = scmp.ge.s32.totalorder %s11, 4
    %s21 = sphi 0, %s23
    %s24 = sphi 0, %s21
    %s25 = sphi 0, %s24
    %s41 = sphi 0, %s25
    %s45 = sphi 0, %s45
    %s47 = sphi 0, %s45
    %s48 = sphi 0, %s47
    %s62 = sphi 0, %s48
    %s66 = sphi 0, %s66
    %s68 = sphi 0, %s66
    %s69 = sphi 0, %s68
    %s83 = sphi 0, %s69
    %s87 = sphi 0, %s87
    %s89 = sphi 0, %s87
    %s90 = sphi 0, %s89
    %s104 = sphi 0, %s90
    %s108 = sphi 0, %s108
    %s110 = sphi 0, %s108
    %s111 = sphi 0, %s110
    %s125 = sphi 0, %s111
    %s131 = sphi 0, %s133
    %s134 = sphi 0, %s131
    %s135 = sphi 0, %s134
    %s151 = sphi 0, %s135
  $region4: #{basic_block_forward.9} parent=0 // loop_header_branch
    %14 = sbr.rel (%p12) target = $region8
  $region5: #{basic_block_forward.9} parent=0 // loop_body
    %s16 = ssub.s32 %s11, 1
    %s17 = ssub.s32 %s11, 2
    %s18 = sadd.s32 %s11, 1
    %s19 = ssub.s32 %s11, %s18
    %p20 = scmp.eq.s32.totalorder %s19, 0
    %s22 = sadd.s32 %s21, 1
    %s23 = scalar_select %p20, %s21, %s22
    %p26 = pneg %p20
    %p27 = scmp.eq.s32.totalorder %s11, 1
    %p28 = por %p26, %p27
    %p29 = scmp.ne.s32.totalorder %s21, %s24
    %p30 = scmp.eq.s32.totalorder %s11, 0
    %p31 = por %p29, %p30
    %p32 = scmp.ne.s32.totalorder %s21, %s24
    %p33 = scmp.eq.s32.totalorder %s16, 1
    %p34 = por %p32, %p33
    %p35 = scmp.ne.s32.totalorder %s24, %s25
    %p36 = scmp.eq.s32.totalorder %s16, 0
    %p37 = por %p35, %p36
    %p38 = scmp.ne.s32.totalorder %s24, %s25
    %p39 = scmp.eq.s32.totalorder %s17, 1
    %p40 = por %p38, %p39
    %p42 = scmp.ne.s32.totalorder %s25, %s41
    %p43 = scmp.eq.s32.totalorder %s17, 0
    %p44 = por %p42, %p43
    %s46 = sadd.s32 %s45, 1
    %p49 = scmp.eq.s32.totalorder %s11, 1
    %p50 = scmp.ne.s32.totalorder %s45, %s47
    %p51 = scmp.eq.s32.totalorder %s11, 0
    %p52 = por %p50, %p51
    %p53 = scmp.ne.s32.totalorder %s45, %s47
    %p54 = scmp.eq.s32.totalorder %s16, 1
    %p55 = por %p53, %p54
    %p56 = scmp.ne.s32.totalorder %s47, %s48
    %p57 = scmp.eq.s32.totalorder %s16, 0
    %p58 = por %p56, %p57
    %p59 = scmp.ne.s32.totalorder %s47, %s48
    %p60 = scmp.eq.s32.totalorder %s17, 1
    %p61 = por %p59, %p60
    %p63 = scmp.ne.s32.totalorder %s48, %s62
    %p64 = scmp.eq.s32.totalorder %s17, 0
    %p65 = por %p63, %p64
    %s67 = sadd.s32 %s66, 1
    %p70 = scmp.eq.s32.totalorder %s11, 1
    %p71 = scmp.ne.s32.totalorder %s66, %s68
    %p72 = scmp.eq.s32.totalorder %s11, 0
    %p73 = por %p71, %p72
    %p74 = scmp.ne.s32.totalorder %s66, %s68
    %p75 = scmp.eq.s32.totalorder %s16, 1
    %p76 = por %p74, %p75
    %p77 = scmp.ne.s32.totalorder %s68, %s69
    %p78 = scmp.eq.s32.totalorder %s16, 0
    %p79 = por %p77, %p78
    %p80 = scmp.ne.s32.totalorder %s68, %s69
    %p81 = scmp.eq.s32.totalorder %s17, 1
    %p82 = por %p80, %p81
    %p84 = scmp.ne.s32.totalorder %s69, %s83
    %p85 = scmp.eq.s32.totalorder %s17, 0
    %p86 = por %p84, %p85
    %s88 = sadd.s32 %s87, 1
    %p91 = scmp.eq.s32.totalorder %s11, 1
    %p92 = scmp.ne.s32.totalorder %s87, %s89
    %p93 = scmp.eq.s32.totalorder %s11, 0
    %p94 = por %p92, %p93
    %p95 = scmp.ne.s32.totalorder %s87, %s89
    %p96 = scmp.eq.s32.totalorder %s16, 1
    %p97 = por %p95, %p96
    %p98 = scmp.ne.s32.totalorder %s89, %s90
    %p99 = scmp.eq.s32.totalorder %s16, 0
    %p100 = por %p98, %p99
    %p101 = scmp.ne.s32.totalorder %s89, %s90
    %p102 = scmp.eq.s32.totalorder %s17, 1
    %p103 = por %p101, %p102
    %p105 = scmp.ne.s32.totalorder %s90, %s104
    %p106 = scmp.eq.s32.totalorder %s17, 0
    %p107 = por %p105, %p106
    %s109 = sadd.s32 %s108, 1
    %p112 = scmp.eq.s32.totalorder %s11, 1
    %p113 = scmp.ne.s32.totalorder %s108, %s110
    %p114 = scmp.eq.s32.totalorder %s11, 0
    %p115 = por %p113, %p114
    %p116 = scmp.ne.s32.totalorder %s108, %s110
    %p117 = scmp.eq.s32.totalorder %s16, 1
    %p118 = por %p116, %p117
    %p119 = scmp.ne.s32.totalorder %s110, %s111
    %p120 = scmp.eq.s32.totalorder %s16, 0
    %p121 = por %p119, %p120
    %p122 = scmp.ne.s32.totalorder %s110, %s111
    %p123 = scmp.eq.s32.totalorder %s17, 1
    %p124 = por %p122, %p123
    %p126 = scmp.ne.s32.totalorder %s111, %s125
    %p127 = scmp.eq.s32.totalorder %s17, 0
    %p128 = por %p126, %p127
    %s129 = ssub.s32 %s11, %s18
    %p130 = scmp.eq.s32.totalorder %s129, 0
    %s132 = sadd.s32 %s131, 1
    %s133 = scalar_select %p130, %s131, %s132
    %p136 = pneg %p130
    %p137 = scmp.eq.s32.totalorder %s11, 1
    %p138 = por %p136, %p137
    %p139 = scmp.ne.s32.totalorder %s131, %s134
    %p140 = scmp.eq.s32.totalorder %s11, 0
    %p141 = por %p139, %p140
    %p142 = scmp.ne.s32.totalorder %s131, %s134
    %p143 = scmp.eq.s32.totalorder %s16, 1
    %p144 = por %p142, %p143
    %p145 = scmp.ne.s32.totalorder %s134, %s135
    %p146 = scmp.eq.s32.totalorder %s16, 0
    %p147 = por %p145, %p146
    %p148 = scmp.ne.s32.totalorder %s134, %s135
    %p149 = scmp.eq.s32.totalorder %s17, 1
    %p150 = por %p148, %p149
    %p152 = scmp.ne.s32.totalorder %s135, %s151
    %p153 = scmp.eq.s32.totalorder %s17, 0
    %p154 = por %p152, %p153
    %p155 = scmp.le.s32.totalorder 1, %s11
    %p156 = scmp.lt.s32.totalorder %s11, 3
    %p157 = pnand %p155, %p156
    %p158 = pneg %p157
    // Predicated region
    $region9: #{basic_block_forward.9} parent=5 // pred_check
      _
    $region10: #{basic_block_forward.9} parent=5 // pred_check_branch
      %160 = sbr.rel (%p157) target = $region12
    $region11: #{basic_block_forward.9} parent=5 // pred_region
      %s161 = ssub.s32 %s11, 1
      // Predicated region
      $region13: #{basic_block_forward.9} parent=11 // pred_check
        %p162 = pneg %p58
      $region14: #{basic_block_forward.9} parent=11 // pred_check_branch
        %164 = sbr.rel (%p162) target = $region16
      $region15: #{basic_block_forward.9} parent=11 // pred_region
        _
      $region16: #{basic_block_forward.9} parent=11 // pred_fallthru
        _
      // Predicated region
      $region17: #{basic_block_forward.9} parent=11 // pred_check
        %p165 = pneg %p79
      $region18: #{basic_block_forward.9} parent=11 // pred_check_branch
        %167 = sbr.rel (%p165) target = $region20
      $region19: #{basic_block_forward.9} parent=11 // pred_region
        _
      $region20: #{basic_block_forward.9} parent=11 // pred_fallthru
        _
      // Predicated region
      $region21: #{basic_block_forward.9} parent=11 // pred_check
        %p168 = pneg %p100
      $region22: #{basic_block_forward.9} parent=11 // pred_check_branch
        %170 = sbr.rel (%p168) target = $region24
      $region23: #{basic_block_forward.9} parent=11 // pred_region
        _
      $region24: #{basic_block_forward.9} parent=11 // pred_fallthru
        _
      // Predicated region
      $region25: #{basic_block_forward.9} parent=11 // pred_check
        %p171 = pneg %p121
      $region26: #{basic_block_forward.9} parent=11 // pred_check_branch
        %173 = sbr.rel (%p171) target = $region28
      $region27: #{basic_block_forward.9} parent=11 // pred_region
        _
      $region28: #{basic_block_forward.9} parent=11 // pred_fallthru
        _
    $region12: #{basic_block_forward.9} parent=5 // pred_fallthru
      _
    %p174 = scmp.lt.s32.totalorder %s11, 2
    // Predicated region
    $region29: #{basic_block_forward.9} parent=5 // pred_check
      %p175 = pneg %p174
    $region30: #{basic_block_forward.9} parent=5 // pred_check_branch
      %177 = sbr.rel (%p175) target = $region32
    $region31: #{basic_block_forward.9} parent=5 // pred_region
      // Predicated region
      $region33: #{basic_block_forward.9} parent=31 // pred_check
        %p178 = pneg %p31
      $region34: #{basic_block_forward.9} parent=31 // pred_check_branch
        %180 = sbr.rel (%p178) target = $region36
      $region35: #{basic_block_forward.9} parent=31 // pred_region
        %s181 = smul.u32 32, %s11
        %p182 = scmp.lt.s32.totalorder %s181, 63
        %s183 = scalar_select %p182, %s181, 63
        %s184 = smul.addr %s183, 8
        %s185 = scalar_lea.vmem %s0, %s184
        %s186 = smul.u32 32, %s11
      $region36: #{basic_block_forward.9} parent=31 // pred_fallthru
        _
    $region32: #{basic_block_forward.9} parent=5 // pred_fallthru
      _
    %p187 = scmp.le.s32.totalorder 1, %s11
    %p188 = scmp.lt.s32.totalorder %s11, 3
    %p189 = pnand %p187, %p188
    %p190 = pneg %p189
    // Predicated region
    $region37: #{basic_block_forward.9} parent=5 // pred_check
      _
    $region38: #{basic_block_forward.9} parent=5 // pred_check_branch
      %192 = sbr.rel (%p189) target = $region40
    $region39: #{basic_block_forward.9} parent=5 // pred_region
      %s193 = ssub.s32 %s11, 1
      %s194 = smul.u32 32, %s16
      %p195 = scmp.lt.s32.totalorder %s194, 63
      %s196 = scalar_select %p195, %s194, 63
      %s197 = smul.addr %s196, 8
      %s198 = scalar_lea.vmem %s0, %s197
      %p199 = pneg %p37
      %p200 = pneg %p34
      %p201 = pneg %p58
      %p202 = pneg %p55
      %p203 = pneg %p79
      %p204 = pneg %p76
      %p205 = pneg %p100
      %p206 = pneg %p97
      %p207 = pneg %p121
      %p208 = pneg %p118
      %p209 = pneg %p147
      %p210 = pneg %p144
      %s211 = smul.u32 32, %s16
      %p212 = scmp.lt.s32.totalorder %s211, 63
      %s213 = scalar_select %p212, %s211, 63
      %s214 = smul.addr %s213, 8
      %s215 = scalar_lea.vmem %s5, %s214
      %s216 = smul.u32 32, %s16
      %p217 = scmp.lt.s32.totalorder %s216, 63
      %s218 = scalar_select %p217, %s216, 63
      %s219 = smul.addr %s218, 8
      %s220 = scalar_lea.vmem %s0, %s219
      %s221 = smul.u32 32, %s16
      %s222 = smul.u32 32, %s16
      %p223 = scmp.lt.s32.totalorder %s222, 63
      %s224 = scalar_select %p223, %s222, 63
      %s225 = smul.addr %s224, 8
      %s226 = scalar_lea.vmem %s5, %s225
      %s227 = smul.u32 32, %s16
      %v228 = vld [vmem:[%s1] sm:$0x1]
      %v229 = vmul.f32 %v228, 0.001953125
      %v230 = vld [vmem:[%s2] sm:$0x1]
      %v231 = vmul.f32 %v230, 0.001953125
      %v232 = vmul.f32 %v229, %v229
      %v233 = vsub.f32 %v231, %v232
      %v234 = vmax.f32 %v233, 0.0
      %v235 = vld [vmem:[%s3] sm:$0x1]
      %v236 = vadd.f32 %v234, 1e-05
      %v237 = vrsqrt.pop %v236
      %v238 = vmul.f32 %v237, %v236
      %v239 = vmul.f32 %v238, %v237
      %v240 = vmul.f32 0.5, %v239
      %v241 = vsub.f32 1.5, %v240
      %v242 = vmul.f32 %v237, %v241
      %vm243 = vweird.f32 %v236
      %vm244 = vweird.f32 %v237
      %vm245 = vmor %vm243, %vm244
      %v246 = vsel %vm245, %v237, %v242
      %v247 = vmul.f32 %v235, %v246
      %v248 = vld [vmem:[%s220] sm:$0xff]
      %v249 = vld [vmem:[%s220 + $0x8] sm:$0xff]
      %v250 = vld [vmem:[%s220 + $0x10] sm:$0xff]
      %v251 = vld [vmem:[%s220 + $0x18] sm:$0xff]
      %v252 = vld [vmem:[%s220 + $0x20] sm:$0xff]
      %v253 = vld [vmem:[%s220 + $0x28] sm:$0xff]
      %v254 = vld [vmem:[%s220 + $0x30] sm:$0xff]
      %v255 = vld [vmem:[%s220 + $0x38] sm:$0xff]
      %v256 = vld [vmem:[%s220 + $0x40] sm:$0xff]
      %v257 = vld [vmem:[%s220 + $0x48] sm:$0xff]
      %v258 = vld [vmem:[%s220 + $0x50] sm:$0xff]
      %v259 = vld [vmem:[%s220 + $0x58] sm:$0xff]
      %v260 = vld [vmem:[%s220 + $0x60] sm:$0xff]
      %v261 = vld [vmem:[%s220 + $0x68] sm:$0xff]
      %v262 = vld [vmem:[%s220 + $0x70] sm:$0xff]
      %v263 = vld [vmem:[%s220 + $0x78] sm:$0xff]
      %v264 = vld [vmem:[%s220 + $0x80] sm:$0xff]
      %v265 = vld [vmem:[%s220 + $0x88] sm:$0xff]
      %v266 = vld [vmem:[%s220 + $0x90] sm:$0xff]
      %v267 = vld [vmem:[%s220 + $0x98] sm:$0xff]
      %v268 = vld [vmem:[%s220 + $0xa0] sm:$0xff]
      %v269 = vld [vmem:[%s220 + $0xa8] sm:$0xff]
      %v270 = vld [vmem:[%s220 + $0xb0] sm:$0xff]
      %v271 = vld [vmem:[%s220 + $0xb8] sm:$0xff]
      %v272 = vld [vmem:[%s220 + $0xc0] sm:$0xff]
      %v273 = vld [vmem:[%s220 + $0xc8] sm:$0xff]
      %v274 = vld [vmem:[%s220 + $0xd0] sm:$0xff]
      %v275 = vld [vmem:[%s220 + $0xd8] sm:$0xff]
      %v276 = vld [vmem:[%s220 + $0xe0] sm:$0xff]
      %v277 = vld [vmem:[%s220 + $0xe8] sm:$0xff]
      %v278 = vld [vmem:[%s220 + $0xf0] sm:$0xff]
      %v279 = vld [vmem:[%s220 + $0xf8] sm:$0xff]
      %v281 = vperm.slane %v229, 0
      %v283 = vsub.f32 %v248, %v281
      %v284 = vsub.f32 %v249, %v281
      %v285 = vsub.f32 %v250, %v281
      %v286 = vsub.f32 %v251, %v281
      %v287 = vsub.f32 %v252, %v281
      %v288 = vsub.f32 %v253, %v281
      %v289 = vsub.f32 %v254, %v281
      %v290 = vsub.f32 %v255, %v281
      %v291 = vsub.f32 %v256, %v281
      %v292 = vsub.f32 %v257, %v281
      %v293 = vsub.f32 %v258, %v281
      %v294 = vsub.f32 %v259, %v281
      %v295 = vsub.f32 %v260, %v281
      %v296 = vsub.f32 %v261, %v281
      %v297 = vsub.f32 %v262, %v281
      %v298 = vsub.f32 %v263, %v281
      %v299 = vsub.f32 %v264, %v281
      %v300 = vsub.f32 %v265, %v281
      %v301 = vsub.f32 %v266, %v281
      %v302 = vsub.f32 %v267, %v281
      %v303 = vsub.f32 %v268, %v281
      %v304 = vsub.f32 %v269, %v281
      %v305 = vsub.f32 %v270, %v281
      %v306 = vsub.f32 %v271, %v281
      %v307 = vsub.f32 %v272, %v281
      %v308 = vsub.f32 %v273, %v281
      %v309 = vsub.f32 %v274, %v281
      %v310 = vsub.f32 %v275, %v281
      %v311 = vsub.f32 %v276, %v281
      %v312 = vsub.f32 %v277, %v281
      %v313 = vsub.f32 %v278, %v281
      %v314 = vsub.f32 %v279, %v281
      %v316 = vperm.slane %v247, 0
      %v318 = vmul.f32 %v283, %v316
      %v319 = vmul.f32 %v284, %v316
      %v320 = vmul.f32 %v285, %v316
      %v321 = vmul.f32 %v286, %v316
      %v322 = vmul.f32 %v287, %v316
      %v323 = vmul.f32 %v288, %v316
      %v324 = vmul.f32 %v289, %v316
      %v325 = vmul.f32 %v290, %v316
      %v326 = vmul.f32 %v291, %v316
      %v327 = vmul.f32 %v292, %v316
      %v328 = vmul.f32 %v293, %v316
      %v329 = vmul.f32 %v294, %v316
      %v330 = vmul.f32 %v295, %v316
      %v331 = vmul.f32 %v296, %v316
      %v332 = vmul.f32 %v297, %v316
      %v333 = vmul.f32 %v298, %v316
      %v334 = vmul.f32 %v299, %v316
      %v335 = vmul.f32 %v300, %v316
      %v336 = vmul.f32 %v301, %v316
      %v337 = vmul.f32 %v302, %v316
      %v338 = vmul.f32 %v303, %v316
      %v339 = vmul.f32 %v304, %v316
      %v340 = vmul.f32 %v305, %v316
      %v341 = vmul.f32 %v306, %v316
      %v342 = vmul.f32 %v307, %v316
      %v343 = vmul.f32 %v308, %v316
      %v344 = vmul.f32 %v309, %v316
      %v345 = vmul.f32 %v310, %v316
      %v346 = vmul.f32 %v311, %v316
      %v347 = vmul.f32 %v312, %v316
      %v348 = vmul.f32 %v313, %v316
      %v349 = vmul.f32 %v314, %v316
      %v350 = vld [vmem:[%s4] sm:$0x1]
      %v352 = vperm.slane %v350, 0
      %v354 = vadd.f32 %v318, %v352
      %v355 = vadd.f32 %v319, %v352
      %v356 = vadd.f32 %v320, %v352
      %v357 = vadd.f32 %v321, %v352
      %v358 = vadd.f32 %v322, %v352
      %v359 = vadd.f32 %v323, %v352
      %v360 = vadd.f32 %v324, %v352
      %v361 = vadd.f32 %v325, %v352
      %v362 = vadd.f32 %v326, %v352
      %v363 = vadd.f32 %v327, %v352
      %v364 = vadd.f32 %v328, %v352
      %v365 = vadd.f32 %v329, %v352
      %v366 = vadd.f32 %v330, %v352
      %v367 = vadd.f32 %v331, %v352
      %v368 = vadd.f32 %v332, %v352
      %v369 = vadd.f32 %v333, %v352
      %v370 = vadd.f32 %v334, %v352
      %v371 = vadd.f32 %v335, %v352
      %v372 = vadd.f32 %v336, %v352
      %v373 = vadd.f32 %v337, %v352
      %v374 = vadd.f32 %v338, %v352
      %v375 = vadd.f32 %v339, %v352
      %v376 = vadd.f32 %v340, %v352
      %v377 = vadd.f32 %v341, %v352
      %v378 = vadd.f32 %v342, %v352
      %v379 = vadd.f32 %v343, %v352
      %v380 = vadd.f32 %v344, %v352
      %v381 = vadd.f32 %v345, %v352
      %v382 = vadd.f32 %v346, %v352
      %v383 = vadd.f32 %v347, %v352
      %v384 = vadd.f32 %v348, %v352
      %v385 = vadd.f32 %v349, %v352
      %386 = vst [vmem:[%s226] sm:$0xff] %v354
      %387 = vst [vmem:[%s226 + $0x8] sm:$0xff] %v355
      %388 = vst [vmem:[%s226 + $0x10] sm:$0xff] %v356
      %389 = vst [vmem:[%s226 + $0x18] sm:$0xff] %v357
      %390 = vst [vmem:[%s226 + $0x20] sm:$0xff] %v358
      %391 = vst [vmem:[%s226 + $0x28] sm:$0xff] %v359
      %392 = vst [vmem:[%s226 + $0x30] sm:$0xff] %v360
      %393 = vst [vmem:[%s226 + $0x38] sm:$0xff] %v361
      %394 = vst [vmem:[%s226 + $0x40] sm:$0xff] %v362
      %395 = vst [vmem:[%s226 + $0x48] sm:$0xff] %v363
      %396 = vst [vmem:[%s226 + $0x50] sm:$0xff] %v364
      %397 = vst [vmem:[%s226 + $0x58] sm:$0xff] %v365
      %398 = vst [vmem:[%s226 + $0x60] sm:$0xff] %v366
      %399 = vst [vmem:[%s226 + $0x68] sm:$0xff] %v367
      %400 = vst [vmem:[%s226 + $0x70] sm:$0xff] %v368
      %401 = vst [vmem:[%s226 + $0x78] sm:$0xff] %v369
      %402 = vst [vmem:[%s226 + $0x80] sm:$0xff] %v370
      %403 = vst [vmem:[%s226 + $0x88] sm:$0xff] %v371
      %404 = vst [vmem:[%s226 + $0x90] sm:$0xff] %v372
      %405 = vst [vmem:[%s226 + $0x98] sm:$0xff] %v373
      %406 = vst [vmem:[%s226 + $0xa0] sm:$0xff] %v374
      %407 = vst [vmem:[%s226 + $0xa8] sm:$0xff] %v375
      %408 = vst [vmem:[%s226 + $0xb0] sm:$0xff] %v376
      %409 = vst [vmem:[%s226 + $0xb8] sm:$0xff] %v377
      %410 = vst [vmem:[%s226 + $0xc0] sm:$0xff] %v378
      %411 = vst [vmem:[%s226 + $0xc8] sm:$0xff] %v379
      %412 = vst [vmem:[%s226 + $0xd0] sm:$0xff] %v380
      %413 = vst [vmem:[%s226 + $0xd8] sm:$0xff] %v381
      %414 = vst [vmem:[%s226 + $0xe0] sm:$0xff] %v382
      %415 = vst [vmem:[%s226 + $0xe8] sm:$0xff] %v383
      %416 = vst [vmem:[%s226 + $0xf0] sm:$0xff] %v384
      %417 = vst [vmem:[%s226 + $0xf8] sm:$0xff] %v385
      %s418 = smul.u32 32, %s16
      %p419 = scmp.lt.s32.totalorder %s418, 63
      %s420 = scalar_select %p419, %s418, 63
      %s421 = smul.addr %s420, 8
      %s422 = scalar_lea.vmem %s5, %s421
      // Predicated region
      $region41: #{basic_block_forward.9} parent=39 // pred_check
        %p423 = pneg %p144
      $region42: #{basic_block_forward.9} parent=39 // pred_check_branch
        %425 = sbr.rel (%p423) target = $region44
      $region43: #{basic_block_forward.9} parent=39 // pred_region
        %s426 = smul.u32 32, %s16
      $region44: #{basic_block_forward.9} parent=39 // pred_fallthru
        _
    $region40: #{basic_block_forward.9} parent=5 // pred_fallthru
      _
    %p427 = scmp.le.s32.totalorder 2, %s11
    // Predicated region
    $region45: #{basic_block_forward.9} parent=5 // pred_check
      %p428 = pneg %p427
    $region46: #{basic_block_forward.9} parent=5 // pred_check_branch
      %430 = sbr.rel (%p428) target = $region48
    $region47: #{basic_block_forward.9} parent=5 // pred_region
      %s431 = ssub.s32 %s11, 2
      // Predicated region
      $region49: #{basic_block_forward.9} parent=47 // pred_check
        %p432 = pneg %p150
      $region50: #{basic_block_forward.9} parent=47 // pred_check_branch
        %434 = sbr.rel (%p432) target = $region52
      $region51: #{basic_block_forward.9} parent=47 // pred_region
        %s435 = smul.u32 32, %s17
        %p436 = scmp.lt.s32.totalorder %s435, 63
        %s437 = scalar_select %p436, %s435, 63
        %s438 = smul.addr %s437, 8
        %s439 = scalar_lea.vmem %s5, %s438
      $region52: #{basic_block_forward.9} parent=47 // pred_fallthru
        _
    $region48: #{basic_block_forward.9} parent=5 // pred_fallthru
      _
  $region6: #{basic_block_forward.9} parent=0 // loop_footer
    %s15 = sadd.s32 1, %s11
  $region7: #{basic_block_forward.9} parent=0 // loop_footer_branch
    %10 = sbr.rel target = $region3
  $region8: #{basic_block_forward.9} parent=0 // loop_exit
    _

// kernel: basic_block_forward.8
$region0: #{basic_block_forward.8}
  #allocation0 [shape = 'u32[]', space=smem, size = 0x4, offset = 0x4, fixed_abs, tag = 'smem constant byte address 0x4 - core index']
  #allocation1 [shape = 'u32[72,128]{1,0:T(1,128)}', space=vmem, size = 0x9000, scoped, tag = 'internal scratch']
  #allocation2 [shape = 'f32[256,128]{1,0:T(8,128)}', space=vmem, size = 0x20000, scoped, tag = 'scratch operand']
  %s0 = inlined_call_operand.vmem [shape: bf16[512,64], index: 0, kind: input, shape index: {}]
  %s1 = inlined_call_operand.vmem [shape: bf16[64,128], index: 1, kind: input, shape index: {}]
  %s2 = inlined_call_operand.vmem [shape: f32[512,128], index: 2, kind: output, shape index: {0}]
  %s3 = inlined_call_operand.vmem [shape: f32[1,128], index: 3, kind: output, shape index: {1}]
  %s4 = inlined_call_operand.vmem [shape: f32[1,128], index: 4, kind: output, shape index: {2}]
  %5 = xla_tuple %s2, %s3, %s4
  %s6 = sld [smem:[#allocation0]]
  $region69: #{basic_block_forward.8} parent=0
    _
  %s8 = ssub.s32 1, %s6
  %s9 = scalar_select 0, %s8, %s6
  loop: start=0, step=1, limit=4
  $region2: #{basic_block_forward.8} parent=0 // loop_pre_header
    _
  $region3: #{basic_block_forward.8} parent=0 // loop_header
    %s11 = sphi 0, %s15
    %p12 = scmp.ge.s32.totalorder %s11, 4
    %s18 = sphi 0, %s30
    %s19 = sphi 0, %s26
    %s20 = sphi 0, %s18
    %s21 = sphi 0, %s19
    %s22 = sphi 0, %s20
    %s23 = sphi 0, %s21
    %s35 = sphi 0, %s37
    %s38 = sphi 0, %s35
    %s39 = sphi 0, %s38
    %s55 = sphi 0, %s39
    %s61 = sphi 0, %s63
    %s64 = sphi 0, %s61
    %s65 = sphi 0, %s64
    %s81 = sphi 0, %s65
    %s87 = sphi 0, %s89
    %s90 = sphi 0, %s87
    %s91 = sphi 0, %s90
    %s107 = sphi 0, %s91
    %s111 = sphi 0, %s111
    %s113 = sphi 0, %s111
    %s114 = sphi 0, %s113
    %s128 = sphi 0, %s114
    %s132 = sphi 0, %s132
    %s134 = sphi 0, %s132
    %s135 = sphi 0, %s134
    %s149 = sphi 0, %s135
  $region4: #{basic_block_forward.8} parent=0 // loop_header_branch
    %14 = sbr.rel (%p12) target = $region8
  $region5: #{basic_block_forward.8} parent=0 // loop_body
    %s16 = ssub.s32 %s11, 1
    %s17 = ssub.s32 %s11, 2
    %s24 = sadd.s32 1, %s19
    %p25 = scmp.ge.s32.totalorder %s24, 1
    %s26 = scalar_select %p25, 0, %s24
    %s27 = sadd.s32 1, %s18
    %s28 = scalar_select %p25, %s27, %s18
    %p29 = scmp.ge.s32.totalorder %s28, 2
    %s30 = scalar_select %p29, 0, %s28
    %s31 = ssub.s32 %s18, %s30
    %s32 = ssub.s32 %s19, %s26
    %s33 = sor.u32 %s31, %s32
    %p34 = scmp.eq.s32.totalorder %s33, 0
    %s36 = sadd.s32 %s35, 1
    %s37 = scalar_select %p34, %s35, %s36
    %p40 = pneg %p34
    %p41 = scmp.eq.s32.totalorder %s11, 1
    %p42 = por %p40, %p41
    %p43 = scmp.ne.s32.totalorder %s35, %s38
    %p44 = scmp.eq.s32.totalorder %s11, 0
    %p45 = por %p43, %p44
    %p46 = scmp.ne.s32.totalorder %s35, %s38
    %p47 = scmp.eq.s32.totalorder %s16, 1
    %p48 = por %p46, %p47
    %p49 = scmp.ne.s32.totalorder %s38, %s39
    %p50 = scmp.eq.s32.totalorder %s16, 0
    %p51 = por %p49, %p50
    %p52 = scmp.ne.s32.totalorder %s38, %s39
    %p53 = scmp.eq.s32.totalorder %s17, 1
    %p54 = por %p52, %p53
    %p56 = scmp.ne.s32.totalorder %s39, %s55
    %p57 = scmp.eq.s32.totalorder %s17, 0
    %p58 = por %p56, %p57
    %s59 = ssub.s32 %s19, %s26
    %p60 = scmp.eq.s32.totalorder %s59, 0
    %s62 = sadd.s32 %s61, 1
    %s63 = scalar_select %p60, %s61, %s62
    %p66 = pneg %p60
    %p67 = scmp.eq.s32.totalorder %s11, 1
    %p68 = por %p66, %p67
    %p69 = scmp.ne.s32.totalorder %s61, %s64
    %p70 = scmp.eq.s32.totalorder %s11, 0
    %p71 = por %p69, %p70
    %p72 = scmp.ne.s32.totalorder %s61, %s64
    %p73 = scmp.eq.s32.totalorder %s16, 1
    %p74 = por %p72, %p73
    %p75 = scmp.ne.s32.totalorder %s64, %s65
    %p76 = scmp.eq.s32.totalorder %s16, 0
    %p77 = por %p75, %p76
    %p78 = scmp.ne.s32.totalorder %s64, %s65
    %p79 = scmp.eq.s32.totalorder %s17, 1
    %p80 = por %p78, %p79
    %p82 = scmp.ne.s32.totalorder %s65, %s81
    %p83 = scmp.eq.s32.totalorder %s17, 0
    %p84 = por %p82, %p83
    %s85 = ssub.s32 %s18, %s30
    %p86 = scmp.eq.s32.totalorder %s85, 0
    %s88 = sadd.s32 %s87, 1
    %s89 = scalar_select %p86, %s87, %s88
    %p92 = pneg %p86
    %p93 = scmp.eq.s32.totalorder %s11, 1
    %p94 = por %p92, %p93
    %p95 = scmp.ne.s32.totalorder %s87, %s90
    %p96 = scmp.eq.s32.totalorder %s11, 0
    %p97 = por %p95, %p96
    %p98 = scmp.ne.s32.totalorder %s87, %s90
    %p99 = scmp.eq.s32.totalorder %s16, 1
    %p100 = por %p98, %p99
    %p101 = scmp.ne.s32.totalorder %s90, %s91
    %p102 = scmp.eq.s32.totalorder %s16, 0
    %p103 = por %p101, %p102
    %p104 = scmp.ne.s32.totalorder %s90, %s91
    %p105 = scmp.eq.s32.totalorder %s17, 1
    %p106 = por %p104, %p105
    %p108 = scmp.ne.s32.totalorder %s91, %s107
    %p109 = scmp.eq.s32.totalorder %s17, 0
    %p110 = por %p108, %p109
    %s112 = sadd.s32 %s111, 1
    %p115 = scmp.eq.s32.totalorder %s11, 1
    %p116 = scmp.ne.s32.totalorder %s111, %s113
    %p117 = scmp.eq.s32.totalorder %s11, 0
    %p118 = por %p116, %p117
    %p119 = scmp.ne.s32.totalorder %s111, %s113
    %p120 = scmp.eq.s32.totalorder %s16, 1
    %p121 = por %p119, %p120
    %p122 = scmp.ne.s32.totalorder %s113, %s114
    %p123 = scmp.eq.s32.totalorder %s16, 0
    %p124 = por %p122, %p123
    %p125 = scmp.ne.s32.totalorder %s113, %s114
    %p126 = scmp.eq.s32.totalorder %s17, 1
    %p127 = por %p125, %p126
    %p129 = scmp.ne.s32.totalorder %s114, %s128
    %p130 = scmp.eq.s32.totalorder %s17, 0
    %p131 = por %p129, %p130
    %s133 = sadd.s32 %s132, 1
    %p136 = scmp.eq.s32.totalorder %s11, 1
    %p137 = scmp.ne.s32.totalorder %s132, %s134
    %p138 = scmp.eq.s32.totalorder %s11, 0
    %p139 = por %p137, %p138
    %p140 = scmp.ne.s32.totalorder %s132, %s134
    %p141 = scmp.eq.s32.totalorder %s16, 1
    %p142 = por %p140, %p141
    %p143 = scmp.ne.s32.totalorder %s134, %s135
    %p144 = scmp.eq.s32.totalorder %s16, 0
    %p145 = por %p143, %p144
    %p146 = scmp.ne.s32.totalorder %s134, %s135
    %p147 = scmp.eq.s32.totalorder %s17, 1
    %p148 = por %p146, %p147
    %p150 = scmp.ne.s32.totalorder %s135, %s149
    %p151 = scmp.eq.s32.totalorder %s17, 0
    %p152 = por %p150, %p151
    %p153 = scmp.le.s32.totalorder 1, %s11
    %p154 = scmp.lt.s32.totalorder %s11, 3
    %p155 = pnand %p153, %p154
    %p156 = pneg %p155
    // Predicated region
    $region9: #{basic_block_forward.8} parent=5 // pred_check
      _
    $region10: #{basic_block_forward.8} parent=5 // pred_check_branch
      %158 = sbr.rel (%p155) target = $region12
    $region11: #{basic_block_forward.8} parent=5 // pred_region
      %s159 = ssub.s32 %s11, 1
      // Predicated region
      $region13: #{basic_block_forward.8} parent=11 // pred_check
        %p160 = pneg %p77
      $region14: #{basic_block_forward.8} parent=11 // pred_check_branch
        %162 = sbr.rel (%p160) target = $region16
      $region15: #{basic_block_forward.8} parent=11 // pred_region
        %s163 = smul.u32 8, %s21
        %p164 = scmp.lt.s32.totalorder %s163, 7
        %s165 = scalar_select %p164, %s163, 7
        %s166 = smul.addr %s165, 4
        %s167 = scalar_lea.vmem %s1, %s166
        %s168 = smul.u32 8, %s21
      $region16: #{basic_block_forward.8} parent=11 // pred_fallthru
        _
    $region12: #{basic_block_forward.8} parent=5 // pred_fallthru
      _
    %p169 = scmp.lt.s32.totalorder %s11, 2
    // Predicated region
    $region17: #{basic_block_forward.8} parent=5 // pred_check
      %p170 = pneg %p169
    $region18: #{basic_block_forward.8} parent=5 // pred_check_branch
      %172 = sbr.rel (%p170) target = $region20
    $region19: #{basic_block_forward.8} parent=5 // pred_region
      // Predicated region
      $region21: #{basic_block_forward.8} parent=19 // pred_check
        %p173 = pneg %p45
      $region22: #{basic_block_forward.8} parent=19 // pred_check_branch
        %175 = sbr.rel (%p173) target = $region24
      $region23: #{basic_block_forward.8} parent=19 // pred_region
        %s176 = smul.u32 32, %s18
        %p177 = scmp.lt.s32.totalorder %s176, 63
        %s178 = scalar_select %p177, %s176, 63
        %p179 = scmp.lt.s32.totalorder %s19, 0
        %s180 = scalar_select %p179, %s19, 0
        %s181 = sadd.s32 %s180, %s178
        %s182 = smul.addr %s181, 4
        %s183 = scalar_lea.vmem %s0, %s182
        %s184 = smul.u32 32, %s18
      $region24: #{basic_block_forward.8} parent=19 // pred_fallthru
        _
    $region20: #{basic_block_forward.8} parent=5 // pred_fallthru
      _
    %p185 = scmp.le.s32.totalorder 1, %s11
    %p186 = scmp.lt.s32.totalorder %s11, 3
    %p187 = pnand %p185, %p186
    %p188 = pneg %p187
    // Predicated region
    $region25: #{basic_block_forward.8} parent=5 // pred_check
      _
    $region26: #{basic_block_forward.8} parent=5 // pred_check_branch
      %190 = sbr.rel (%p187) target = $region28
    $region27: #{basic_block_forward.8} parent=5 // pred_region
      %s191 = ssub.s32 %s11, 1
      %s192 = smul.u32 32, %s20
      %p193 = scmp.lt.s32.totalorder %s192, 63
      %s194 = scalar_select %p193, %s192, 63
      %p195 = scmp.lt.s32.totalorder %s21, 0
      %s196 = scalar_select %p195, %s21, 0
      %s197 = sadd.s32 %s196, %s194
      %s198 = smul.addr %s197, 4
      %s199 = scalar_lea.vmem %s0, %s198
      %p200 = pneg %p51
      %p201 = pneg %p48
      %s202 = smul.u32 8, %s21
      %p203 = scmp.lt.s32.totalorder %s202, 7
      %s204 = scalar_select %p203, %s202, 7
      %s205 = smul.addr %s204, 4
      %s206 = scalar_lea.vmem %s1, %s205
      %p207 = pneg %p77
      %p208 = pneg %p74
      %p209 = pneg %p103
      %p210 = pneg %p100
      %s211 = smul.u32 32, %s20
      %p212 = scmp.lt.s32.totalorder %s211, 63
      %s213 = scalar_select %p212, %s211, 63
      %s214 = smul.addr %s213, 8
      %s215 = scalar_lea.vmem %s2, %s214
      %p216 = pneg %p124
      %p217 = pneg %p121
      %p218 = pneg %p145
      %p219 = pneg %p142
      %s220 = smul.u32 32, %s20
      %p221 = scmp.lt.s32.totalorder %s220, 63
      %s222 = scalar_select %p221, %s220, 63
      %p223 = scmp.lt.s32.totalorder %s21, 0
      %s224 = scalar_select %p223, %s21, 0
      %s225 = sadd.s32 %s224, %s222
      %s226 = smul.addr %s225, 4
      %s227 = scalar_lea.vmem %s0, %s226
      %s228 = smul.u32 32, %s20
      %s229 = smul.u32 8, %s21
      %p230 = scmp.lt.s32.totalorder %s229, 7
      %s231 = scalar_select %p230, %s229, 7
      %s232 = smul.addr %s231, 4
      %s233 = scalar_lea.vmem %s1, %s232
      %s234 = smul.u32 8, %s21
      %s235 = smul.u32 32, %s20
      %p236 = scmp.lt.s32.totalorder %s235, 63
      %s237 = scalar_select %p236, %s235, 63
      %s238 = smul.addr %s237, 8
      %s239 = scalar_lea.vmem %s2, %s238
      %s240 = smul.u32 32, %s20
      %p242 = scmp.eq.s32.totalorder %s21, 0
      // Predicated region
      $region29: #{basic_block_forward.8} parent=27 // pred_check
        %p243 = pneg %p242
      $region30: #{basic_block_forward.8} parent=27 // pred_check_branch
        %245 = sbr.rel (%p243) target = $region32
      $region31: #{basic_block_forward.8} parent=27 // pred_region
        %246 = vst [vmem:[#allocation2] sm:$0xff] 0.0
        %247 = vst [vmem:[#allocation2 + $0x8] sm:$0xff] 0.0
        %248 = vst [vmem:[#allocation2 + $0x10] sm:$0xff] 0.0
        %249 = vst [vmem:[#allocation2 + $0x18] sm:$0xff] 0.0
        %250 = vst [vmem:[#allocation2 + $0x20] sm:$0xff] 0.0
        %251 = vst [vmem:[#allocation2 + $0x28] sm:$0xff] 0.0
        %252 = vst [vmem:[#allocation2 + $0x30] sm:$0xff] 0.0
        %253 = vst [vmem:[#allocation2 + $0x38] sm:$0xff] 0.0
        %254 = vst [vmem:[#allocation2 + $0x40] sm:$0xff] 0.0
        %255 = vst [vmem:[#allocation2 + $0x48] sm:$0xff] 0.0
        %256 = vst [vmem:[#allocation2 + $0x50] sm:$0xff] 0.0
        %257 = vst [vmem:[#allocation2 + $0x58] sm:$0xff] 0.0
        %258 = vst [vmem:[#allocation2 + $0x60] sm:$0xff] 0.0
        %259 = vst [vmem:[#allocation2 + $0x68] sm:$0xff] 0.0
        %260 = vst [vmem:[#allocation2 + $0x70] sm:$0xff] 0.0
        %261 = vst [vmem:[#allocation2 + $0x78] sm:$0xff] 0.0
        %262 = vst [vmem:[#allocation2 + $0x80] sm:$0xff] 0.0
        %263 = vst [vmem:[#allocation2 + $0x88] sm:$0xff] 0.0
        %264 = vst [vmem:[#allocation2 + $0x90] sm:$0xff] 0.0
        %265 = vst [vmem:[#allocation2 + $0x98] sm:$0xff] 0.0
        %266 = vst [vmem:[#allocation2 + $0xa0] sm:$0xff] 0.0
        %267 = vst [vmem:[#allocation2 + $0xa8] sm:$0xff] 0.0
        %268 = vst [vmem:[#allocation2 + $0xb0] sm:$0xff] 0.0
        %269 = vst [vmem:[#allocation2 + $0xb8] sm:$0xff] 0.0
        %270 = vst [vmem:[#allocation2 + $0xc0] sm:$0xff] 0.0
        %271 = vst [vmem:[#allocation2 + $0xc8] sm:$0xff] 0.0
        %272 = vst [vmem:[#allocation2 + $0xd0] sm:$0xff] 0.0
        %273 = vst [vmem:[#allocation2 + $0xd8] sm:$0xff] 0.0
        %274 = vst [vmem:[#allocation2 + $0xe0] sm:$0xff] 0.0
        %275 = vst [vmem:[#allocation2 + $0xe8] sm:$0xff] 0.0
        %276 = vst [vmem:[#allocation2 + $0xf0] sm:$0xff] 0.0
        %277 = vst [vmem:[#allocation2 + $0xf8] sm:$0xff] 0.0
      $region32: #{basic_block_forward.8} parent=27 // pred_fallthru
        _
      %p278 = scmp.eq.s32.totalorder %s20, 0
      %p279 = pnand %p278, %p242
      %p280 = pneg %p279
      // Predicated region
      $region33: #{basic_block_forward.8} parent=27 // pred_check
        _
      $region34: #{basic_block_forward.8} parent=27 // pred_check_branch
        %282 = sbr.rel (%p279) target = $region36
      $region35: #{basic_block_forward.8} parent=27 // pred_region
        %283 = vst [vmem:[%s3] sm:$0x1] 0.0
        %284 = vst [vmem:[%s4] sm:$0x1] 0.0
      $region36: #{basic_block_forward.8} parent=27 // pred_fallthru
        _
      %v285 = vld [vmem:[#allocation2] sm:$0xff]
      %v286 = vld [vmem:[#allocation2 + $0x8] sm:$0xff]
      %v287 = vld [vmem:[#allocation2 + $0x10] sm:$0xff]
      %v288 = vld [vmem:[#allocation2 + $0x18] sm:$0xff]
      %v289 = vld [vmem:[#allocation2 + $0x20] sm:$0xff]
      %v290 = vld [vmem:[#allocation2 + $0x28] sm:$0xff]
      %v291 = vld [vmem:[#allocation2 + $0x30] sm:$0xff]
      %v292 = vld [vmem:[#allocation2 + $0x38] sm:$0xff]
      %v293 = vld [vmem:[#allocation2 + $0x40] sm:$0xff]
      %v294 = vld [vmem:[#allocation2 + $0x48] sm:$0xff]
      %v295 = vld [vmem:[#allocation2 + $0x50] sm:$0xff]
      %v296 = vld [vmem:[#allocation2 + $0x58] sm:$0xff]
      %v297 = vld [vmem:[#allocation2 + $0x60] sm:$0xff]
      %v298 = vld [vmem:[#allocation2 + $0x68] sm:$0xff]
      %v299 = vld [vmem:[#allocation2 + $0x70] sm:$0xff]
      %v300 = vld [vmem:[#allocation2 + $0x78] sm:$0xff]
      %v301 = vld [vmem:[#allocation2 + $0x80] sm:$0xff]
      %v302 = vld [vmem:[#allocation2 + $0x88] sm:$0xff]
      %v303 = vld [vmem:[#allocation2 + $0x90] sm:$0xff]
      %v304 = vld [vmem:[#allocation2 + $0x98] sm:$0xff]
      %v305 = vld [vmem:[#allocation2 + $0xa0] sm:$0xff]
      %v306 = vld [vmem:[#allocation2 + $0xa8] sm:$0xff]
      %v307 = vld [vmem:[#allocation2 + $0xb0] sm:$0xff]
      %v308 = vld [vmem:[#allocation2 + $0xb8] sm:$0xff]
      %v309 = vld [vmem:[#allocation2 + $0xc0] sm:$0xff]
      %v310 = vld [vmem:[#allocation2 + $0xc8] sm:$0xff]
      %v311 = vld [vmem:[#allocation2 + $0xd0] sm:$0xff]
      %v312 = vld [vmem:[#allocation2 + $0xd8] sm:$0xff]
      %v313 = vld [vmem:[#allocation2 + $0xe0] sm:$0xff]
      %v314 = vld [vmem:[#allocation2 + $0xe8] sm:$0xff]
      %v315 = vld [vmem:[#allocation2 + $0xf0] sm:$0xff]
      %v316 = vld [vmem:[#allocation2 + $0xf8] sm:$0xff]
      %v317 = vld [vmem:[%s227] sm:$0xf]
      %v318 = vld [vmem:[%s227 + $0x4] sm:$0xf]
      %v319 = vld [vmem:[%s227 + $0x8] sm:$0xf]
      %v320 = vld [vmem:[%s227 + $0xc] sm:$0xf]
      %v321 = vld [vmem:[%s227 + $0x10] sm:$0xf]
      %v322 = vld [vmem:[%s227 + $0x14] sm:$0xf]
      %v323 = vld [vmem:[%s227 + $0x18] sm:$0xf]
      %v324 = vld [vmem:[%s227 + $0x1c] sm:$0xf]
      %v325 = vld [vmem:[%s227 + $0x20] sm:$0xf]
      %v326 = vld [vmem:[%s227 + $0x24] sm:$0xf]
      %v327 = vld [vmem:[%s227 + $0x28] sm:$0xf]
      %v328 = vld [vmem:[%s227 + $0x2c] sm:$0xf]
      %v329 = vld [vmem:[%s227 + $0x30] sm:$0xf]
      %v330 = vld [vmem:[%s227 + $0x34] sm:$0xf]
      %v331 = vld [vmem:[%s227 + $0x38] sm:$0xf]
      %v332 = vld [vmem:[%s227 + $0x3c] sm:$0xf]
      %v333 = vld [vmem:[%s227 + $0x40] sm:$0xf]
      %v334 = vld [vmem:[%s227 + $0x44] sm:$0xf]
      %v335 = vld [vmem:[%s227 + $0x48] sm:$0xf]
      %v336 = vld [vmem:[%s227 + $0x4c] sm:$0xf]
      %v337 = vld [vmem:[%s227 + $0x50] sm:$0xf]
      %v338 = vld [vmem:[%s227 + $0x54] sm:$0xf]
      %v339 = vld [vmem:[%s227 + $0x58] sm:$0xf]
      %v340 = vld [vmem:[%s227 + $0x5c] sm:$0xf]
      %v341 = vld [vmem:[%s227 + $0x60] sm:$0xf]
      %v342 = vld [vmem:[%s227 + $0x64] sm:$0xf]
      %v343 = vld [vmem:[%s227 + $0x68] sm:$0xf]
      %v344 = vld [vmem:[%s227 + $0x6c] sm:$0xf]
      %v345 = vld [vmem:[%s227 + $0x70] sm:$0xf]
      %v346 = vld [vmem:[%s227 + $0x74] sm:$0xf]
      %v347 = vld [vmem:[%s227 + $0x78] sm:$0xf]
      %v348 = vld [vmem:[%s227 + $0x7c] sm:$0xf]
      %v349 = vld [vmem:[%s233] sm:$0xf]
      %v350 = vld [vmem:[%s233 + $0x4] sm:$0xf]
      %v351 = vld [vmem:[%s233 + $0x8] sm:$0xf]
      %v352 = vld [vmem:[%s233 + $0xc] sm:$0xf]
      %v353 = vld [vmem:[%s233 + $0x10] sm:$0xf]
      %v354 = vld [vmem:[%s233 + $0x14] sm:$0xf]
      %v355 = vld [vmem:[%s233 + $0x18] sm:$0xf]
      %v356 = vld [vmem:[%s233 + $0x1c] sm:$0xf]
      %v389 = vunpack.c.l.b16 %v317
      %v390 = vunpack.c.l.b16 %v318
      %v391 = vunpack.c.l.b16 %v319
      %v392 = vunpack.c.l.b16 %v320
      %v393 = vunpack.c.l.b16 %v321
      %v394 = vunpack.c.l.b16 %v322
      %v395 = vunpack.c.l.b16 %v323
      %v396 = vunpack.c.l.b16 %v324
      %v397 = vunpack.c.l.b16 %v325
      %v398 = vunpack.c.l.b16 %v326
      %v399 = vunpack.c.l.b16 %v327
      %v400 = vunpack.c.l.b16 %v328
      %v401 = vunpack.c.l.b16 %v329
      %v402 = vunpack.c.l.b16 %v330
      %v403 = vunpack.c.l.b16 %v331
      %v404 = vunpack.c.l.b16 %v332
      %v405 = vunpack.c.l.b16 %v333
      %v406 = vunpack.c.l.b16 %v334
      %v407 = vunpack.c.l.b16 %v335
      %v408 = vunpack.c.l.b16 %v336
      %v409 = vunpack.c.l.b16 %v337
      %v410 = vunpack.c.l.b16 %v338
      %v411 = vunpack.c.l.b16 %v339
      %v412 = vunpack.c.l.b16 %v340
      %v413 = vunpack.c.l.b16 %v341
      %v414 = vunpack.c.l.b16 %v342
      %v415 = vunpack.c.l.b16 %v343
      %v416 = vunpack.c.l.b16 %v344
      %v417 = vunpack.c.l.b16 %v345
      %v418 = vunpack.c.l.b16 %v346
      %v419 = vunpack.c.l.b16 %v347
      %v420 = vunpack.c.l.b16 %v348
      %v421 = vpack.c.b16 %v390, %v389
      %v422 = vpack.c.b16 %v392, %v391
      %v423 = vpack.c.b16 %v394, %v393
      %v424 = vpack.c.b16 %v396, %v395
      %v425 = vpack.c.b16 %v398, %v397
      %v426 = vpack.c.b16 %v400, %v399
      %v427 = vpack.c.b16 %v402, %v401
      %v428 = vpack.c.b16 %v404, %v403
      %v429 = vpack.c.b16 %v406, %v405
      %v430 = vpack.c.b16 %v408, %v407
      %v431 = vpack.c.b16 %v410, %v409
      %v432 = vpack.c.b16 %v412, %v411
      %v433 = vpack.c.b16 %v414, %v413
      %v434 = vpack.c.b16 %v416, %v415
      %v435 = vpack.c.b16 %v418, %v417
      %v436 = vpack.c.b16 %v420, %v419
      %v445 = vunpack.c.l.b16 %v349
      %v446 = vunpack.c.l.b16 %v350
      %v447 = vunpack.c.l.b16 %v351
      %v448 = vunpack.c.l.b16 %v352
      %v449 = vunpack.c.l.b16 %v353
      %v450 = vunpack.c.l.b16 %v354
      %v451 = vunpack.c.l.b16 %v355
      %v452 = vunpack.c.l.b16 %v356
      %v453 = vpack.c.b16 %v446, %v445
      %v454 = vpack.c.b16 %v448, %v447
      %v455 = vpack.c.b16 %v450, %v449
      %v456 = vpack.c.b16 %v452, %v451
      %vm461 = vcmask 523264
      %v463 = vsel %vm461, %v421, 0
      %v466 = vsel %vm461, %v422, 0
      %v469 = vsel %vm461, %v423, 0
      %v472 = vsel %vm461, %v424, 0
      %v475 = vsel %vm461, %v425, 0
      %v478 = vsel %vm461, %v426, 0
      %v481 = vsel %vm461, %v427, 0
      %v484 = vsel %vm461, %v428, 0
      %v487 = vsel %vm461, %v429, 0
      %v490 = vsel %vm461, %v430, 0
      %v493 = vsel %vm461, %v431, 0
      %v496 = vsel %vm461, %v432, 0
      %v499 = vsel %vm461, %v433, 0
      %v502 = vsel %vm461, %v434, 0
      %v505 = vsel %vm461, %v435, 0
      %v508 = vsel %vm461, %v436, 0
      %510 = vmatpush.bf16.msra.mxu0 0
      %511 = vmatpush.bf16.msra.mxu0 0
      %512 = vmatpush.bf16.msra.mxu0 0
      %513 = vmatpush.bf16.msra.mxu0 0
      %514 = vmatpush.bf16.msra.mxu0 %v456
      %515 = vmatpush.bf16.msra.mxu0 %v455
      %516 = vmatpush.bf16.msra.mxu0 %v454
      %517 = vmatpush.bf16.msra.mxu0 %v453
      %518 = vmatmul.bf16.gmra.mxu0 %v463
      %v519 = vpop.f32.mrf.mxu0
      %v520 = vadd.f32 0.0, %v519
      %v521 = vpop.f32.mrf.mxu0
      %v522 = vadd.f32 0.0, %v521
      %523 = vmatmul.bf16.gmra.mxu0 %v466
      %v524 = vpop.f32.mrf.mxu0
      %v525 = vadd.f32 0.0, %v524
      %v526 = vpop.f32.mrf.mxu0
      %v527 = vadd.f32 0.0, %v526
      %528 = vmatmul.bf16.gmra.mxu0 %v469
      %v529 = vpop.f32.mrf.mxu0
      %v530 = vadd.f32 0.0, %v529
      %v531 = vpop.f32.mrf.mxu0
      %v532 = vadd.f32 0.0, %v531
      %533 = vmatmul.bf16.gmra.mxu0 %v472
      %v534 = vpop.f32.mrf.mxu0
      %v535 = vadd.f32 0.0, %v534
      %v536 = vpop.f32.mrf.mxu0
      %v537 = vadd.f32 0.0, %v536
      %538 = vmatmul.bf16.gmra.mxu0 %v475
      %v539 = vpop.f32.mrf.mxu0
      %v540 = vadd.f32 0.0, %v539
      %v541 = vpop.f32.mrf.mxu0
      %v542 = vadd.f32 0.0, %v541
      %543 = vmatmul.bf16.gmra.mxu0 %v478
      %v544 = vpop.f32.mrf.mxu0
      %v545 = vadd.f32 0.0, %v544
      %v546 = vpop.f32.mrf.mxu0
      %v547 = vadd.f32 0.0, %v546
      %548 = vmatmul.bf16.gmra.mxu0 %v481
      %v549 = vpop.f32.mrf.mxu0
      %v550 = vadd.f32 0.0, %v549
      %v551 = vpop.f32.mrf.mxu0
      %v552 = vadd.f32 0.0, %v551
      %553 = vmatmul.bf16.gmra.mxu0 %v484
      %v554 = vpop.f32.mrf.mxu0
      %v555 = vadd.f32 0.0, %v554
      %v556 = vpop.f32.mrf.mxu0
      %v557 = vadd.f32 0.0, %v556
      %558 = vmatmul.bf16.gmra.mxu0 %v487
      %v559 = vpop.f32.mrf.mxu0
      %v560 = vadd.f32 0.0, %v559
      %v561 = vpop.f32.mrf.mxu0
      %v562 = vadd.f32 0.0, %v561
      %563 = vmatmul.bf16.gmra.mxu0 %v490
      %v564 = vpop.f32.mrf.mxu0
      %v565 = vadd.f32 0.0, %v564
      %v566 = vpop.f32.mrf.mxu0
      %v567 = vadd.f32 0.0, %v566
      %568 = vmatmul.bf16.gmra.mxu0 %v493
      %v569 = vpop.f32.mrf.mxu0
      %v570 = vadd.f32 0.0, %v569
      %v571 = vpop.f32.mrf.mxu0
      %v572 = vadd.f32 0.0, %v571
      %573 = vmatmul.bf16.gmra.mxu0 %v496
      %v574 = vpop.f32.mrf.mxu0
      %v575 = vadd.f32 0.0, %v574
      %v576 = vpop.f32.mrf.mxu0
      %v577 = vadd.f32 0.0, %v576
      %578 = vmatmul.bf16.gmra.mxu0 %v499
      %v579 = vpop.f32.mrf.mxu0
      %v580 = vadd.f32 0.0, %v579
      %v581 = vpop.f32.mrf.mxu0
      %v582 = vadd.f32 0.0, %v581
      %583 = vmatmul.bf16.gmra.mxu0 %v502
      %v584 = vpop.f32.mrf.mxu0
      %v585 = vadd.f32 0.0, %v584
      %v586 = vpop.f32.mrf.mxu0
      %v587 = vadd.f32 0.0, %v586
      %588 = vmatmul.bf16.gmra.mxu0 %v505
      %v589 = vpop.f32.mrf.mxu0
      %v590 = vadd.f32 0.0, %v589
      %v591 = vpop.f32.mrf.mxu0
      %v592 = vadd.f32 0.0, %v591
      %593 = vmatmul.bf16.gmra.mxu0 %v508
      %v594 = vpop.f32.mrf.mxu0
      %v595 = vadd.f32 0.0, %v594
      %v596 = vpop.f32.mrf.mxu0
      %v597 = vadd.f32 0.0, %v596
      %598 = vdwg.mxu0
      %v599 = vadd.f32 %v285, %v520
      %v600 = vadd.f32 %v286, %v522
      %v601 = vadd.f32 %v287, %v525
      %v602 = vadd.f32 %v288, %v527
      %v603 = vadd.f32 %v289, %v530
      %v604 = vadd.f32 %v290, %v532
      %v605 = vadd.f32 %v291, %v535
      %v606 = vadd.f32 %v292, %v537
      %v607 = vadd.f32 %v293, %v540
      %v608 = vadd.f32 %v294, %v542
      %v609 = vadd.f32 %v295, %v545
      %v610 = vadd.f32 %v296, %v547
      %v611 = vadd.f32 %v297, %v550
      %v612 = vadd.f32 %v298, %v552
      %v613 = vadd.f32 %v299, %v555
      %v614 = vadd.f32 %v300, %v557
      %v615 = vadd.f32 %v301, %v560
      %v616 = vadd.f32 %v302, %v562
      %v617 = vadd.f32 %v303, %v565
      %v618 = vadd.f32 %v304, %v567
      %v619 = vadd.f32 %v305, %v570
      %v620 = vadd.f32 %v306, %v572
      %v621 = vadd.f32 %v307, %v575
      %v622 = vadd.f32 %v308, %v577
      %v623 = vadd.f32 %v309, %v580
      %v624 = vadd.f32 %v310, %v582
      %v625 = vadd.f32 %v311, %v585
      %v626 = vadd.f32 %v312, %v587
      %v627 = vadd.f32 %v313, %v590
      %v628 = vadd.f32 %v314, %v592
      %v629 = vadd.f32 %v315, %v595
      %v630 = vadd.f32 %v316, %v597
      %631 = vst [vmem:[#allocation2] sm:$0xff] %v599
      %632 = vst [vmem:[#allocation2 + $0x8] sm:$0xff] %v600
      %633 = vst [vmem:[#allocation2 + $0x10] sm:$0xff] %v601
      %634 = vst [vmem:[#allocation2 + $0x18] sm:$0xff] %v602
      %635 = vst [vmem:[#allocation2 + $0x20] sm:$0xff] %v603
      %636 = vst [vmem:[#allocation2 + $0x28] sm:$0xff] %v604
      %637 = vst [vmem:[#allocation2 + $0x30] sm:$0xff] %v605
      %638 = vst [vmem:[#allocation2 + $0x38] sm:$0xff] %v606
      %639 = vst [vmem:[#allocation2 + $0x40] sm:$0xff] %v607
      %640 = vst [vmem:[#allocation2 + $0x48] sm:$0xff] %v608
      %641 = vst [vmem:[#allocation2 + $0x50] sm:$0xff] %v609
      %642 = vst [vmem:[#allocation2 + $0x58] sm:$0xff] %v610
      %643 = vst [vmem:[#allocation2 + $0x60] sm:$0xff] %v611
      %644 = vst [vmem:[#allocation2 + $0x68] sm:$0xff] %v612
      %645 = vst [vmem:[#allocation2 + $0x70] sm:$0xff] %v613
      %646 = vst [vmem:[#allocation2 + $0x78] sm:$0xff] %v614
      %647 = vst [vmem:[#allocation2 + $0x80] sm:$0xff] %v615
      %648 = vst [vmem:[#allocation2 + $0x88] sm:$0xff] %v616
      %649 = vst [vmem:[#allocation2 + $0x90] sm:$0xff] %v617
      %650 = vst [vmem:[#allocation2 + $0x98] sm:$0xff] %v618
      %651 = vst [vmem:[#allocation2 + $0xa0] sm:$0xff] %v619
      %652 = vst [vmem:[#allocation2 + $0xa8] sm:$0xff] %v620
      %653 = vst [vmem:[#allocation2 + $0xb0] sm:$0xff] %v621
      %654 = vst [vmem:[#allocation2 + $0xb8] sm:$0xff] %v622
      %655 = vst [vmem:[#allocation2 + $0xc0] sm:$0xff] %v623
      %656 = vst [vmem:[#allocation2 + $0xc8] sm:$0xff] %v624
      %657 = vst [vmem:[#allocation2 + $0xd0] sm:$0xff] %v625
      %658 = vst [vmem:[#allocation2 + $0xd8] sm:$0xff] %v626
      %659 = vst [vmem:[#allocation2 + $0xe0] sm:$0xff] %v627
      %660 = vst [vmem:[#allocation2 + $0xe8] sm:$0xff] %v628
      %661 = vst [vmem:[#allocation2 + $0xf0] sm:$0xff] %v629
      %662 = vst [vmem:[#allocation2 + $0xf8] sm:$0xff] %v630
      // Predicated region
      $region37: #{basic_block_forward.8} parent=27 // pred_check
        %p663 = pneg %p242
      $region38: #{basic_block_forward.8} parent=27 // pred_check_branch
        %665 = sbr.rel (%p663) target = $region40
      $region39: #{basic_block_forward.8} parent=27 // pred_region
        %v666 = vld [vmem:[#allocation2] sm:$0xff]
        %v667 = vld [vmem:[#allocation2 + $0x8] sm:$0xff]
        %v668 = vld [vmem:[#allocation2 + $0x10] sm:$0xff]
        %v669 = vld [vmem:[#allocation2 + $0x18] sm:$0xff]
        %v670 = vld [vmem:[#allocation2 + $0x20] sm:$0xff]
        %v671 = vld [vmem:[#allocation2 + $0x28] sm:$0xff]
        %v672 = vld [vmem:[#allocation2 + $0x30] sm:$0xff]
        %v673 = vld [vmem:[#allocation2 + $0x38] sm:$0xff]
        %v674 = vld [vmem:[#allocation2 + $0x40] sm:$0xff]
        %v675 = vld [vmem:[#allocation2 + $0x48] sm:$0xff]
        %v676 = vld [vmem:[#allocation2 + $0x50] sm:$0xff]
        %v677 = vld [vmem:[#allocation2 + $0x58] sm:$0xff]
        %v678 = vld [vmem:[#allocation2 + $0x60] sm:$0xff]
        %v679 = vld [vmem:[#allocation2 + $0x68] sm:$0xff]
        %v680 = vld [vmem:[#allocation2 + $0x70] sm:$0xff]
        %v681 = vld [vmem:[#allocation2 + $0x78] sm:$0xff]
        %v682 = vld [vmem:[#allocation2 + $0x80] sm:$0xff]
        %v683 = vld [vmem:[#allocation2 + $0x88] sm:$0xff]
        %v684 = vld [vmem:[#allocation2 + $0x90] sm:$0xff]
        %v685 = vld [vmem:[#allocation2 + $0x98] sm:$0xff]
        %v686 = vld [vmem:[#allocation2 + $0xa0] sm:$0xff]
        %v687 = vld [vmem:[#allocation2 + $0xa8] sm:$0xff]
        %v688 = vld [vmem:[#allocation2 + $0xb0] sm:$0xff]
        %v689 = vld [vmem:[#allocation2 + $0xb8] sm:$0xff]
        %v690 = vld [vmem:[#allocation2 + $0xc0] sm:$0xff]
        %v691 = vld [vmem:[#allocation2 + $0xc8] sm:$0xff]
        %v692 = vld [vmem:[#allocation2 + $0xd0] sm:$0xff]
        %v693 = vld [vmem:[#allocation2 + $0xd8] sm:$0xff]
        %v694 = vld [vmem:[#allocation2 + $0xe0] sm:$0xff]
        %v695 = vld [vmem:[#allocation2 + $0xe8] sm:$0xff]
        %v696 = vld [vmem:[#allocation2 + $0xf0] sm:$0xff]
        %v697 = vld [vmem:[#allocation2 + $0xf8] sm:$0xff]
        %698 = vst [vmem:[%s239] sm:$0xff] %v666
        %699 = vst [vmem:[%s239 + $0x8] sm:$0xff] %v667
        %700 = vst [vmem:[%s239 + $0x10] sm:$0xff] %v668
        %701 = vst [vmem:[%s239 + $0x18] sm:$0xff] %v669
        %702 = vst [vmem:[%s239 + $0x20] sm:$0xff] %v670
        %703 = vst [vmem:[%s239 + $0x28] sm:$0xff] %v671
        %704 = vst [vmem:[%s239 + $0x30] sm:$0xff] %v672
        %705 = vst [vmem:[%s239 + $0x38] sm:$0xff] %v673
        %706 = vst [vmem:[%s239 + $0x40] sm:$0xff] %v674
        %707 = vst [vmem:[%s239 + $0x48] sm:$0xff] %v675
        %708 = vst [vmem:[%s239 + $0x50] sm:$0xff] %v676
        %709 = vst [vmem:[%s239 + $0x58] sm:$0xff] %v677
        %710 = vst [vmem:[%s239 + $0x60] sm:$0xff] %v678
        %711 = vst [vmem:[%s239 + $0x68] sm:$0xff] %v679
        %712 = vst [vmem:[%s239 + $0x70] sm:$0xff] %v680
        %713 = vst [vmem:[%s239 + $0x78] sm:$0xff] %v681
        %714 = vst [vmem:[%s239 + $0x80] sm:$0xff] %v682
        %715 = vst [vmem:[%s239 + $0x88] sm:$0xff] %v683
        %716 = vst [vmem:[%s239 + $0x90] sm:$0xff] %v684
        %717 = vst [vmem:[%s239 + $0x98] sm:$0xff] %v685
        %718 = vst [vmem:[%s239 + $0xa0] sm:$0xff] %v686
        %719 = vst [vmem:[%s239 + $0xa8] sm:$0xff] %v687
        %720 = vst [vmem:[%s239 + $0xb0] sm:$0xff] %v688
        %721 = vst [vmem:[%s239 + $0xb8] sm:$0xff] %v689
        %722 = vst [vmem:[%s239 + $0xc0] sm:$0xff] %v690
        %723 = vst [vmem:[%s239 + $0xc8] sm:$0xff] %v691
        %724 = vst [vmem:[%s239 + $0xd0] sm:$0xff] %v692
        %725 = vst [vmem:[%s239 + $0xd8] sm:$0xff] %v693
        %726 = vst [vmem:[%s239 + $0xe0] sm:$0xff] %v694
        %727 = vst [vmem:[%s239 + $0xe8] sm:$0xff] %v695
        %728 = vst [vmem:[%s239 + $0xf0] sm:$0xff] %v696
        %729 = vst [vmem:[%s239 + $0xf8] sm:$0xff] %v697
        %v730 = vld [vmem:[%s3] sm:$0x1]
        %v731 = vadd.f32 %v666, %v667
        %v732 = vadd.f32 %v731, %v668
        %v733 = vadd.f32 %v732, %v669
        %v734 = vadd.f32 %v733, %v670
        %v735 = vadd.f32 %v734, %v671
        %v736 = vadd.f32 %v735, %v672
        %v737 = vadd.f32 %v736, %v673
        %v738 = vadd.f32 %v737, %v674
        %v739 = vadd.f32 %v738, %v675
        %v740 = vadd.f32 %v739, %v676
        %v741 = vadd.f32 %v740, %v677
        %v742 = vadd.f32 %v741, %v678
        %v743 = vadd.f32 %v742, %v679
        %v744 = vadd.f32 %v743, %v680
        %v745 = vadd.f32 %v744, %v681
        %v746 = vadd.f32 %v745, %v682
        %v747 = vadd.f32 %v746, %v683
        %v748 = vadd.f32 %v747, %v684
        %v749 = vadd.f32 %v748, %v685
        %v750 = vadd.f32 %v749, %v686
        %v751 = vadd.f32 %v750, %v687
        %v752 = vadd.f32 %v751, %v688
        %v753 = vadd.f32 %v752, %v689
        %v754 = vadd.f32 %v753, %v690
        %v755 = vadd.f32 %v754, %v691
        %v756 = vadd.f32 %v755, %v692
        %v757 = vadd.f32 %v756, %v693
        %v758 = vadd.f32 %v757, %v694
        %v759 = vadd.f32 %v758, %v695
        %v760 = vadd.f32 %v759, %v696
        %v761 = vadd.f32 %v760, %v697
        %v762 = vrot.slane %v761, 4
        %v763 = vadd.f32 %v761, %v762
        %v764 = vrot.slane %v763, 2
        %v765 = vadd.f32 %v763, %v764
        %v766 = vrot.slane %v765, 1
        %v767 = vadd.f32 %v765, %v766
        %v768 = vadd.f32 %v730, %v767
        %769 = vst [vmem:[%s3] sm:$0x1] %v768
        %v770 = vld [vmem:[%s4] sm:$0x1]
        %v771 = vmul.f32 %v666, %v666
        %v772 = vmul.f32 %v667, %v667
        %v773 = vmul.f32 %v668, %v668
        %v774 = vmul.f32 %v669, %v669
        %v775 = vmul.f32 %v670, %v670
        %v776 = vmul.f32 %v671, %v671
        %v777 = vmul.f32 %v672, %v672
        %v778 = vmul.f32 %v673, %v673
        %v779 = vmul.f32 %v674, %v674
        %v780 = vmul.f32 %v675, %v675
        %v781 = vmul.f32 %v676, %v676
        %v782 = vmul.f32 %v677, %v677
        %v783 = vmul.f32 %v678, %v678
        %v784 = vmul.f32 %v679, %v679
        %v785 = vmul.f32 %v680, %v680
        %v786 = vmul.f32 %v681, %v681
        %v787 = vmul.f32 %v682, %v682
        %v788 = vmul.f32 %v683, %v683
        %v789 = vmul.f32 %v684, %v684
        %v790 = vmul.f32 %v685, %v685
        %v791 = vmul.f32 %v686, %v686
        %v792 = vmul.f32 %v687, %v687
        %v793 = vmul.f32 %v688, %v688
        %v794 = vmul.f32 %v689, %v689
        %v795 = vmul.f32 %v690, %v690
        %v796 = vmul.f32 %v691, %v691
        %v797 = vmul.f32 %v692, %v692
        %v798 = vmul.f32 %v693, %v693
        %v799 = vmul.f32 %v694, %v694
        %v800 = vmul.f32 %v695, %v695
        %v801 = vmul.f32 %v696, %v696
        %v802 = vmul.f32 %v697, %v697
        %v803 = vadd.f32 %v771, %v772
        %v804 = vadd.f32 %v803, %v773
        %v805 = vadd.f32 %v804, %v774
        %v806 = vadd.f32 %v805, %v775
        %v807 = vadd.f32 %v806, %v776
        %v808 = vadd.f32 %v807, %v777
        %v809 = vadd.f32 %v808, %v778
        %v810 = vadd.f32 %v809, %v779
        %v811 = vadd.f32 %v810, %v780
        %v812 = vadd.f32 %v811, %v781
        %v813 = vadd.f32 %v812, %v782
        %v814 = vadd.f32 %v813, %v783
        %v815 = vadd.f32 %v814, %v784
        %v816 = vadd.f32 %v815, %v785
        %v817 = vadd.f32 %v816, %v786
        %v818 = vadd.f32 %v817, %v787
        %v819 = vadd.f32 %v818, %v788
        %v820 = vadd.f32 %v819, %v789
        %v821 = vadd.f32 %v820, %v790
        %v822 = vadd.f32 %v821, %v791
        %v823 = vadd.f32 %v822, %v792
        %v824 = vadd.f32 %v823, %v793
        %v825 = vadd.f32 %v824, %v794
        %v826 = vadd.f32 %v825, %v795
        %v827 = vadd.f32 %v826, %v796
        %v828 = vadd.f32 %v827, %v797
        %v829 = vadd.f32 %v828, %v798
        %v830 = vadd.f32 %v829, %v799
        %v831 = vadd.f32 %v830, %v800
        %v832 = vadd.f32 %v831, %v801
        %v833 = vadd.f32 %v832, %v802
        %v834 = vrot.slane %v833, 4
        %v835 = vadd.f32 %v833, %v834
        %v836 = vrot.slane %v835, 2
        %v837 = vadd.f32 %v835, %v836
        %v838 = vrot.slane %v837, 1
        %v839 = vadd.f32 %v837, %v838
        %v840 = vadd.f32 %v770, %v839
        %841 = vst [vmem:[%s4] sm:$0x1] %v840
      $region40: #{basic_block_forward.8} parent=27 // pred_fallthru
        _
      %s842 = smul.u32 32, %s20
      %p843 = scmp.lt.s32.totalorder %s842, 63
      %s844 = scalar_select %p843, %s842, 63
      %s845 = smul.addr %s844, 8
      %s846 = scalar_lea.vmem %s2, %s845
      // Predicated region
      $region41: #{basic_block_forward.8} parent=27 // pred_check
        %p847 = pneg %p100
      $region42: #{basic_block_forward.8} parent=27 // pred_check_branch
        %849 = sbr.rel (%p847) target = $region44
      $region43: #{basic_block_forward.8} parent=27 // pred_region
        %s850 = smul.u32 32, %s20
      $region44: #{basic_block_forward.8} parent=27 // pred_fallthru
        _
      // Predicated region
      $region45: #{basic_block_forward.8} parent=27 // pred_check
        %p851 = pneg %p121
      $region46: #{basic_block_forward.8} parent=27 // pred_check_branch
        %853 = sbr.rel (%p851) target = $region48
      $region47: #{basic_block_forward.8} parent=27 // pred_region
        _
      $region48: #{basic_block_forward.8} parent=27 // pred_fallthru
        _
      // Predicated region
      $region49: #{basic_block_forward.8} parent=27 // pred_check
        %p854 = pneg %p142
      $region50: #{basic_block_forward.8} parent=27 // pred_check_branch
        %856 = sbr.rel (%p854) target = $region52
      $region51: #{basic_block_forward.8} parent=27 // pred_region
        _
      $region52: #{basic_block_forward.8} parent=27 // pred_fallthru
        _
      // Predicated region
      $region53: #{basic_block_forward.8} parent=27 // pred_check
        %p857 = pneg %p121
      $region54: #{basic_block_forward.8} parent=27 // pred_check_branch
        %859 = sbr.rel (%p857) target = $region56
      $region55: #{basic_block_forward.8} parent=27 // pred_region
        _
      $region56: #{basic_block_forward.8} parent=27 // pred_fallthru
        _
      // Predicated region
      $region57: #{basic_block_forward.8} parent=27 // pred_check
        %p860 = pneg %p142
      $region58: #{basic_block_forward.8} parent=27 // pred_check_branch
        %862 = sbr.rel (%p860) target = $region60
      $region59: #{basic_block_forward.8} parent=27 // pred_region
        _
      $region60: #{basic_block_forward.8} parent=27 // pred_fallthru
        _
    $region28: #{basic_block_forward.8} parent=5 // pred_fallthru
      _
    %p863 = scmp.le.s32.totalorder 2, %s11
    // Predicated region
    $region61: #{basic_block_forward.8} parent=5 // pred_check
      %p864 = pneg %p863
    $region62: #{basic_block_forward.8} parent=5 // pred_check_branch
      %866 = sbr.rel (%p864) target = $region64
    $region63: #{basic_block_forward.8} parent=5 // pred_region
      %s867 = ssub.s32 %s11, 2
      // Predicated region
      $region65: #{basic_block_forward.8} parent=63 // pred_check
        %p868 = pneg %p106
      $region66: #{basic_block_forward.8} parent=63 // pred_check_branch
        %870 = sbr.rel (%p868) target = $region68
      $region67: #{basic_block_forward.8} parent=63 // pred_region
        %s871 = smul.u32 32, %s22
        %p872 = scmp.lt.s32.totalorder %s871, 63
        %s873 = scalar_select %p872, %s871, 63
        %s874 = smul.addr %s873, 8
        %s875 = scalar_lea.vmem %s2, %s874
      $region68: #{basic_block_forward.8} parent=63 // pred_fallthru
        _
    $region64: #{basic_block_forward.8} parent=5 // pred_fallthru
      _
  $region6: #{basic_block_forward.8} parent=0 // loop_footer
    %s15 = sadd.s32 1, %s11
  $region7: #{basic_block_forward.8} parent=0 // loop_footer_branch
    %10 = sbr.rel target = $region3
  $region8: #{basic_block_forward.8} parent=0 // loop_exit
    _

// kernel: basic_block_forward.11
$region0: #{basic_block_forward.11}
  #allocation0 [shape = 'u32[]', space=smem, size = 0x4, offset = 0x4, fixed_abs, tag = 'smem constant byte address 0x4 - core index']
  #allocation1 [shape = 'u32[72,128]{1,0:T(1,128)}', space=vmem, size = 0x9000, scoped, tag = 'internal scratch']
  %s0 = inlined_call_operand.vmem [shape: f32[512,128], index: 0, kind: input, shape index: {}]
  %s1 = inlined_call_operand.vmem [shape: f32[1,128], index: 1, kind: input, shape index: {}]
  %s2 = inlined_call_operand.vmem [shape: f32[1,128], index: 2, kind: input, shape index: {}]
  %s3 = inlined_call_operand.vmem [shape: f32[1,128], index: 3, kind: input, shape index: {}]
  %s4 = inlined_call_operand.vmem [shape: f32[1,128], index: 4, kind: input, shape index: {}]
  %s5 = inlined_call_operand.vmem [shape: f32[512,128], index: 5, kind: input, shape index: {}]
  %s6 = inlined_call_operand.hbm [shape: f32[512,128], index: 6, kind: output, shape index: {}]
  %s7 = sld [smem:[#allocation0]]
  $region57: #{basic_block_forward.11} parent=0
    _
  %s9 = ssub.s32 1, %s7
  %s10 = scalar_select 0, %s9, %s7
  $region1: #{basic_block_forward.11} parent=0
    #allocation2 [shape = 'u8[262144]{0}', space=vmem, size = 0x40000, scoped, tag = 'output window, operand 0']
    #allocation3 [shape = 's32[2]{0}', space=sflag, size = 0x8, scoped, tag = 'scoped memory for basic_block_forward.11']
    %11 = vsyncpa [#allocation3], 0
    %s12 = scalar_lea.sflag [#allocation3], 1
    %13 = vsyncpa %s12, 0
    loop: start=0, step=1, limit=4
    $region2: #{basic_block_forward.11} parent=1 // loop_pre_header
      _
    $region3: #{basic_block_forward.11} parent=1 // loop_header
      %s15 = sphi 0, %s19
      %p16 = scmp.ge.s32.totalorder %s15, 4
      %s25 = sphi 0, %s27
      %s28 = sphi 0, %s25
      %s29 = sphi 0, %s28
      %s45 = sphi 0, %s29
      %s49 = sphi 0, %s49
      %s51 = sphi 0, %s49
      %s52 = sphi 0, %s51
      %s66 = sphi 0, %s52
      %s70 = sphi 0, %s70
      %s72 = sphi 0, %s70
      %s73 = sphi 0, %s72
      %s87 = sphi 0, %s73
      %s91 = sphi 0, %s91
      %s93 = sphi 0, %s91
      %s94 = sphi 0, %s93
      %s108 = sphi 0, %s94
      %s112 = sphi 0, %s112
      %s114 = sphi 0, %s112
      %s115 = sphi 0, %s114
      %s129 = sphi 0, %s115
      %s135 = sphi 0, %s137
      %s138 = sphi 0, %s135
      %s139 = sphi 0, %s138
      %s155 = sphi 0, %s139
      %s161 = sphi 0, %s163
      %s164 = sphi 0, %s161
      %s165 = sphi 0, %s164
      %s181 = sphi 0, %s165
    $region4: #{basic_block_forward.11} parent=1 // loop_header_branch
      %18 = sbr.rel (%p16) target = $region8
    $region5: #{basic_block_forward.11} parent=1 // loop_body
      %s20 = ssub.s32 %s15, 1
      %s21 = ssub.s32 %s15, 2
      %s22 = sadd.s32 %s15, 1
      %s23 = ssub.s32 %s15, %s22
      %p24 = scmp.eq.s32.totalorder %s23, 0
      %s26 = sadd.s32 %s25, 1
      %s27 = scalar_select %p24, %s25, %s26
      %p30 = pneg %p24
      %p31 = scmp.eq.s32.totalorder %s15, 1
      %p32 = por %p30, %p31
      %p33 = scmp.ne.s32.totalorder %s25, %s28
      %p34 = scmp.eq.s32.totalorder %s15, 0
      %p35 = por %p33, %p34
      %p36 = scmp.ne.s32.totalorder %s25, %s28
      %p37 = scmp.eq.s32.totalorder %s20, 1
      %p38 = por %p36, %p37
      %p39 = scmp.ne.s32.totalorder %s28, %s29
      %p40 = scmp.eq.s32.totalorder %s20, 0
      %p41 = por %p39, %p40
      %p42 = scmp.ne.s32.totalorder %s28, %s29
      %p43 = scmp.eq.s32.totalorder %s21, 1
      %p44 = por %p42, %p43
      %p46 = scmp.ne.s32.totalorder %s29, %s45
      %p47 = scmp.eq.s32.totalorder %s21, 0
      %p48 = por %p46, %p47
      %s50 = sadd.s32 %s49, 1
      %p53 = scmp.eq.s32.totalorder %s15, 1
      %p54 = scmp.ne.s32.totalorder %s49, %s51
      %p55 = scmp.eq.s32.totalorder %s15, 0
      %p56 = por %p54, %p55
      %p57 = scmp.ne.s32.totalorder %s49, %s51
      %p58 = scmp.eq.s32.totalorder %s20, 1
      %p59 = por %p57, %p58
      %p60 = scmp.ne.s32.totalorder %s51, %s52
      %p61 = scmp.eq.s32.totalorder %s20, 0
      %p62 = por %p60, %p61
      %p63 = scmp.ne.s32.totalorder %s51, %s52
      %p64 = scmp.eq.s32.totalorder %s21, 1
      %p65 = por %p63, %p64
      %p67 = scmp.ne.s32.totalorder %s52, %s66
      %p68 = scmp.eq.s32.totalorder %s21, 0
      %p69 = por %p67, %p68
      %s71 = sadd.s32 %s70, 1
      %p74 = scmp.eq.s32.totalorder %s15, 1
      %p75 = scmp.ne.s32.totalorder %s70, %s72
      %p76 = scmp.eq.s32.totalorder %s15, 0
      %p77 = por %p75, %p76
      %p78 = scmp.ne.s32.totalorder %s70, %s72
      %p79 = scmp.eq.s32.totalorder %s20, 1
      %p80 = por %p78, %p79
      %p81 = scmp.ne.s32.totalorder %s72, %s73
      %p82 = scmp.eq.s32.totalorder %s20, 0
      %p83 = por %p81, %p82
      %p84 = scmp.ne.s32.totalorder %s72, %s73
      %p85 = scmp.eq.s32.totalorder %s21, 1
      %p86 = por %p84, %p85
      %p88 = scmp.ne.s32.totalorder %s73, %s87
      %p89 = scmp.eq.s32.totalorder %s21, 0
      %p90 = por %p88, %p89
      %s92 = sadd.s32 %s91, 1
      %p95 = scmp.eq.s32.totalorder %s15, 1
      %p96 = scmp.ne.s32.totalorder %s91, %s93
      %p97 = scmp.eq.s32.totalorder %s15, 0
      %p98 = por %p96, %p97
      %p99 = scmp.ne.s32.totalorder %s91, %s93
      %p100 = scmp.eq.s32.totalorder %s20, 1
      %p101 = por %p99, %p100
      %p102 = scmp.ne.s32.totalorder %s93, %s94
      %p103 = scmp.eq.s32.totalorder %s20, 0
      %p104 = por %p102, %p103
      %p105 = scmp.ne.s32.totalorder %s93, %s94
      %p106 = scmp.eq.s32.totalorder %s21, 1
      %p107 = por %p105, %p106
      %p109 = scmp.ne.s32.totalorder %s94, %s108
      %p110 = scmp.eq.s32.totalorder %s21, 0
      %p111 = por %p109, %p110
      %s113 = sadd.s32 %s112, 1
      %p116 = scmp.eq.s32.totalorder %s15, 1
      %p117 = scmp.ne.s32.totalorder %s112, %s114
      %p118 = scmp.eq.s32.totalorder %s15, 0
      %p119 = por %p117, %p118
      %p120 = scmp.ne.s32.totalorder %s112, %s114
      %p121 = scmp.eq.s32.totalorder %s20, 1
      %p122 = por %p120, %p121
      %p123 = scmp.ne.s32.totalorder %s114, %s115
      %p124 = scmp.eq.s32.totalorder %s20, 0
      %p125 = por %p123, %p124
      %p126 = scmp.ne.s32.totalorder %s114, %s115
      %p127 = scmp.eq.s32.totalorder %s21, 1
      %p128 = por %p126, %p127
      %p130 = scmp.ne.s32.totalorder %s115, %s129
      %p131 = scmp.eq.s32.totalorder %s21, 0
      %p132 = por %p130, %p131
      %s133 = ssub.s32 %s15, %s22
      %p134 = scmp.eq.s32.totalorder %s133, 0
      %s136 = sadd.s32 %s135, 1
      %s137 = scalar_select %p134, %s135, %s136
      %p140 = pneg %p134
      %p141 = scmp.eq.s32.totalorder %s15, 1
      %p142 = por %p140, %p141
      %p143 = scmp.ne.s32.totalorder %s135, %s138
      %p144 = scmp.eq.s32.totalorder %s15, 0
      %p145 = por %p143, %p144
      %p146 = scmp.ne.s32.totalorder %s135, %s138
      %p147 = scmp.eq.s32.totalorder %s20, 1
      %p148 = por %p146, %p147
      %p149 = scmp.ne.s32.totalorder %s138, %s139
      %p150 = scmp.eq.s32.totalorder %s20, 0
      %p151 = por %p149, %p150
      %p152 = scmp.ne.s32.totalorder %s138, %s139
      %p153 = scmp.eq.s32.totalorder %s21, 1
      %p154 = por %p152, %p153
      %p156 = scmp.ne.s32.totalorder %s139, %s155
      %p157 = scmp.eq.s32.totalorder %s21, 0
      %p158 = por %p156, %p157
      %s159 = ssub.s32 %s15, %s22
      %p160 = scmp.eq.s32.totalorder %s159, 0
      %s162 = sadd.s32 %s161, 1
      %s163 = scalar_select %p160, %s161, %s162
      %p166 = pneg %p160
      %p167 = scmp.eq.s32.totalorder %s15, 1
      %p168 = por %p166, %p167
      %p169 = scmp.ne.s32.totalorder %s161, %s164
      %p170 = scmp.eq.s32.totalorder %s15, 0
      %p171 = por %p169, %p170
      %p172 = scmp.ne.s32.totalorder %s161, %s164
      %p173 = scmp.eq.s32.totalorder %s20, 1
      %p174 = por %p172, %p173
      %p175 = scmp.ne.s32.totalorder %s164, %s165
      %p176 = scmp.eq.s32.totalorder %s20, 0
      %p177 = por %p175, %p176
      %p178 = scmp.ne.s32.totalorder %s164, %s165
      %p179 = scmp.eq.s32.totalorder %s21, 1
      %p180 = por %p178, %p179
      %p182 = scmp.ne.s32.totalorder %s165, %s181
      %p183 = scmp.eq.s32.totalorder %s21, 0
      %p184 = por %p182, %p183
      %p185 = scmp.le.s32.totalorder 1, %s15
      %p186 = scmp.lt.s32.totalorder %s15, 3
      %p187 = pnand %p185, %p186
      %p188 = pneg %p187
      // Predicated region
      $region9: #{basic_block_forward.11} parent=5 // pred_check
        _
      $region10: #{basic_block_forward.11} parent=5 // pred_check_branch
        %190 = sbr.rel (%p187) target = $region12
      $region11: #{basic_block_forward.11} parent=5 // pred_region
        %s191 = ssub.s32 %s15, 1
        // Predicated region
        $region13: #{basic_block_forward.11} parent=11 // pred_check
          %p192 = pneg %p62
        $region14: #{basic_block_forward.11} parent=11 // pred_check_branch
          %194 = sbr.rel (%p192) target = $region16
        $region15: #{basic_block_forward.11} parent=11 // pred_region
          _
        $region16: #{basic_block_forward.11} parent=11 // pred_fallthru
          _
        // Predicated region
        $region17: #{basic_block_forward.11} parent=11 // pred_check
          %p195 = pneg %p83
        $region18: #{basic_block_forward.11} parent=11 // pred_check_branch
          %197 = sbr.rel (%p195) target = $region20
        $region19: #{basic_block_forward.11} parent=11 // pred_region
          _
        $region20: #{basic_block_forward.11} parent=11 // pred_fallthru
          _
        // Predicated region
        $region21: #{basic_block_forward.11} parent=11 // pred_check
          %p198 = pneg %p104
        $region22: #{basic_block_forward.11} parent=11 // pred_check_branch
          %200 = sbr.rel (%p198) target = $region24
        $region23: #{basic_block_forward.11} parent=11 // pred_region
          _
        $region24: #{basic_block_forward.11} parent=11 // pred_fallthru
          _
        // Predicated region
        $region25: #{basic_block_forward.11} parent=11 // pred_check
          %p201 = pneg %p125
        $region26: #{basic_block_forward.11} parent=11 // pred_check_branch
          %203 = sbr.rel (%p201) target = $region28
        $region27: #{basic_block_forward.11} parent=11 // pred_region
          _
        $region28: #{basic_block_forward.11} parent=11 // pred_fallthru
          _
      $region12: #{basic_block_forward.11} parent=5 // pred_fallthru
        _
      %p204 = scmp.lt.s32.totalorder %s15, 2
      // Predicated region
      $region29: #{basic_block_forward.11} parent=5 // pred_check
        %p205 = pneg %p204
      $region30: #{basic_block_forward.11} parent=5 // pred_check_branch
        %207 = sbr.rel (%p205) target = $region32
      $region31: #{basic_block_forward.11} parent=5 // pred_region
        // Predicated region
        $region33: #{basic_block_forward.11} parent=31 // pred_check
          %p208 = pneg %p35
        $region34: #{basic_block_forward.11} parent=31 // pred_check_branch
          %210 = sbr.rel (%p208) target = $region36
        $region35: #{basic_block_forward.11} parent=31 // pred_region
          %s211 = smul.u32 32, %s15
          %p212 = scmp.lt.s32.totalorder %s211, 63
          %s213 = scalar_select %p212, %s211, 63
          %s214 = smul.addr %s213, 8
          %s215 = scalar_lea.vmem %s0, %s214
          %s216 = smul.u32 32, %s15
        $region36: #{basic_block_forward.11} parent=31 // pred_fallthru
          _
        // Predicated region
        $region37: #{basic_block_forward.11} parent=31 // pred_check
          %p217 = pneg %p145
        $region38: #{basic_block_forward.11} parent=31 // pred_check_branch
          %219 = sbr.rel (%p217) target = $region40
        $region39: #{basic_block_forward.11} parent=31 // pred_region
          %s220 = smul.u32 32, %s15
          %p221 = scmp.lt.s32.totalorder %s220, 63
          %s222 = scalar_select %p221, %s220, 63
          %s223 = smul.addr %s222, 8
          %s224 = scalar_lea.vmem %s5, %s223
          %s225 = smul.u32 32, %s15
        $region40: #{basic_block_forward.11} parent=31 // pred_fallthru
          _
      $region32: #{basic_block_forward.11} parent=5 // pred_fallthru
        _
      %p226 = scmp.le.s32.totalorder 1, %s15
      %p227 = scmp.lt.s32.totalorder %s15, 3
      %p228 = pnand %p226, %p227
      %p229 = pneg %p228
      // Predicated region
      $region41: #{basic_block_forward.11} parent=5 // pred_check
        _
      $region42: #{basic_block_forward.11} parent=5 // pred_check_branch
        %231 = sbr.rel (%p228) target = $region44
      $region43: #{basic_block_forward.11} parent=5 // pred_region
        %s232 = ssub.s32 %s15, 1
        %s233 = smul.u32 32, %s20
        %p234 = scmp.lt.s32.totalorder %s233, 63
        %s235 = scalar_select %p234, %s233, 63
        %s236 = smul.addr %s235, 8
        %s237 = scalar_lea.vmem %s0, %s236
        %p238 = pneg %p41
        %p239 = pneg %p38
        %p240 = pneg %p62
        %p241 = pneg %p59
        %p242 = pneg %p83
        %p243 = pneg %p80
        %p244 = pneg %p104
        %p245 = pneg %p101
        %p246 = pneg %p125
        %p247 = pneg %p122
        %s248 = smul.u32 32, %s20
        %p249 = scmp.lt.s32.totalorder %s248, 63
        %s250 = scalar_select %p249, %s248, 63
        %s251 = smul.addr %s250, 8
        %s252 = scalar_lea.vmem %s5, %s251
        %p253 = pneg %p151
        %p254 = pneg %p148
        %p255 = pneg %p177
        %p256 = pneg %p174
        %s257 = sand.u32 %s164, 1
        %s258 = scalar_lea.sflag [#allocation3], %s257
        %s259 = sand.u32 %s164, 1
        %s260 = smul.addr %s259, 256
        %s261 = scalar_lea.vmem [#allocation2], %s260
        %s262 = smul.u32 32, %s20
        %p263 = scmp.lt.s32.totalorder %s262, 63
        %s264 = scalar_select %p263, %s262, 63
        %s265 = smul.addr %s264, 8
        %s266 = scalar_lea.vmem %s0, %s265
        %s267 = smul.u32 32, %s20
        %s268 = smul.u32 32, %s20
        %p269 = scmp.lt.s32.totalorder %s268, 63
        %s270 = scalar_select %p269, %s268, 63
        %s271 = smul.addr %s270, 8
        %s272 = scalar_lea.vmem %s5, %s271
        %s273 = smul.u32 32, %s20
        %s274 = smul.u32 32, %s20
        %v275 = vld [vmem:[%s1] sm:$0x1]
        %v276 = vmul.f32 %v275, 0.001953125
        %v277 = vld [vmem:[%s2] sm:$0x1]
        %v278 = vmul.f32 %v277, 0.001953125
        %v279 = vmul.f32 %v276, %v276
        %v280 = vsub.f32 %v278, %v279
        %v281 = vmax.f32 %v280, 0.0
        %v282 = vld [vmem:[%s3] sm:$0x1]
        %v283 = vadd.f32 %v281, 1e-05
        %v284 = vrsqrt.pop %v283
        %v285 = vmul.f32 %v284, %v283
        %v286 = vmul.f32 %v285, %v284
        %v287 = vmul.f32 0.5, %v286
        %v288 = vsub.f32 1.5, %v287
        %v289 = vmul.f32 %v284, %v288
        %vm290 = vweird.f32 %v283
        %vm291 = vweird.f32 %v284
        %vm292 = vmor %vm290, %vm291
        %v293 = vsel %vm292, %v284, %v289
        %v294 = vmul.f32 %v282, %v293
        %v295 = vld [vmem:[%s266] sm:$0xff]
        %v296 = vld [vmem:[%s266 + $0x8] sm:$0xff]
        %v297 = vld [vmem:[%s266 + $0x10] sm:$0xff]
        %v298 = vld [vmem:[%s266 + $0x18] sm:$0xff]
        %v299 = vld [vmem:[%s266 + $0x20] sm:$0xff]
        %v300 = vld [vmem:[%s266 + $0x28] sm:$0xff]
        %v301 = vld [vmem:[%s266 + $0x30] sm:$0xff]
        %v302 = vld [vmem:[%s266 + $0x38] sm:$0xff]
        %v303 = vld [vmem:[%s266 + $0x40] sm:$0xff]
        %v304 = vld [vmem:[%s266 + $0x48] sm:$0xff]
        %v305 = vld [vmem:[%s266 + $0x50] sm:$0xff]
        %v306 = vld [vmem:[%s266 + $0x58] sm:$0xff]
        %v307 = vld [vmem:[%s266 + $0x60] sm:$0xff]
        %v308 = vld [vmem:[%s266 + $0x68] sm:$0xff]
        %v309 = vld [vmem:[%s266 + $0x70] sm:$0xff]
        %v310 = vld [vmem:[%s266 + $0x78] sm:$0xff]
        %v311 = vld [vmem:[%s266 + $0x80] sm:$0xff]
        %v312 = vld [vmem:[%s266 + $0x88] sm:$0xff]
        %v313 = vld [vmem:[%s266 + $0x90] sm:$0xff]
        %v314 = vld [vmem:[%s266 + $0x98] sm:$0xff]
        %v315 = vld [vmem:[%s266 + $0xa0] sm:$0xff]
        %v316 = vld [vmem:[%s266 + $0xa8] sm:$0xff]
        %v317 = vld [vmem:[%s266 + $0xb0] sm:$0xff]
        %v318 = vld [vmem:[%s266 + $0xb8] sm:$0xff]
        %v319 = vld [vmem:[%s266 + $0xc0] sm:$0xff]
        %v320 = vld [vmem:[%s266 + $0xc8] sm:$0xff]
        %v321 = vld [vmem:[%s266 + $0xd0] sm:$0xff]
        %v322 = vld [vmem:[%s266 + $0xd8] sm:$0xff]
        %v323 = vld [vmem:[%s266 + $0xe0] sm:$0xff]
        %v324 = vld [vmem:[%s266 + $0xe8] sm:$0xff]
        %v325 = vld [vmem:[%s266 + $0xf0] sm:$0xff]
        %v326 = vld [vmem:[%s266 + $0xf8] sm:$0xff]
        %v328 = vperm.slane %v276, 0
        %v330 = vsub.f32 %v295, %v328
        %v331 = vsub.f32 %v296, %v328
        %v332 = vsub.f32 %v297, %v328
        %v333 = vsub.f32 %v298, %v328
        %v334 = vsub.f32 %v299, %v328
        %v335 = vsub.f32 %v300, %v328
        %v336 = vsub.f32 %v301, %v328
        %v337 = vsub.f32 %v302, %v328
        %v338 = vsub.f32 %v303, %v328
        %v339 = vsub.f32 %v304, %v328
        %v340 = vsub.f32 %v305, %v328
        %v341 = vsub.f32 %v306, %v328
        %v342 = vsub.f32 %v307, %v328
        %v343 = vsub.f32 %v308, %v328
        %v344 = vsub.f32 %v309, %v328
        %v345 = vsub.f32 %v310, %v328
        %v346 = vsub.f32 %v311, %v328
        %v347 = vsub.f32 %v312, %v328
        %v348 = vsub.f32 %v313, %v328
        %v349 = vsub.f32 %v314, %v328
        %v350 = vsub.f32 %v315, %v328
        %v351 = vsub.f32 %v316, %v328
        %v352 = vsub.f32 %v317, %v328
        %v353 = vsub.f32 %v318, %v328
        %v354 = vsub.f32 %v319, %v328
        %v355 = vsub.f32 %v320, %v328
        %v356 = vsub.f32 %v321, %v328
        %v357 = vsub.f32 %v322, %v328
        %v358 = vsub.f32 %v323, %v328
        %v359 = vsub.f32 %v324, %v328
        %v360 = vsub.f32 %v325, %v328
        %v361 = vsub.f32 %v326, %v328
        %v363 = vperm.slane %v294, 0
        %v365 = vmul.f32 %v330, %v363
        %v366 = vmul.f32 %v331, %v363
        %v367 = vmul.f32 %v332, %v363
        %v368 = vmul.f32 %v333, %v363
        %v369 = vmul.f32 %v334, %v363
        %v370 = vmul.f32 %v335, %v363
        %v371 = vmul.f32 %v336, %v363
        %v372 = vmul.f32 %v337, %v363
        %v373 = vmul.f32 %v338, %v363
        %v374 = vmul.f32 %v339, %v363
        %v375 = vmul.f32 %v340, %v363
        %v376 = vmul.f32 %v341, %v363
        %v377 = vmul.f32 %v342, %v363
        %v378 = vmul.f32 %v343, %v363
        %v379 = vmul.f32 %v344, %v363
        %v380 = vmul.f32 %v345, %v363
        %v381 = vmul.f32 %v346, %v363
        %v382 = vmul.f32 %v347, %v363
        %v383 = vmul.f32 %v348, %v363
        %v384 = vmul.f32 %v349, %v363
        %v385 = vmul.f32 %v350, %v363
        %v386 = vmul.f32 %v351, %v363
        %v387 = vmul.f32 %v352, %v363
        %v388 = vmul.f32 %v353, %v363
        %v389 = vmul.f32 %v354, %v363
        %v390 = vmul.f32 %v355, %v363
        %v391 = vmul.f32 %v356, %v363
        %v392 = vmul.f32 %v357, %v363
        %v393 = vmul.f32 %v358, %v363
        %v394 = vmul.f32 %v359, %v363
        %v395 = vmul.f32 %v360, %v363
        %v396 = vmul.f32 %v361, %v363
        %v397 = vld [vmem:[%s4] sm:$0x1]
        %v399 = vperm.slane %v397, 0
        %v401 = vadd.f32 %v365, %v399
        %v402 = vadd.f32 %v366, %v399
        %v403 = vadd.f32 %v367, %v399
        %v404 = vadd.f32 %v368, %v399
        %v405 = vadd.f32 %v369, %v399
        %v406 = vadd.f32 %v370, %v399
        %v407 = vadd.f32 %v371, %v399
        %v408 = vadd.f32 %v372, %v399
        %v409 = vadd.f32 %v373, %v399
        %v410 = vadd.f32 %v374, %v399
        %v411 = vadd.f32 %v375, %v399
        %v412 = vadd.f32 %v376, %v399
        %v413 = vadd.f32 %v377, %v399
        %v414 = vadd.f32 %v378, %v399
        %v415 = vadd.f32 %v379, %v399
        %v416 = vadd.f32 %v380, %v399
        %v417 = vadd.f32 %v381, %v399
        %v418 = vadd.f32 %v382, %v399
        %v419 = vadd.f32 %v383, %v399
        %v420 = vadd.f32 %v384, %v399
        %v421 = vadd.f32 %v385, %v399
        %v422 = vadd.f32 %v386, %v399
        %v423 = vadd.f32 %v387, %v399
        %v424 = vadd.f32 %v388, %v399
        %v425 = vadd.f32 %v389, %v399
        %v426 = vadd.f32 %v390, %v399
        %v427 = vadd.f32 %v391, %v399
        %v428 = vadd.f32 %v392, %v399
        %v429 = vadd.f32 %v393, %v399
        %v430 = vadd.f32 %v394, %v399
        %v431 = vadd.f32 %v395, %v399
        %v432 = vadd.f32 %v396, %v399
        %v433 = vld [vmem:[%s272] sm:$0xff]
        %v434 = vld [vmem:[%s272 + $0x8] sm:$0xff]
        %v435 = vld [vmem:[%s272 + $0x10] sm:$0xff]
        %v436 = vld [vmem:[%s272 + $0x18] sm:$0xff]
        %v437 = vld [vmem:[%s272 + $0x20] sm:$0xff]
        %v438 = vld [vmem:[%s272 + $0x28] sm:$0xff]
        %v439 = vld [vmem:[%s272 + $0x30] sm:$0xff]
        %v440 = vld [vmem:[%s272 + $0x38] sm:$0xff]
        %v441 = vld [vmem:[%s272 + $0x40] sm:$0xff]
        %v442 = vld [vmem:[%s272 + $0x48] sm:$0xff]
        %v443 = vld [vmem:[%s272 + $0x50] sm:$0xff]
        %v444 = vld [vmem:[%s272 + $0x58] sm:$0xff]
        %v445 = vld [vmem:[%s272 + $0x60] sm:$0xff]
        %v446 = vld [vmem:[%s272 + $0x68] sm:$0xff]
        %v447 = vld [vmem:[%s272 + $0x70] sm:$0xff]
        %v448 = vld [vmem:[%s272 + $0x78] sm:$0xff]
        %v449 = vld [vmem:[%s272 + $0x80] sm:$0xff]
        %v450 = vld [vmem:[%s272 + $0x88] sm:$0xff]
        %v451 = vld [vmem:[%s272 + $0x90] sm:$0xff]
        %v452 = vld [vmem:[%s272 + $0x98] sm:$0xff]
        %v453 = vld [vmem:[%s272 + $0xa0] sm:$0xff]
        %v454 = vld [vmem:[%s272 + $0xa8] sm:$0xff]
        %v455 = vld [vmem:[%s272 + $0xb0] sm:$0xff]
        %v456 = vld [vmem:[%s272 + $0xb8] sm:$0xff]
        %v457 = vld [vmem:[%s272 + $0xc0] sm:$0xff]
        %v458 = vld [vmem:[%s272 + $0xc8] sm:$0xff]
        %v459 = vld [vmem:[%s272 + $0xd0] sm:$0xff]
        %v460 = vld [vmem:[%s272 + $0xd8] sm:$0xff]
        %v461 = vld [vmem:[%s272 + $0xe0] sm:$0xff]
        %v462 = vld [vmem:[%s272 + $0xe8] sm:$0xff]
        %v463 = vld [vmem:[%s272 + $0xf0] sm:$0xff]
        %v464 = vld [vmem:[%s272 + $0xf8] sm:$0xff]
        %v465 = vadd.f32 %v401, %v433
        %v466 = vadd.f32 %v402, %v434
        %v467 = vadd.f32 %v403, %v435
        %v468 = vadd.f32 %v404, %v436
        %v469 = vadd.f32 %v405, %v437
        %v470 = vadd.f32 %v406, %v438
        %v471 = vadd.f32 %v407, %v439
        %v472 = vadd.f32 %v408, %v440
        %v473 = vadd.f32 %v409, %v441
        %v474 = vadd.f32 %v410, %v442
        %v475 = vadd.f32 %v411, %v443
        %v476 = vadd.f32 %v412, %v444
        %v477 = vadd.f32 %v413, %v445
        %v478 = vadd.f32 %v414, %v446
        %v479 = vadd.f32 %v415, %v447
        %v480 = vadd.f32 %v416, %v448
        %v481 = vadd.f32 %v417, %v449
        %v482 = vadd.f32 %v418, %v450
        %v483 = vadd.f32 %v419, %v451
        %v484 = vadd.f32 %v420, %v452
        %v485 = vadd.f32 %v421, %v453
        %v486 = vadd.f32 %v422, %v454
        %v487 = vadd.f32 %v423, %v455
        %v488 = vadd.f32 %v424, %v456
        %v489 = vadd.f32 %v425, %v457
        %v490 = vadd.f32 %v426, %v458
        %v491 = vadd.f32 %v427, %v459
        %v492 = vadd.f32 %v428, %v460
        %v493 = vadd.f32 %v429, %v461
        %v494 = vadd.f32 %v430, %v462
        %v495 = vadd.f32 %v431, %v463
        %v496 = vadd.f32 %v432, %v464
        %v497 = vmax.f32 %v465, 0.0
        %v498 = vmax.f32 %v466, 0.0
        %v499 = vmax.f32 %v467, 0.0
        %v500 = vmax.f32 %v468, 0.0
        %v501 = vmax.f32 %v469, 0.0
        %v502 = vmax.f32 %v470, 0.0
        %v503 = vmax.f32 %v471, 0.0
        %v504 = vmax.f32 %v472, 0.0
        %v505 = vmax.f32 %v473, 0.0
        %v506 = vmax.f32 %v474, 0.0
        %v507 = vmax.f32 %v475, 0.0
        %v508 = vmax.f32 %v476, 0.0
        %v509 = vmax.f32 %v477, 0.0
        %v510 = vmax.f32 %v478, 0.0
        %v511 = vmax.f32 %v479, 0.0
        %v512 = vmax.f32 %v480, 0.0
        %v513 = vmax.f32 %v481, 0.0
        %v514 = vmax.f32 %v482, 0.0
        %v515 = vmax.f32 %v483, 0.0
        %v516 = vmax.f32 %v484, 0.0
        %v517 = vmax.f32 %v485, 0.0
        %v518 = vmax.f32 %v486, 0.0
        %v519 = vmax.f32 %v487, 0.0
        %v520 = vmax.f32 %v488, 0.0
        %v521 = vmax.f32 %v489, 0.0
        %v522 = vmax.f32 %v490, 0.0
        %v523 = vmax.f32 %v491, 0.0
        %v524 = vmax.f32 %v492, 0.0
        %v525 = vmax.f32 %v493, 0.0
        %v526 = vmax.f32 %v494, 0.0
        %v527 = vmax.f32 %v495, 0.0
        %v528 = vmax.f32 %v496, 0.0
        %529 = vst [vmem:[%s261] sm:$0xff] %v497
        %530 = vst [vmem:[%s261 + $0x8] sm:$0xff] %v498
        %531 = vst [vmem:[%s261 + $0x10] sm:$0xff] %v499
        %532 = vst [vmem:[%s261 + $0x18] sm:$0xff] %v500
        %533 = vst [vmem:[%s261 + $0x20] sm:$0xff] %v501
        %534 = vst [vmem:[%s261 + $0x28] sm:$0xff] %v502
        %535 = vst [vmem:[%s261 + $0x30] sm:$0xff] %v503
        %536 = vst [vmem:[%s261 + $0x38] sm:$0xff] %v504
        %537 = vst [vmem:[%s261 + $0x40] sm:$0xff] %v505
        %538 = vst [vmem:[%s261 + $0x48] sm:$0xff] %v506
        %539 = vst [vmem:[%s261 + $0x50] sm:$0xff] %v507
        %540 = vst [vmem:[%s261 + $0x58] sm:$0xff] %v508
        %541 = vst [vmem:[%s261 + $0x60] sm:$0xff] %v509
        %542 = vst [vmem:[%s261 + $0x68] sm:$0xff] %v510
        %543 = vst [vmem:[%s261 + $0x70] sm:$0xff] %v511
        %544 = vst [vmem:[%s261 + $0x78] sm:$0xff] %v512
        %545 = vst [vmem:[%s261 + $0x80] sm:$0xff] %v513
        %546 = vst [vmem:[%s261 + $0x88] sm:$0xff] %v514
        %547 = vst [vmem:[%s261 + $0x90] sm:$0xff] %v515
        %548 = vst [vmem:[%s261 + $0x98] sm:$0xff] %v516
        %549 = vst [vmem:[%s261 + $0xa0] sm:$0xff] %v517
        %550 = vst [vmem:[%s261 + $0xa8] sm:$0xff] %v518
        %551 = vst [vmem:[%s261 + $0xb0] sm:$0xff] %v519
        %552 = vst [vmem:[%s261 + $0xb8] sm:$0xff] %v520
        %553 = vst [vmem:[%s261 + $0xc0] sm:$0xff] %v521
        %554 = vst [vmem:[%s261 + $0xc8] sm:$0xff] %v522
        %555 = vst [vmem:[%s261 + $0xd0] sm:$0xff] %v523
        %556 = vst [vmem:[%s261 + $0xd8] sm:$0xff] %v524
        %557 = vst [vmem:[%s261 + $0xe0] sm:$0xff] %v525
        %558 = vst [vmem:[%s261 + $0xe8] sm:$0xff] %v526
        %559 = vst [vmem:[%s261 + $0xf0] sm:$0xff] %v527
        %560 = vst [vmem:[%s261 + $0xf8] sm:$0xff] %v528
        %s561 = sand.u32 %s164, 1
        %s562 = scalar_lea.sflag [#allocation3], %s561
        %s563 = sand.u32 %s164, 1
        %s564 = smul.addr %s563, 256
        %s565 = scalar_lea.vmem [#allocation2], %s564
        // Predicated region
        $region45: #{basic_block_forward.11} parent=43 // pred_check
          %p566 = pneg %p174
        $region46: #{basic_block_forward.11} parent=43 // pred_check_branch
          %568 = sbr.rel (%p566) target = $region48
        $region47: #{basic_block_forward.11} parent=43 // pred_region
          %s569 = smul.u32 32, %s20
          %571 = vsyncadd %s562, 0
          %s572 = smul.addr %s569, 8
          %s573 = scalar_lea.hbm %s6, %s572
          %s574 = sshll.u32 %s565, 4
          %s575 = int_to_ptr.vmem [resolvable:$true] %s574
          %s576 = sshll.u32 %s573, 4
          %s577 = int_to_ptr.hbm [resolvable:$true] %s576
          %582 = dma.vmem_to_hbm [thread:$0]  %s575, 4096, %s577, %s562, 128, 128, 8
        $region48: #{basic_block_forward.11} parent=43 // pred_fallthru
          _
      $region44: #{basic_block_forward.11} parent=5 // pred_fallthru
        _
      %p583 = scmp.le.s32.totalorder 2, %s15
      // Predicated region
      $region49: #{basic_block_forward.11} parent=5 // pred_check
        %p584 = pneg %p583
      $region50: #{basic_block_forward.11} parent=5 // pred_check_branch
        %586 = sbr.rel (%p584) target = $region52
      $region51: #{basic_block_forward.11} parent=5 // pred_region
        %s587 = ssub.s32 %s15, 2
        // Predicated region
        $region53: #{basic_block_forward.11} parent=51 // pred_check
          %p588 = pneg %p180
        $region54: #{basic_block_forward.11} parent=51 // pred_check_branch
          %590 = sbr.rel (%p588) target = $region56
        $region55: #{basic_block_forward.11} parent=51 // pred_region
          %s591 = sand.u32 %s165, 1
          %s592 = scalar_lea.sflag [#allocation3], %s591
          %s593 = sand.u32 %s165, 1
          %s594 = smul.addr %s593, 256
          %s595 = scalar_lea.vmem [#allocation2], %s594
          %597 = dma.done %s592, 4096
        $region56: #{basic_block_forward.11} parent=51 // pred_fallthru
          _
      $region52: #{basic_block_forward.11} parent=5 // pred_fallthru
        _
    $region6: #{basic_block_forward.11} parent=1 // loop_footer
      %s19 = sadd.s32 1, %s15
    $region7: #{basic_block_forward.11} parent=1 // loop_footer_branch
      %14 = sbr.rel target = $region3
    $region8: #{basic_block_forward.11} parent=1 // loop_exit
      _
    %598 = vsyncpa [#allocation3], 1
    %s599 = scalar_lea.sflag [#allocation3], 1
    %600 = vsyncpa %s599, 1

// kernel: basic_block_forward.10
$region0: #{basic_block_forward.10}
  #allocation0 [shape = 'u32[]', space=smem, size = 0x4, offset = 0x4, fixed_abs, tag = 'smem constant byte address 0x4 - core index']
  #allocation1 [shape = 'u32[72,128]{1,0:T(1,128)}', space=vmem, size = 0x9000, scoped, tag = 'internal scratch']
  #allocation2 [shape = 'f32[256,128]{1,0:T(8,128)}', space=vmem, size = 0x20000, scoped, tag = 'scratch operand']
  %s0 = inlined_call_operand.vmem [shape: bf16[512,1152], index: 0, kind: input, shape index: {}]
  %s1 = inlined_call_operand.vmem [shape: bf16[1152,128], index: 1, kind: input, shape index: {}]
  %s2 = inlined_call_operand.vmem [shape: f32[512,128], index: 2, kind: output, shape index: {0}]
  %s3 = inlined_call_operand.vmem [shape: f32[1,128], index: 3, kind: output, shape index: {1}]
  %s4 = inlined_call_operand.vmem [shape: f32[1,128], index: 4, kind: output, shape index: {2}]
  %5 = xla_tuple %s2, %s3, %s4
  %s6 = sld [smem:[#allocation0]]
  $region95: #{basic_block_forward.10} parent=0
    _
  %s8 = ssub.s32 1, %s6
  %s9 = scalar_select 0, %s8, %s6
  $region1: #{basic_block_forward.10} parent=0
    #allocation3 [shape = 'u8[393216]{0}', space=vmem, size = 0x60000, scoped, tag = 'input window, operand 0']
    loop: start=0, step=1, limit=8
    $region2: #{basic_block_forward.10} parent=1 // loop_pre_header
      _
    $region3: #{basic_block_forward.10} parent=1 // loop_header
      %s11 = sphi 0, %s15
      %p12 = scmp.ge.s32.totalorder %s11, 8
      %s18 = sphi 0, %s30
      %s19 = sphi 0, %s26
      %s20 = sphi 0, %s18
      %s21 = sphi 0, %s19
      %s22 = sphi 0, %s20
      %s23 = sphi 0, %s21
      %s35 = sphi 0, %s37
      %s38 = sphi 0, %s35
      %s39 = sphi 0, %s38
      %s55 = sphi 0, %s39
      %s61 = sphi 0, %s63
      %s64 = sphi 0, %s61
      %s65 = sphi 0, %s64
      %s81 = sphi 0, %s65
      %s87 = sphi 0, %s89
      %s90 = sphi 0, %s87
      %s91 = sphi 0, %s90
      %s107 = sphi 0, %s91
      %s111 = sphi 0, %s111
      %s113 = sphi 0, %s111
      %s114 = sphi 0, %s113
      %s128 = sphi 0, %s114
      %s132 = sphi 0, %s132
      %s134 = sphi 0, %s132
      %s135 = sphi 0, %s134
      %s149 = sphi 0, %s135
    $region4: #{basic_block_forward.10} parent=1 // loop_header_branch
      %14 = sbr.rel (%p12) target = $region8
    $region5: #{basic_block_forward.10} parent=1 // loop_body
      %s16 = ssub.s32 %s11, 1
      %s17 = ssub.s32 %s11, 2
      %s24 = sadd.s32 1, %s19
      %p25 = scmp.ge.s32.totalorder %s24, 3
      %s26 = scalar_select %p25, 0, %s24
      %s27 = sadd.s32 1, %s18
      %s28 = scalar_select %p25, %s27, %s18
      %p29 = scmp.ge.s32.totalorder %s28, 2
      %s30 = scalar_select %p29, 0, %s28
      %s31 = ssub.s32 %s18, %s30
      %s32 = ssub.s32 %s19, %s26
      %s33 = sor.u32 %s31, %s32
      %p34 = scmp.eq.s32.totalorder %s33, 0
      %s36 = sadd.s32 %s35, 1
      %s37 = scalar_select %p34, %s35, %s36
      %p40 = pneg %p34
      %p41 = scmp.eq.s32.totalorder %s11, 5
      %p42 = por %p40, %p41
      %p43 = scmp.ne.s32.totalorder %s35, %s38
      %p44 = scmp.eq.s32.totalorder %s11, 0
      %p45 = por %p43, %p44
      %p46 = scmp.ne.s32.totalorder %s35, %s38
      %p47 = scmp.eq.s32.totalorder %s16, 5
      %p48 = por %p46, %p47
      %p49 = scmp.ne.s32.totalorder %s38, %s39
      %p50 = scmp.eq.s32.totalorder %s16, 0
      %p51 = por %p49, %p50
      %p52 = scmp.ne.s32.totalorder %s38, %s39
      %p53 = scmp.eq.s32.totalorder %s17, 5
      %p54 = por %p52, %p53
      %p56 = scmp.ne.s32.totalorder %s39, %s55
      %p57 = scmp.eq.s32.totalorder %s17, 0
      %p58 = por %p56, %p57
      %s59 = ssub.s32 %s19, %s26
      %p60 = scmp.eq.s32.totalorder %s59, 0
      %s62 = sadd.s32 %s61, 1
      %s63 = scalar_select %p60, %s61, %s62
      %p66 = pneg %p60
      %p67 = scmp.eq.s32.totalorder %s11, 5
      %p68 = por %p66, %p67
      %p69 = scmp.ne.s32.totalorder %s61, %s64
      %p70 = scmp.eq.s32.totalorder %s11, 0
      %p71 = por %p69, %p70
      %p72 = scmp.ne.s32.totalorder %s61, %s64
      %p73 = scmp.eq.s32.totalorder %s16, 5
      %p74 = por %p72, %p73
      %p75 = scmp.ne.s32.totalorder %s64, %s65
      %p76 = scmp.eq.s32.totalorder %s16, 0
      %p77 = por %p75, %p76
      %p78 = scmp.ne.s32.totalorder %s64, %s65
      %p79 = scmp.eq.s32.totalorder %s17, 5
      %p80 = por %p78, %p79
      %p82 = scmp.ne.s32.totalorder %s65, %s81
      %p83 = scmp.eq.s32.totalorder %s17, 0
      %p84 = por %p82, %p83
      %s85 = ssub.s32 %s18, %s30
      %p86 = scmp.eq.s32.totalorder %s85, 0
      %s88 = sadd.s32 %s87, 1
      %s89 = scalar_select %p86, %s87, %s88
      %p92 = pneg %p86
      %p93 = scmp.eq.s32.totalorder %s11, 5
      %p94 = por %p92, %p93
      %p95 = scmp.ne.s32.totalorder %s87, %s90
      %p96 = scmp.eq.s32.totalorder %s11, 0
      %p97 = por %p95, %p96
      %p98 = scmp.ne.s32.totalorder %s87, %s90
      %p99 = scmp.eq.s32.totalorder %s16, 5
      %p100 = por %p98, %p99
      %p101 = scmp.ne.s32.totalorder %s90, %s91
      %p102 = scmp.eq.s32.totalorder %s16, 0
      %p103 = por %p101, %p102
      %p104 = scmp.ne.s32.totalorder %s90, %s91
      %p105 = scmp.eq.s32.totalorder %s17, 5
      %p106 = por %p104, %p105
      %p108 = scmp.ne.s32.totalorder %s91, %s107
      %p109 = scmp.eq.s32.totalorder %s17, 0
      %p110 = por %p108, %p109
      %s112 = sadd.s32 %s111, 1
      %p115 = scmp.eq.s32.totalorder %s11, 5
      %p116 = scmp.ne.s32.totalorder %s111, %s113
      %p117 = scmp.eq.s32.totalorder %s11, 0
      %p118 = por %p116, %p117
      %p119 = scmp.ne.s32.totalorder %s111, %s113
      %p120 = scmp.eq.s32.totalorder %s16, 5
      %p121 = por %p119, %p120
      %p122 = scmp.ne.s32.totalorder %s113, %s114
      %p123 = scmp.eq.s32.totalorder %s16, 0
      %p124 = por %p122, %p123
      %p125 = scmp.ne.s32.totalorder %s113, %s114
      %p126 = scmp.eq.s32.totalorder %s17, 5
      %p127 = por %p125, %p126
      %p129 = scmp.ne.s32.totalorder %s114, %s128
      %p130 = scmp.eq.s32.totalorder %s17, 0
      %p131 = por %p129, %p130
      %s133 = sadd.s32 %s132, 1
      %p136 = scmp.eq.s32.totalorder %s11, 5
      %p137 = scmp.ne.s32.totalorder %s132, %s134
      %p138 = scmp.eq.s32.totalorder %s11, 0
      %p139 = por %p137, %p138
      %p140 = scmp.ne.s32.totalorder %s132, %s134
      %p141 = scmp.eq.s32.totalorder %s16, 5
      %p142 = por %p140, %p141
      %p143 = scmp.ne.s32.totalorder %s134, %s135
      %p144 = scmp.eq.s32.totalorder %s16, 0
      %p145 = por %p143, %p144
      %p146 = scmp.ne.s32.totalorder %s134, %s135
      %p147 = scmp.eq.s32.totalorder %s17, 5
      %p148 = por %p146, %p147
      %p150 = scmp.ne.s32.totalorder %s135, %s149
      %p151 = scmp.eq.s32.totalorder %s17, 0
      %p152 = por %p150, %p151
      %p153 = scmp.le.s32.totalorder 1, %s11
      %p154 = scmp.lt.s32.totalorder %s11, 7
      %p155 = pnand %p153, %p154
      %p156 = pneg %p155
      // Predicated region
      $region9: #{basic_block_forward.10} parent=5 // pred_check
        _
      $region10: #{basic_block_forward.10} parent=5 // pred_check_branch
        %158 = sbr.rel (%p155) target = $region12
      $region11: #{basic_block_forward.10} parent=5 // pred_region
        %s159 = ssub.s32 %s11, 1
      $region12: #{basic_block_forward.10} parent=5 // pred_fallthru
        _
      %p160 = scmp.lt.s32.totalorder %s11, 6
      // Predicated region
      $region13: #{basic_block_forward.10} parent=5 // pred_check
        %p161 = pneg %p160
      $region14: #{basic_block_forward.10} parent=5 // pred_check_branch
        %163 = sbr.rel (%p161) target = $region16
      $region15: #{basic_block_forward.10} parent=5 // pred_region
        // Predicated region
        $region17: #{basic_block_forward.10} parent=15 // pred_check
          %p164 = pneg %p45
        $region18: #{basic_block_forward.10} parent=15 // pred_check_branch
          %166 = sbr.rel (%p164) target = $region20
        $region19: #{basic_block_forward.10} parent=15 // pred_region
          %s167 = sand.u32 %s35, 1
          %s168 = sand.u32 %s35, 1
          %s169 = smul.addr %s168, 384
          %s170 = scalar_lea.vmem [#allocation3], %s169
          %s171 = smul.u32 32, %s18
          %s172 = smul.u32 3, %s19
          %s173 = smul.addr %s171, 9
          %s174 = sadd.s32 %s172, %s173
          %s175 = smul.addr %s174, 4
          %s176 = scalar_lea.vmem %s0, %s175
          // Predicated region
          $region21: #{basic_block_forward.10} parent=19 // pred_check
            _
          $region22: #{basic_block_forward.10} parent=19 // pred_check_branch
            %178 = sbr.rel (0) target = $region24
          $region23: #{basic_block_forward.10} parent=19 // pred_region
            // Predicated region
            $region25: #{basic_block_forward.10} parent=23 // pred_check
              _
            $region26: #{basic_block_forward.10} parent=23 // pred_check_branch
              %180 = sbr.rel (0) target = $region28
            $region27: #{basic_block_forward.10} parent=23 // pred_region
              %s181 = scalar_lea.vmem %s176, 8
              %s182 = scalar_lea.vmem %s170, 8 [#allocation3]
              loop: start=0, step=1, limit=1
              $region29: #{basic_block_forward.10} parent=27 // loop_pre_header
                _
              $region30: #{basic_block_forward.10} parent=27 // loop_header
                %s184 = sphi 0, %s188
                %p185 = scmp.ge.s32.totalorder %s184, 1
                %s189 = sphi %s176, %s176
                %s190 = sphi %s170, %s170
              $region31: #{basic_block_forward.10} parent=27 // loop_header_branch
                %187 = sbr.rel (%p185) target = $region35
              $region32: #{basic_block_forward.10} parent=27 // loop_body
                %v191 = vld [vmem:[%s189] sm:$0xff]
                %192 = vst [vmem:[%s190] sm:$0xff] %v191
                %v193 = vld [vmem:[%s189 + $0x24] sm:$0xff]
                %194 = vst [vmem:[%s190 + $0xc] sm:$0xff] %v193
                %v195 = vld [vmem:[%s189 + $0x48] sm:$0xff]
                %196 = vst [vmem:[%s190 + $0x18] sm:$0xff] %v195
                %v197 = vld [vmem:[%s189 + $0x6c] sm:$0xff]
                %198 = vst [vmem:[%s190 + $0x24] sm:$0xff] %v197
                %v199 = vld [vmem:[%s189 + $0x90] sm:$0xff]
                %200 = vst [vmem:[%s190 + $0x30] sm:$0xff] %v199
                %v201 = vld [vmem:[%s189 + $0xb4] sm:$0xff]
                %202 = vst [vmem:[%s190 + $0x3c] sm:$0xff] %v201
                %v203 = vld [vmem:[%s189 + $0xd8] sm:$0xff]
                %204 = vst [vmem:[%s190 + $0x48] sm:$0xff] %v203
                %v205 = vld [vmem:[%s189 + $0xfc] sm:$0xff]
                %206 = vst [vmem:[%s190 + $0x54] sm:$0xff] %v205
                %v207 = vld [vmem:[%s189 + $0x120] sm:$0xff]
                %208 = vst [vmem:[%s190 + $0x60] sm:$0xff] %v207
                %v209 = vld [vmem:[%s189 + $0x144] sm:$0xff]
                %210 = vst [vmem:[%s190 + $0x6c] sm:$0xff] %v209
                %v211 = vld [vmem:[%s189 + $0x168] sm:$0xff]
                %212 = vst [vmem:[%s190 + $0x78] sm:$0xff] %v211
                %v213 = vld [vmem:[%s189 + $0x18c] sm:$0xff]
                %214 = vst [vmem:[%s190 + $0x84] sm:$0xff] %v213
                %v215 = vld [vmem:[%s189 + $0x1b0] sm:$0xff]
                %216 = vst [vmem:[%s190 + $0x90] sm:$0xff] %v215
                %v217 = vld [vmem:[%s189 + $0x1d4] sm:$0xff]
                %218 = vst [vmem:[%s190 + $0x9c] sm:$0xff] %v217
                %v219 = vld [vmem:[%s189 + $0x1f8] sm:$0xff]
                %220 = vst [vmem:[%s190 + $0xa8] sm:$0xff] %v219
                %v221 = vld [vmem:[%s189 + $0x21c] sm:$0xff]
                %222 = vst [vmem:[%s190 + $0xb4] sm:$0xff] %v221
                %v223 = vld [vmem:[%s189 + $0x240] sm:$0xff]
                %224 = vst [vmem:[%s190 + $0xc0] sm:$0xff] %v223
                %v225 = vld [vmem:[%s189 + $0x264] sm:$0xff]
                %226 = vst [vmem:[%s190 + $0xcc] sm:$0xff] %v225
                %v227 = vld [vmem:[%s189 + $0x288] sm:$0xff]
                %228 = vst [vmem:[%s190 + $0xd8] sm:$0xff] %v227
                %v229 = vld [vmem:[%s189 + $0x2ac] sm:$0xff]
                %230 = vst [vmem:[%s190 + $0xe4] sm:$0xff] %v229
                %v231 = vld [vmem:[%s189 + $0x2d0] sm:$0xff]
                %232 = vst [vmem:[%s190 + $0xf0] sm:$0xff] %v231
                %v233 = vld [vmem:[%s189 + $0x2f4] sm:$0xff]
                %234 = vst [vmem:[%s190 + $0xfc] sm:$0xff] %v233
                %v235 = vld [vmem:[%s189 + $0x318] sm:$0xff]
                %236 = vst [vmem:[%s190 + $0x108] sm:$0xff] %v235
                %v237 = vld [vmem:[%s189 + $0x33c] sm:$0xff]
                %238 = vst [vmem:[%s190 + $0x114] sm:$0xff] %v237
                %v239 = vld [vmem:[%s189 + $0x360] sm:$0xff]
                %240 = vst [vmem:[%s190 + $0x120] sm:$0xff] %v239
                %v241 = vld [vmem:[%s189 + $0x384] sm:$0xff]
                %242 = vst [vmem:[%s190 + $0x12c] sm:$0xff] %v241
                %v243 = vld [vmem:[%s189 + $0x3a8] sm:$0xff]
                %244 = vst [vmem:[%s190 + $0x138] sm:$0xff] %v243
                %v245 = vld [vmem:[%s189 + $0x3cc] sm:$0xff]
                %246 = vst [vmem:[%s190 + $0x144] sm:$0xff] %v245
                %v247 = vld [vmem:[%s189 + $0x3f0] sm:$0xff]
                %248 = vst [vmem:[%s190 + $0x150] sm:$0xff] %v247
                %v249 = vld [vmem:[%s189 + $0x414] sm:$0xff]
                %250 = vst [vmem:[%s190 + $0x15c] sm:$0xff] %v249
                %v251 = vld [vmem:[%s189 + $0x438] sm:$0xff]
                %252 = vst [vmem:[%s190 + $0x168] sm:$0xff] %v251
                %v253 = vld [vmem:[%s189 + $0x45c] sm:$0xff]
                %254 = vst [vmem:[%s190 + $0x174] sm:$0xff] %v253
              $region33: #{basic_block_forward.10} parent=27 // loop_footer
                %s188 = sadd.s32 1, %s184
              $region34: #{basic_block_forward.10} parent=27 // loop_footer_branch
                %183 = sbr.rel target = $region30
              $region35: #{basic_block_forward.10} parent=27 // loop_exit
                _
              %s256 = ssub.s32 16, 1
              loop: start=0, step=1, limit=1
              $region36: #{basic_block_forward.10} parent=27 // loop_pre_header
                _
              $region37: #{basic_block_forward.10} parent=27 // loop_header
                %s258 = sphi 0, %s262
                %p259 = scmp.ge.s32.totalorder %s258, 1
                %s263 = sphi %s181, %s181
                %s264 = sphi %s182, %s182
              $region38: #{basic_block_forward.10} parent=27 // loop_header_branch
                %261 = sbr.rel (%p259) target = $region42
              $region39: #{basic_block_forward.10} parent=27 // loop_body
                %v265 = vld [vmem:[%s263] sm:%s256]
                %266 = vst [vmem:[%s264] sm:%s256] %v265
                %v267 = vld [vmem:[%s263 + $0x24] sm:%s256]
                %268 = vst [vmem:[%s264 + $0xc] sm:%s256] %v267
                %v269 = vld [vmem:[%s263 + $0x48] sm:%s256]
                %270 = vst [vmem:[%s264 + $0x18] sm:%s256] %v269
                %v271 = vld [vmem:[%s263 + $0x6c] sm:%s256]
                %272 = vst [vmem:[%s264 + $0x24] sm:%s256] %v271
                %v273 = vld [vmem:[%s263 + $0x90] sm:%s256]
                %274 = vst [vmem:[%s264 + $0x30] sm:%s256] %v273
                %v275 = vld [vmem:[%s263 + $0xb4] sm:%s256]
                %276 = vst [vmem:[%s264 + $0x3c] sm:%s256] %v275
                %v277 = vld [vmem:[%s263 + $0xd8] sm:%s256]
                %278 = vst [vmem:[%s264 + $0x48] sm:%s256] %v277
                %v279 = vld [vmem:[%s263 + $0xfc] sm:%s256]
                %280 = vst [vmem:[%s264 + $0x54] sm:%s256] %v279
                %v281 = vld [vmem:[%s263 + $0x120] sm:%s256]
                %282 = vst [vmem:[%s264 + $0x60] sm:%s256] %v281
                %v283 = vld [vmem:[%s263 + $0x144] sm:%s256]
                %284 = vst [vmem:[%s264 + $0x6c] sm:%s256] %v283
                %v285 = vld [vmem:[%s263 + $0x168] sm:%s256]
                %286 = vst [vmem:[%s264 + $0x78] sm:%s256] %v285
                %v287 = vld [vmem:[%s263 + $0x18c] sm:%s256]
                %288 = vst [vmem:[%s264 + $0x84] sm:%s256] %v287
                %v289 = vld [vmem:[%s263 + $0x1b0] sm:%s256]
                %290 = vst [vmem:[%s264 + $0x90] sm:%s256] %v289
                %v291 = vld [vmem:[%s263 + $0x1d4] sm:%s256]
                %292 = vst [vmem:[%s264 + $0x9c] sm:%s256] %v291
                %v293 = vld [vmem:[%s263 + $0x1f8] sm:%s256]
                %294 = vst [vmem:[%s264 + $0xa8] sm:%s256] %v293
                %v295 = vld [vmem:[%s263 + $0x21c] sm:%s256]
                %296 = vst [vmem:[%s264 + $0xb4] sm:%s256] %v295
                %v297 = vld [vmem:[%s263 + $0x240] sm:%s256]
                %298 = vst [vmem:[%s264 + $0xc0] sm:%s256] %v297
                %v299 = vld [vmem:[%s263 + $0x264] sm:%s256]
                %300 = vst [vmem:[%s264 + $0xcc] sm:%s256] %v299
                %v301 = vld [vmem:[%s263 + $0x288] sm:%s256]
                %302 = vst [vmem:[%s264 + $0xd8] sm:%s256] %v301
                %v303 = vld [vmem:[%s263 + $0x2ac] sm:%s256]
                %304 = vst [vmem:[%s264 + $0xe4] sm:%s256] %v303
                %v305 = vld [vmem:[%s263 + $0x2d0] sm:%s256]
                %306 = vst [vmem:[%s264 + $0xf0] sm:%s256] %v305
                %v307 = vld [vmem:[%s263 + $0x2f4] sm:%s256]
                %308 = vst [vmem:[%s264 + $0xfc] sm:%s256] %v307
                %v309 = vld [vmem:[%s263 + $0x318] sm:%s256]
                %310 = vst [vmem:[%s264 + $0x108] sm:%s256] %v309
                %v311 = vld [vmem:[%s263 + $0x33c] sm:%s256]
                %312 = vst [vmem:[%s264 + $0x114] sm:%s256] %v311
                %v313 = vld [vmem:[%s263 + $0x360] sm:%s256]
                %314 = vst [vmem:[%s264 + $0x120] sm:%s256] %v313
                %v315 = vld [vmem:[%s263 + $0x384] sm:%s256]
                %316 = vst [vmem:[%s264 + $0x12c] sm:%s256] %v315
                %v317 = vld [vmem:[%s263 + $0x3a8] sm:%s256]
                %318 = vst [vmem:[%s264 + $0x138] sm:%s256] %v317
                %v319 = vld [vmem:[%s263 + $0x3cc] sm:%s256]
                %320 = vst [vmem:[%s264 + $0x144] sm:%s256] %v319
                %v321 = vld [vmem:[%s263 + $0x3f0] sm:%s256]
                %322 = vst [vmem:[%s264 + $0x150] sm:%s256] %v321
                %v323 = vld [vmem:[%s263 + $0x414] sm:%s256]
                %324 = vst [vmem:[%s264 + $0x15c] sm:%s256] %v323
                %v325 = vld [vmem:[%s263 + $0x438] sm:%s256]
                %326 = vst [vmem:[%s264 + $0x168] sm:%s256] %v325
                %v327 = vld [vmem:[%s263 + $0x45c] sm:%s256]
                %328 = vst [vmem:[%s264 + $0x174] sm:%s256] %v327
              $region40: #{basic_block_forward.10} parent=27 // loop_footer
                %s262 = sadd.s32 1, %s258
              $region41: #{basic_block_forward.10} parent=27 // loop_footer_branch
                %257 = sbr.rel target = $region37
              $region42: #{basic_block_forward.10} parent=27 // loop_exit
                _
            $region28: #{basic_block_forward.10} parent=23 // pred_fallthru
              _
          $region24: #{basic_block_forward.10} parent=19 // pred_fallthru
            _
          %329 = vnop
        $region20: #{basic_block_forward.10} parent=15 // pred_fallthru
          _
        // Predicated region
        $region43: #{basic_block_forward.10} parent=15 // pred_check
          %p330 = pneg %p71
        $region44: #{basic_block_forward.10} parent=15 // pred_check_branch
          %332 = sbr.rel (%p330) target = $region46
        $region45: #{basic_block_forward.10} parent=15 // pred_region
          %s333 = smul.u32 48, %s19
          %p334 = scmp.lt.s32.totalorder %s333, 143
          %s335 = scalar_select %p334, %s333, 143
          %s336 = smul.addr %s335, 4
          %s337 = scalar_lea.vmem %s1, %s336
          %s338 = smul.u32 48, %s19
        $region46: #{basic_block_forward.10} parent=15 // pred_fallthru
          _
      $region16: #{basic_block_forward.10} parent=5 // pred_fallthru
        _
      %p339 = scmp.le.s32.totalorder 1, %s11
      %p340 = scmp.lt.s32.totalorder %s11, 7
      %p341 = pnand %p339, %p340
      %p342 = pneg %p341
      // Predicated region
      $region47: #{basic_block_forward.10} parent=5 // pred_check
        _
      $region48: #{basic_block_forward.10} parent=5 // pred_check_branch
        %344 = sbr.rel (%p341) target = $region50
      $region49: #{basic_block_forward.10} parent=5 // pred_region
        %s345 = ssub.s32 %s11, 1
        %s346 = sand.u32 %s38, 1
        %s347 = sand.u32 %s38, 1
        %s348 = smul.addr %s347, 384
        %s349 = scalar_lea.vmem [#allocation3], %s348
        // Predicated region
        $region51: #{basic_block_forward.10} parent=49 // pred_check
          %p350 = pneg %p51
        $region52: #{basic_block_forward.10} parent=49 // pred_check_branch
          %352 = sbr.rel (%p350) target = $region54
        $region53: #{basic_block_forward.10} parent=49 // pred_region
          _
        $region54: #{basic_block_forward.10} parent=49 // pred_fallthru
          _
        %s353 = sand.u32 %s38, 1
        %s354 = sand.u32 %s38, 1
        %s355 = smul.addr %s354, 384
        %s356 = scalar_lea.vmem [#allocation3], %s355
        %p357 = pneg %p51
        %p358 = pneg %p48
        %s359 = smul.u32 48, %s21
        %p360 = scmp.lt.s32.totalorder %s359, 143
        %s361 = scalar_select %p360, %s359, 143
        %s362 = smul.addr %s361, 4
        %s363 = scalar_lea.vmem %s1, %s362
        %p364 = pneg %p77
        %p365 = pneg %p74
        %p366 = pneg %p103
        %p367 = pneg %p100
        %s368 = smul.u32 32, %s20
        %p369 = scmp.lt.s32.totalorder %s368, 63
        %s370 = scalar_select %p369, %s368, 63
        %s371 = smul.addr %s370, 8
        %s372 = scalar_lea.vmem %s2, %s371
        %p373 = pneg %p124
        %p374 = pneg %p121
        %p375 = pneg %p145
        %p376 = pneg %p142
        %s377 = smul.u32 32, %s20
        %s378 = smul.u32 3, %s21
        %s379 = smul.u32 48, %s21
        %p380 = scmp.lt.s32.totalorder %s379, 143
        %s381 = scalar_select %p380, %s379, 143
        %s382 = smul.addr %s381, 4
        %s383 = scalar_lea.vmem %s1, %s382
        %s384 = smul.u32 48, %s21
        %s385 = smul.u32 32, %s20
        %p386 = scmp.lt.s32.totalorder %s385, 63
        %s387 = scalar_select %p386, %s385, 63
        %s388 = smul.addr %s387, 8
        %s389 = scalar_lea.vmem %s2, %s388
        %s390 = smul.u32 32, %s20
        %p391 = scmp.eq.s32.totalorder %s21, 0
        // Predicated region
        $region55: #{basic_block_forward.10} parent=49 // pred_check
          %p392 = pneg %p391
        $region56: #{basic_block_forward.10} parent=49 // pred_check_branch
          %394 = sbr.rel (%p392) target = $region58
        $region57: #{basic_block_forward.10} parent=49 // pred_region
          %395 = vst [vmem:[#allocation2] sm:$0xff] 0.0
          %396 = vst [vmem:[#allocation2 + $0x8] sm:$0xff] 0.0
          %397 = vst [vmem:[#allocation2 + $0x10] sm:$0xff] 0.0
          %398 = vst [vmem:[#allocation2 + $0x18] sm:$0xff] 0.0
          %399 = vst [vmem:[#allocation2 + $0x20] sm:$0xff] 0.0
          %400 = vst [vmem:[#allocation2 + $0x28] sm:$0xff] 0.0
          %401 = vst [vmem:[#allocation2 + $0x30] sm:$0xff] 0.0
          %402 = vst [vmem:[#allocation2 + $0x38] sm:$0xff] 0.0
          %403 = vst [vmem:[#allocation2 + $0x40] sm:$0xff] 0.0
          %404 = vst [vmem:[#allocation2 + $0x48] sm:$0xff] 0.0
          %405 = vst [vmem:[#allocation2 + $0x50] sm:$0xff] 0.0
          %406 = vst [vmem:[#allocation2 + $0x58] sm:$0xff] 0.0
          %407 = vst [vmem:[#allocation2 + $0x60] sm:$0xff] 0.0
          %408 = vst [vmem:[#allocation2 + $0x68] sm:$0xff] 0.0
          %409 = vst [vmem:[#allocation2 + $0x70] sm:$0xff] 0.0
          %410 = vst [vmem:[#allocation2 + $0x78] sm:$0xff] 0.0
          %411 = vst [vmem:[#allocation2 + $0x80] sm:$0xff] 0.0
          %412 = vst [vmem:[#allocation2 + $0x88] sm:$0xff] 0.0
          %413 = vst [vmem:[#allocation2 + $0x90] sm:$0xff] 0.0
          %414 = vst [vmem:[#allocation2 + $0x98] sm:$0xff] 0.0
          %415 = vst [vmem:[#allocation2 + $0xa0] sm:$0xff] 0.0
          %416 = vst [vmem:[#allocation2 + $0xa8] sm:$0xff] 0.0
          %417 = vst [vmem:[#allocation2 + $0xb0] sm:$0xff] 0.0
          %418 = vst [vmem:[#allocation2 + $0xb8] sm:$0xff] 0.0
          %419 = vst [vmem:[#allocation2 + $0xc0] sm:$0xff] 0.0
          %420 = vst [vmem:[#allocation2 + $0xc8] sm:$0xff] 0.0
          %421 = vst [vmem:[#allocation2 + $0xd0] sm:$0xff] 0.0
          %422 = vst [vmem:[#allocation2 + $0xd8] sm:$0xff] 0.0
          %423 = vst [vmem:[#allocation2 + $0xe0] sm:$0xff] 0.0
          %424 = vst [vmem:[#allocation2 + $0xe8] sm:$0xff] 0.0
          %425 = vst [vmem:[#allocation2 + $0xf0] sm:$0xff] 0.0
          %426 = vst [vmem:[#allocation2 + $0xf8] sm:$0xff] 0.0
        $region58: #{basic_block_forward.10} parent=49 // pred_fallthru
          _
        %p427 = scmp.eq.s32.totalorder %s20, 0
        %p428 = pnand %p427, %p391
        %p429 = pneg %p428
        // Predicated region
        $region59: #{basic_block_forward.10} parent=49 // pred_check
          _
        $region60: #{basic_block_forward.10} parent=49 // pred_check_branch
          %431 = sbr.rel (%p428) target = $region62
        $region61: #{basic_block_forward.10} parent=49 // pred_region
          %432 = vst [vmem:[%s3] sm:$0x1] 0.0
          %433 = vst [vmem:[%s4] sm:$0x1] 0.0
        $region62: #{basic_block_forward.10} parent=49 // pred_fallthru
          _
        %v434 = vld [vmem:[#allocation2] sm:$0xff]
        %v435 = vld [vmem:[#allocation2 + $0x8] sm:$0xff]
        %v436 = vld [vmem:[#allocation2 + $0x10] sm:$0xff]
        %v437 = vld [vmem:[#allocation2 + $0x18] sm:$0xff]
        %v438 = vld [vmem:[#allocation2 + $0x20] sm:$0xff]
        %v439 = vld [vmem:[#allocation2 + $0x28] sm:$0xff]
        %v440 = vld [vmem:[#allocation2 + $0x30] sm:$0xff]
        %v441 = vld [vmem:[#allocation2 + $0x38] sm:$0xff]
        %v442 = vld [vmem:[#allocation2 + $0x40] sm:$0xff]
        %v443 = vld [vmem:[#allocation2 + $0x48] sm:$0xff]
        %v444 = vld [vmem:[#allocation2 + $0x50] sm:$0xff]
        %v445 = vld [vmem:[#allocation2 + $0x58] sm:$0xff]
        %v446 = vld [vmem:[#allocation2 + $0x60] sm:$0xff]
        %v447 = vld [vmem:[#allocation2 + $0x68] sm:$0xff]
        %v448 = vld [vmem:[#allocation2 + $0x70] sm:$0xff]
        %v449 = vld [vmem:[#allocation2 + $0x78] sm:$0xff]
        %v450 = vld [vmem:[#allocation2 + $0x80] sm:$0xff]
        %v451 = vld [vmem:[#allocation2 + $0x88] sm:$0xff]
        %v452 = vld [vmem:[#allocation2 + $0x90] sm:$0xff]
        %v453 = vld [vmem:[#allocation2 + $0x98] sm:$0xff]
        %v454 = vld [vmem:[#allocation2 + $0xa0] sm:$0xff]
        %v455 = vld [vmem:[#allocation2 + $0xa8] sm:$0xff]
        %v456 = vld [vmem:[#allocation2 + $0xb0] sm:$0xff]
        %v457 = vld [vmem:[#allocation2 + $0xb8] sm:$0xff]
        %v458 = vld [vmem:[#allocation2 + $0xc0] sm:$0xff]
        %v459 = vld [vmem:[#allocation2 + $0xc8] sm:$0xff]
        %v460 = vld [vmem:[#allocation2 + $0xd0] sm:$0xff]
        %v461 = vld [vmem:[#allocation2 + $0xd8] sm:$0xff]
        %v462 = vld [vmem:[#allocation2 + $0xe0] sm:$0xff]
        %v463 = vld [vmem:[#allocation2 + $0xe8] sm:$0xff]
        %v464 = vld [vmem:[#allocation2 + $0xf0] sm:$0xff]
        %v465 = vld [vmem:[#allocation2 + $0xf8] sm:$0xff]
        %v466 = vld [vmem:[%s349] sm:$0xff]
        %v467 = vld [vmem:[%s349 + $0x8] sm:$0xf]
        %v468 = vld [vmem:[%s349 + $0xc] sm:$0xff]
        %v469 = vld [vmem:[%s349 + $0x14] sm:$0xf]
        %v470 = vld [vmem:[%s349 + $0x18] sm:$0xff]
        %v471 = vld [vmem:[%s349 + $0x20] sm:$0xf]
        %v472 = vld [vmem:[%s349 + $0x24] sm:$0xff]
        %v473 = vld [vmem:[%s349 + $0x2c] sm:$0xf]
        %v474 = vld [vmem:[%s349 + $0x30] sm:$0xff]
        %v475 = vld [vmem:[%s349 + $0x38] sm:$0xf]
        %v476 = vld [vmem:[%s349 + $0x3c] sm:$0xff]
        %v477 = vld [vmem:[%s349 + $0x44] sm:$0xf]
        %v478 = vld [vmem:[%s349 + $0x48] sm:$0xff]
        %v479 = vld [vmem:[%s349 + $0x50] sm:$0xf]
        %v480 = vld [vmem:[%s349 + $0x54] sm:$0xff]
        %v481 = vld [vmem:[%s349 + $0x5c] sm:$0xf]
        %v482 = vld [vmem:[%s349 + $0x60] sm:$0xff]
        %v483 = vld [vmem:[%s349 + $0x68] sm:$0xf]
        %v484 = vld [vmem:[%s349 + $0x6c] sm:$0xff]
        %v485 = vld [vmem:[%s349 + $0x74] sm:$0xf]
        %v486 = vld [vmem:[%s349 + $0x78] sm:$0xff]
        %v487 = vld [vmem:[%s349 + $0x80] sm:$0xf]
        %v488 = vld [vmem:[%s349 + $0x84] sm:$0xff]
        %v489 = vld [vmem:[%s349 + $0x8c] sm:$0xf]
        %v490 = vld [vmem:[%s349 + $0x90] sm:$0xff]
        %v491 = vld [vmem:[%s349 + $0x98] sm:$0xf]
        %v492 = vld [vmem:[%s349 + $0x9c] sm:$0xff]
        %v493 = vld [vmem:[%s349 + $0xa4] sm:$0xf]
        %v494 = vld [vmem:[%s349 + $0xa8] sm:$0xff]
        %v495 = vld [vmem:[%s349 + $0xb0] sm:$0xf]
        %v496 = vld [vmem:[%s349 + $0xb4] sm:$0xff]
        %v497 = vld [vmem:[%s349 + $0xbc] sm:$0xf]
        %v498 = vld [vmem:[%s349 + $0xc0] sm:$0xff]
        %v499 = vld [vmem:[%s349 + $0xc8] sm:$0xf]
        %v500 = vld [vmem:[%s349 + $0xcc] sm:$0xff]
        %v501 = vld [vmem:[%s349 + $0xd4] sm:$0xf]
        %v502 = vld [vmem:[%s349 + $0xd8] sm:$0xff]
        %v503 = vld [vmem:[%s349 + $0xe0] sm:$0xf]
        %v504 = vld [vmem:[%s349 + $0xe4] sm:$0xff]
        %v505 = vld [vmem:[%s349 + $0xec] sm:$0xf]
        %v506 = vld [vmem:[%s349 + $0xf0] sm:$0xff]
        %v507 = vld [vmem:[%s349 + $0xf8] sm:$0xf]
        %v508 = vld [vmem:[%s349 + $0xfc] sm:$0xff]
        %v509 = vld [vmem:[%s349 + $0x104] sm:$0xf]
        %v510 = vld [vmem:[%s349 + $0x108] sm:$0xff]
        %v511 = vld [vmem:[%s349 + $0x110] sm:$0xf]
        %v512 = vld [vmem:[%s349 + $0x114] sm:$0xff]
        %v513 = vld [vmem:[%s349 + $0x11c] sm:$0xf]
        %v514 = vld [vmem:[%s349 + $0x120] sm:$0xff]
        %v515 = vld [vmem:[%s349 + $0x128] sm:$0xf]
        %v516 = vld [vmem:[%s349 + $0x12c] sm:$0xff]
        %v517 = vld [vmem:[%s349 + $0x134] sm:$0xf]
        %v518 = vld [vmem:[%s349 + $0x138] sm:$0xff]
        %v519 = vld [vmem:[%s349 + $0x140] sm:$0xf]
        %v520 = vld [vmem:[%s349 + $0x144] sm:$0xff]
        %v521 = vld [vmem:[%s349 + $0x14c] sm:$0xf]
        %v522 = vld [vmem:[%s349 + $0x150] sm:$0xff]
        %v523 = vld [vmem:[%s349 + $0x158] sm:$0xf]
        %v524 = vld [vmem:[%s349 + $0x15c] sm:$0xff]
        %v525 = vld [vmem:[%s349 + $0x164] sm:$0xf]
        %v526 = vld [vmem:[%s349 + $0x168] sm:$0xff]
        %v527 = vld [vmem:[%s349 + $0x170] sm:$0xf]
        %v528 = vld [vmem:[%s349 + $0x174] sm:$0xff]
        %v529 = vld [vmem:[%s349 + $0x17c] sm:$0xf]
        %v530 = vld [vmem:[%s383] sm:$0xf]
        %v531 = vld [vmem:[%s383 + $0x4] sm:$0xf]
        %v532 = vld [vmem:[%s383 + $0x8] sm:$0xf]
        %v533 = vld [vmem:[%s383 + $0xc] sm:$0xf]
        %v534 = vld [vmem:[%s383 + $0x10] sm:$0xf]
        %v535 = vld [vmem:[%s383 + $0x14] sm:$0xf]
        %v536 = vld [vmem:[%s383 + $0x18] sm:$0xf]
        %v537 = vld [vmem:[%s383 + $0x1c] sm:$0xf]
        %v538 = vld [vmem:[%s383 + $0x20] sm:$0xf]
        %v539 = vld [vmem:[%s383 + $0x24] sm:$0xf]
        %v540 = vld [vmem:[%s383 + $0x28] sm:$0xf]
        %v541 = vld [vmem:[%s383 + $0x2c] sm:$0xf]
        %v542 = vld [vmem:[%s383 + $0x30] sm:$0xf]
        %v543 = vld [vmem:[%s383 + $0x34] sm:$0xf]
        %v544 = vld [vmem:[%s383 + $0x38] sm:$0xf]
        %v545 = vld [vmem:[%s383 + $0x3c] sm:$0xf]
        %v546 = vld [vmem:[%s383 + $0x40] sm:$0xf]
        %v547 = vld [vmem:[%s383 + $0x44] sm:$0xf]
        %v548 = vld [vmem:[%s383 + $0x48] sm:$0xf]
        %v549 = vld [vmem:[%s383 + $0x4c] sm:$0xf]
        %v550 = vld [vmem:[%s383 + $0x50] sm:$0xf]
        %v551 = vld [vmem:[%s383 + $0x54] sm:$0xf]
        %v552 = vld [vmem:[%s383 + $0x58] sm:$0xf]
        %v553 = vld [vmem:[%s383 + $0x5c] sm:$0xf]
        %v554 = vld [vmem:[%s383 + $0x60] sm:$0xf]
        %v555 = vld [vmem:[%s383 + $0x64] sm:$0xf]
        %v556 = vld [vmem:[%s383 + $0x68] sm:$0xf]
        %v557 = vld [vmem:[%s383 + $0x6c] sm:$0xf]
        %v558 = vld [vmem:[%s383 + $0x70] sm:$0xf]
        %v559 = vld [vmem:[%s383 + $0x74] sm:$0xf]
        %v560 = vld [vmem:[%s383 + $0x78] sm:$0xf]
        %v561 = vld [vmem:[%s383 + $0x7c] sm:$0xf]
        %v562 = vld [vmem:[%s383 + $0x80] sm:$0xf]
        %v563 = vld [vmem:[%s383 + $0x84] sm:$0xf]
        %v564 = vld [vmem:[%s383 + $0x88] sm:$0xf]
        %v565 = vld [vmem:[%s383 + $0x8c] sm:$0xf]
        %v566 = vld [vmem:[%s383 + $0x90] sm:$0xf]
        %v567 = vld [vmem:[%s383 + $0x94] sm:$0xf]
        %v568 = vld [vmem:[%s383 + $0x98] sm:$0xf]
        %v569 = vld [vmem:[%s383 + $0x9c] sm:$0xf]
        %v570 = vld [vmem:[%s383 + $0xa0] sm:$0xf]
        %v571 = vld [vmem:[%s383 + $0xa4] sm:$0xf]
        %v572 = vld [vmem:[%s383 + $0xa8] sm:$0xf]
        %v573 = vld [vmem:[%s383 + $0xac] sm:$0xf]
        %v574 = vld [vmem:[%s383 + $0xb0] sm:$0xf]
        %v575 = vld [vmem:[%s383 + $0xb4] sm:$0xf]
        %v576 = vld [vmem:[%s383 + $0xb8] sm:$0xf]
        %v577 = vld [vmem:[%s383 + $0xbc] sm:$0xf]
        %v642 = vunpack.c.l.b16 %v466
        %v643 = vunpack.c.h.b16 %v466
        %v644 = vunpack.c.l.b16 %v467
        %v645 = vunpack.c.l.b16 %v468
        %v646 = vunpack.c.h.b16 %v468
        %v647 = vunpack.c.l.b16 %v469
        %v648 = vunpack.c.l.b16 %v470
        %v649 = vunpack.c.h.b16 %v470
        %v650 = vunpack.c.l.b16 %v471
        %v651 = vunpack.c.l.b16 %v472
        %v652 = vunpack.c.h.b16 %v472
        %v653 = vunpack.c.l.b16 %v473
        %v654 = vunpack.c.l.b16 %v474
        %v655 = vunpack.c.h.b16 %v474
        %v656 = vunpack.c.l.b16 %v475
        %v657 = vunpack.c.l.b16 %v476
        %v658 = vunpack.c.h.b16 %v476
        %v659 = vunpack.c.l.b16 %v477
        %v660 = vunpack.c.l.b16 %v478
        %v661 = vunpack.c.h.b16 %v478
        %v662 = vunpack.c.l.b16 %v479
        %v663 = vunpack.c.l.b16 %v480
        %v664 = vunpack.c.h.b16 %v480
        %v665 = vunpack.c.l.b16 %v481
        %v666 = vunpack.c.l.b16 %v482
        %v667 = vunpack.c.h.b16 %v482
        %v668 = vunpack.c.l.b16 %v483
        %v669 = vunpack.c.l.b16 %v484
        %v670 = vunpack.c.h.b16 %v484
        %v671 = vunpack.c.l.b16 %v485
        %v672 = vunpack.c.l.b16 %v486
        %v673 = vunpack.c.h.b16 %v486
        %v674 = vunpack.c.l.b16 %v487
        %v675 = vunpack.c.l.b16 %v488
        %v676 = vunpack.c.h.b16 %v488
        %v677 = vunpack.c.l.b16 %v489
        %v678 = vunpack.c.l.b16 %v490
        %v679 = vunpack.c.h.b16 %v490
        %v680 = vunpack.c.l.b16 %v491
        %v681 = vunpack.c.l.b16 %v492
        %v682 = vunpack.c.h.b16 %v492
        %v683 = vunpack.c.l.b16 %v493
        %v684 = vunpack.c.l.b16 %v494
        %v685 = vunpack.c.h.b16 %v494
        %v686 = vunpack.c.l.b16 %v495
        %v687 = vunpack.c.l.b16 %v496
        %v688 = vunpack.c.h.b16 %v496
        %v689 = vunpack.c.l.b16 %v497
        %v690 = vunpack.c.l.b16 %v498
        %v691 = vunpack.c.h.b16 %v498
        %v692 = vunpack.c.l.b16 %v499
        %v693 = vunpack.c.l.b16 %v500
        %v694 = vunpack.c.h.b16 %v500
        %v695 = vunpack.c.l.b16 %v501
        %v696 = vunpack.c.l.b16 %v502
        %v697 = vunpack.c.h.b16 %v502
        %v698 = vunpack.c.l.b16 %v503
        %v699 = vunpack.c.l.b16 %v504
        %v700 = vunpack.c.h.b16 %v504
        %v701 = vunpack.c.l.b16 %v505
        %v702 = vunpack.c.l.b16 %v506
        %v703 = vunpack.c.h.b16 %v506
        %v704 = vunpack.c.l.b16 %v507
        %v705 = vunpack.c.l.b16 %v508
        %v706 = vunpack.c.h.b16 %v508
        %v707 = vunpack.c.l.b16 %v509
        %v708 = vunpack.c.l.b16 %v510
        %v709 = vunpack.c.h.b16 %v510
        %v710 = vunpack.c.l.b16 %v511
        %v711 = vunpack.c.l.b16 %v512
        %v712 = vunpack.c.h.b16 %v512
        %v713 = vunpack.c.l.b16 %v513
        %v714 = vunpack.c.l.b16 %v514
        %v715 = vunpack.c.h.b16 %v514
        %v716 = vunpack.c.l.b16 %v515
        %v717 = vunpack.c.l.b16 %v516
        %v718 = vunpack.c.h.b16 %v516
        %v719 = vunpack.c.l.b16 %v517
        %v720 = vunpack.c.l.b16 %v518
        %v721 = vunpack.c.h.b16 %v518
        %v722 = vunpack.c.l.b16 %v519
        %v723 = vunpack.c.l.b16 %v520
        %v724 = vunpack.c.h.b16 %v520
        %v725 = vunpack.c.l.b16 %v521
        %v726 = vunpack.c.l.b16 %v522
        %v727 = vunpack.c.h.b16 %v522
        %v728 = vunpack.c.l.b16 %v523
        %v729 = vunpack.c.l.b16 %v524
        %v730 = vunpack.c.h.b16 %v524
        %v731 = vunpack.c.l.b16 %v525
        %v732 = vunpack.c.l.b16 %v526
        %v733 = vunpack.c.h.b16 %v526
        %v734 = vunpack.c.l.b16 %v527
        %v735 = vunpack.c.l.b16 %v528
        %v736 = vunpack.c.h.b16 %v528
        %v737 = vunpack.c.l.b16 %v529
        %v738 = vpack.c.b16 %v645, %v642
        %v739 = vpack.c.b16 %v646, %v643
        %v740 = vpack.c.b16 %v647, %v644
        %v741 = vpack.c.b16 %v651, %v648
        %v742 = vpack.c.b16 %v652, %v649
        %v743 = vpack.c.b16 %v653, %v650
        %v744 = vpack.c.b16 %v657, %v654
        %v745 = vpack.c.b16 %v658, %v655
        %v746 = vpack.c.b16 %v659, %v656
        %v747 = vpack.c.b16 %v663, %v660
        %v748 = vpack.c.b16 %v664, %v661
        %v749 = vpack.c.b16 %v665, %v662
        %v750 = vpack.c.b16 %v669, %v666
        %v751 = vpack.c.b16 %v670, %v667
        %v752 = vpack.c.b16 %v671, %v668
        %v753 = vpack.c.b16 %v675, %v672
        %v754 = vpack.c.b16 %v676, %v673
        %v755 = vpack.c.b16 %v677, %v674
        %v756 = vpack.c.b16 %v681, %v678
        %v757 = vpack.c.b16 %v682, %v679
        %v758 = vpack.c.b16 %v683, %v680
        %v759 = vpack.c.b16 %v687, %v684
        %v760 = vpack.c.b16 %v688, %v685
        %v761 = vpack.c.b16 %v689, %v686
        %v762 = vpack.c.b16 %v693, %v690
        %v763 = vpack.c.b16 %v694, %v691
        %v764 = vpack.c.b16 %v695, %v692
        %v765 = vpack.c.b16 %v699, %v696
        %v766 = vpack.c.b16 %v700, %v697
        %v767 = vpack.c.b16 %v701, %v698
        %v768 = vpack.c.b16 %v705, %v702
        %v769 = vpack.c.b16 %v706, %v703
        %v770 = vpack.c.b16 %v707, %v704
        %v771 = vpack.c.b16 %v711, %v708
        %v772 = vpack.c.b16 %v712, %v709
        %v773 = vpack.c.b16 %v713, %v710
        %v774 = vpack.c.b16 %v717, %v714
        %v775 = vpack.c.b16 %v718, %v715
        %v776 = vpack.c.b16 %v719, %v716
        %v777 = vpack.c.b16 %v723, %v720
        %v778 = vpack.c.b16 %v724, %v721
        %v779 = vpack.c.b16 %v725, %v722
        %v780 = vpack.c.b16 %v729, %v726
        %v781 = vpack.c.b16 %v730, %v727
        %v782 = vpack.c.b16 %v731, %v728
        %v783 = vpack.c.b16 %v735, %v732
        %v784 = vpack.c.b16 %v736, %v733
        %v785 = vpack.c.b16 %v737, %v734
        %v882 = vunpack.c.l.b16 %v530
        %v883 = vunpack.c.l.b16 %v531
        %v884 = vunpack.c.l.b16 %v532
        %v885 = vunpack.c.l.b16 %v533
        %v886 = vunpack.c.l.b16 %v534
        %v887 = vunpack.c.l.b16 %v535
        %v888 = vunpack.c.l.b16 %v536
        %v889 = vunpack.c.l.b16 %v537
        %v890 = vunpack.c.l.b16 %v538
        %v891 = vunpack.c.l.b16 %v539
        %v892 = vunpack.c.l.b16 %v540
        %v893 = vunpack.c.l.b16 %v541
        %v894 = vunpack.c.l.b16 %v542
        %v895 = vunpack.c.l.b16 %v543
        %v896 = vunpack.c.l.b16 %v544
        %v897 = vunpack.c.l.b16 %v545
        %v898 = vunpack.c.l.b16 %v546
        %v899 = vunpack.c.l.b16 %v547
        %v900 = vunpack.c.l.b16 %v548
        %v901 = vunpack.c.l.b16 %v549
        %v902 = vunpack.c.l.b16 %v550
        %v903 = vunpack.c.l.b16 %v551
        %v904 = vunpack.c.l.b16 %v552
        %v905 = vunpack.c.l.b16 %v553
        %v906 = vunpack.c.l.b16 %v554
        %v907 = vunpack.c.l.b16 %v555
        %v908 = vunpack.c.l.b16 %v556
        %v909 = vunpack.c.l.b16 %v557
        %v910 = vunpack.c.l.b16 %v558
        %v911 = vunpack.c.l.b16 %v559
        %v912 = vunpack.c.l.b16 %v560
        %v913 = vunpack.c.l.b16 %v561
        %v914 = vunpack.c.l.b16 %v562
        %v915 = vunpack.c.l.b16 %v563
        %v916 = vunpack.c.l.b16 %v564
        %v917 = vunpack.c.l.b16 %v565
        %v918 = vunpack.c.l.b16 %v566
        %v919 = vunpack.c.l.b16 %v567
        %v920 = vunpack.c.l.b16 %v568
        %v921 = vunpack.c.l.b16 %v569
        %v922 = vunpack.c.l.b16 %v570
        %v923 = vunpack.c.l.b16 %v571
        %v924 = vunpack.c.l.b16 %v572
        %v925 = vunpack.c.l.b16 %v573
        %v926 = vunpack.c.l.b16 %v574
        %v927 = vunpack.c.l.b16 %v575
        %v928 = vunpack.c.l.b16 %v576
        %v929 = vunpack.c.l.b16 %v577
        %v930 = vpack.c.b16 %v883, %v882
        %v931 = vpack.c.b16 %v885, %v884
        %v932 = vpack.c.b16 %v887, %v886
        %v933 = vpack.c.b16 %v889, %v888
        %v934 = vpack.c.b16 %v891, %v890
        %v935 = vpack.c.b16 %v893, %v892
        %v936 = vpack.c.b16 %v895, %v894
        %v937 = vpack.c.b16 %v897, %v896
        %v938 = vpack.c.b16 %v899, %v898
        %v939 = vpack.c.b16 %v901, %v900
        %v940 = vpack.c.b16 %v903, %v902
        %v941 = vpack.c.b16 %v905, %v904
        %v942 = vpack.c.b16 %v907, %v906
        %v943 = vpack.c.b16 %v909, %v908
        %v944 = vpack.c.b16 %v911, %v910
        %v945 = vpack.c.b16 %v913, %v912
        %v946 = vpack.c.b16 %v915, %v914
        %v947 = vpack.c.b16 %v917, %v916
        %v948 = vpack.c.b16 %v919, %v918
        %v949 = vpack.c.b16 %v921, %v920
        %v950 = vpack.c.b16 %v923, %v922
        %v951 = vpack.c.b16 %v925, %v924
        %v952 = vpack.c.b16 %v927, %v926
        %v953 = vpack.c.b16 %v929, %v928
        %978 = vmatpush.bf16.msra.mxu0 %v937
        %979 = vmatpush.bf16.msra.mxu0 %v936
        %980 = vmatpush.bf16.msra.mxu0 %v935
        %981 = vmatpush.bf16.msra.mxu0 %v934
        %982 = vmatpush.bf16.msra.mxu0 %v933
        %983 = vmatpush.bf16.msra.mxu0 %v932
        %984 = vmatpush.bf16.msra.mxu0 %v931
        %985 = vmatpush.bf16.msra.mxu0 %v930
        %986 = vmatmul.bf16.gmra.mxu0 %v738
        %v987 = vpop.f32.mrf.mxu0
        %v988 = vadd.f32 0.0, %v987
        %v989 = vpop.f32.mrf.mxu0
        %v990 = vadd.f32 0.0, %v989
        %991 = vmatmul.bf16.gmra.mxu0 %v741
        %v992 = vpop.f32.mrf.mxu0
        %v993 = vadd.f32 0.0, %v992
        %v994 = vpop.f32.mrf.mxu0
        %v995 = vadd.f32 0.0, %v994
        %996 = vmatmul.bf16.gmra.mxu0 %v744
        %v997 = vpop.f32.mrf.mxu0
        %v998 = vadd.f32 0.0, %v997
        %v999 = vpop.f32.mrf.mxu0
        %v1000 = vadd.f32 0.0, %v999
        %1001 = vmatmul.bf16.gmra.mxu0 %v747
        %v1002 = vpop.f32.mrf.mxu0
        %v1003 = vadd.f32 0.0, %v1002
        %v1004 = vpop.f32.mrf.mxu0
        %v1005 = vadd.f32 0.0, %v1004
        %1006 = vmatmul.bf16.gmra.mxu0 %v750
        %v1007 = vpop.f32.mrf.mxu0
        %v1008 = vadd.f32 0.0, %v1007
        %v1009 = vpop.f32.mrf.mxu0
        %v1010 = vadd.f32 0.0, %v1009
        %1011 = vmatmul.bf16.gmra.mxu0 %v753
        %v1012 = vpop.f32.mrf.mxu0
        %v1013 = vadd.f32 0.0, %v1012
        %v1014 = vpop.f32.mrf.mxu0
        %v1015 = vadd.f32 0.0, %v1014
        %1016 = vmatmul.bf16.gmra.mxu0 %v756
        %v1017 = vpop.f32.mrf.mxu0
        %v1018 = vadd.f32 0.0, %v1017
        %v1019 = vpop.f32.mrf.mxu0
        %v1020 = vadd.f32 0.0, %v1019
        %1021 = vmatmul.bf16.gmra.mxu0 %v759
        %v1022 = vpop.f32.mrf.mxu0
        %v1023 = vadd.f32 0.0, %v1022
        %v1024 = vpop.f32.mrf.mxu0
        %v1025 = vadd.f32 0.0, %v1024
        %1026 = vmatmul.bf16.gmra.mxu0 %v762
        %v1027 = vpop.f32.mrf.mxu0
        %v1028 = vadd.f32 0.0, %v1027
        %v1029 = vpop.f32.mrf.mxu0
        %v1030 = vadd.f32 0.0, %v1029
        %1031 = vmatmul.bf16.gmra.mxu0 %v765
        %v1032 = vpop.f32.mrf.mxu0
        %v1033 = vadd.f32 0.0, %v1032
        %v1034 = vpop.f32.mrf.mxu0
        %v1035 = vadd.f32 0.0, %v1034
        %1036 = vmatmul.bf16.gmra.mxu0 %v768
        %v1037 = vpop.f32.mrf.mxu0
        %v1038 = vadd.f32 0.0, %v1037
        %v1039 = vpop.f32.mrf.mxu0
        %v1040 = vadd.f32 0.0, %v1039
        %1041 = vmatmul.bf16.gmra.mxu0 %v771
        %v1042 = vpop.f32.mrf.mxu0
        %v1043 = vadd.f32 0.0, %v1042
        %v1044 = vpop.f32.mrf.mxu0
        %v1045 = vadd.f32 0.0, %v1044
        %1046 = vmatmul.bf16.gmra.mxu0 %v774
        %v1047 = vpop.f32.mrf.mxu0
        %v1048 = vadd.f32 0.0, %v1047
        %v1049 = vpop.f32.mrf.mxu0
        %v1050 = vadd.f32 0.0, %v1049
        %1051 = vmatmul.bf16.gmra.mxu0 %v777
        %v1052 = vpop.f32.mrf.mxu0
        %v1053 = vadd.f32 0.0, %v1052
        %v1054 = vpop.f32.mrf.mxu0
        %v1055 = vadd.f32 0.0, %v1054
        %1056 = vmatmul.bf16.gmra.mxu0 %v780
        %v1057 = vpop.f32.mrf.mxu0
        %v1058 = vadd.f32 0.0, %v1057
        %v1059 = vpop.f32.mrf.mxu0
        %v1060 = vadd.f32 0.0, %v1059
        %1061 = vmatmul.bf16.gmra.mxu0 %v783
        %v1062 = vpop.f32.mrf.mxu0
        %v1063 = vadd.f32 0.0, %v1062
        %v1064 = vpop.f32.mrf.mxu0
        %v1065 = vadd.f32 0.0, %v1064
        %1066 = vdwg.mxu0
        %1067 = vmatpush.bf16.msra.mxu0 %v945
        %1068 = vmatpush.bf16.msra.mxu0 %v944
        %1069 = vmatpush.bf16.msra.mxu0 %v943
        %1070 = vmatpush.bf16.msra.mxu0 %v942
        %1071 = vmatpush.bf16.msra.mxu0 %v941
        %1072 = vmatpush.bf16.msra.mxu0 %v940
        %1073 = vmatpush.bf16.msra.mxu0 %v939
        %1074 = vmatpush.bf16.msra.mxu0 %v938
        %1075 = vmatmul.bf16.gmra.mxu0 %v739
        %v1076 = vpop.f32.mrf.mxu0
        %v1077 = vadd.f32 %v988, %v1076
        %v1078 = vpop.f32.mrf.mxu0
        %v1079 = vadd.f32 %v990, %v1078
        %1080 = vmatmul.bf16.gmra.mxu0 %v742
        %v1081 = vpop.f32.mrf.mxu0
        %v1082 = vadd.f32 %v993, %v1081
        %v1083 = vpop.f32.mrf.mxu0
        %v1084 = vadd.f32 %v995, %v1083
        %1085 = vmatmul.bf16.gmra.mxu0 %v745
        %v1086 = vpop.f32.mrf.mxu0
        %v1087 = vadd.f32 %v998, %v1086
        %v1088 = vpop.f32.mrf.mxu0
        %v1089 = vadd.f32 %v1000, %v1088
        %1090 = vmatmul.bf16.gmra.mxu0 %v748
        %v1091 = vpop.f32.mrf.mxu0
        %v1092 = vadd.f32 %v1003, %v1091
        %v1093 = vpop.f32.mrf.mxu0
        %v1094 = vadd.f32 %v1005, %v1093
        %1095 = vmatmul.bf16.gmra.mxu0 %v751
        %v1096 = vpop.f32.mrf.mxu0
        %v1097 = vadd.f32 %v1008, %v1096
        %v1098 = vpop.f32.mrf.mxu0
        %v1099 = vadd.f32 %v1010, %v1098
        %1100 = vmatmul.bf16.gmra.mxu0 %v754
        %v1101 = vpop.f32.mrf.mxu0
        %v1102 = vadd.f32 %v1013, %v1101
        %v1103 = vpop.f32.mrf.mxu0
        %v1104 = vadd.f32 %v1015, %v1103
        %1105 = vmatmul.bf16.gmra.mxu0 %v757
        %v1106 = vpop.f32.mrf.mxu0
        %v1107 = vadd.f32 %v1018, %v1106
        %v1108 = vpop.f32.mrf.mxu0
        %v1109 = vadd.f32 %v1020, %v1108
        %1110 = vmatmul.bf16.gmra.mxu0 %v760
        %v1111 = vpop.f32.mrf.mxu0
        %v1112 = vadd.f32 %v1023, %v1111
        %v1113 = vpop.f32.mrf.mxu0
        %v1114 = vadd.f32 %v1025, %v1113
        %1115 = vmatmul.bf16.gmra.mxu0 %v763
        %v1116 = vpop.f32.mrf.mxu0
        %v1117 = vadd.f32 %v1028, %v1116
        %v1118 = vpop.f32.mrf.mxu0
        %v1119 = vadd.f32 %v1030, %v1118
        %1120 = vmatmul.bf16.gmra.mxu0 %v766
        %v1121 = vpop.f32.mrf.mxu0
        %v1122 = vadd.f32 %v1033, %v1121
        %v1123 = vpop.f32.mrf.mxu0
        %v1124 = vadd.f32 %v1035, %v1123
        %1125 = vmatmul.bf16.gmra.mxu0 %v769
        %v1126 = vpop.f32.mrf.mxu0
        %v1127 = vadd.f32 %v1038, %v1126
        %v1128 = vpop.f32.mrf.mxu0
        %v1129 = vadd.f32 %v1040, %v1128
        %1130 = vmatmul.bf16.gmra.mxu0 %v772
        %v1131 = vpop.f32.mrf.mxu0
        %v1132 = vadd.f32 %v1043, %v1131
        %v1133 = vpop.f32.mrf.mxu0
        %v1134 = vadd.f32 %v1045, %v1133
        %1135 = vmatmul.bf16.gmra.mxu0 %v775
        %v1136 = vpop.f32.mrf.mxu0
        %v1137 = vadd.f32 %v1048, %v1136
        %v1138 = vpop.f32.mrf.mxu0
        %v1139 = vadd.f32 %v1050, %v1138
        %1140 = vmatmul.bf16.gmra.mxu0 %v778
        %v1141 = vpop.f32.mrf.mxu0
        %v1142 = vadd.f32 %v1053, %v1141
        %v1143 = vpop.f32.mrf.mxu0
        %v1144 = vadd.f32 %v1055, %v1143
        %1145 = vmatmul.bf16.gmra.mxu0 %v781
        %v1146 = vpop.f32.mrf.mxu0
        %v1147 = vadd.f32 %v1058, %v1146
        %v1148 = vpop.f32.mrf.mxu0
        %v1149 = vadd.f32 %v1060, %v1148
        %1150 = vmatmul.bf16.gmra.mxu0 %v784
        %v1151 = vpop.f32.mrf.mxu0
        %v1152 = vadd.f32 %v1063, %v1151
        %v1153 = vpop.f32.mrf.mxu0
        %v1154 = vadd.f32 %v1065, %v1153
        %1155 = vdwg.mxu0
        %1156 = vmatpush.bf16.msra.mxu0 %v953
        %1157 = vmatpush.bf16.msra.mxu0 %v952
        %1158 = vmatpush.bf16.msra.mxu0 %v951
        %1159 = vmatpush.bf16.msra.mxu0 %v950
        %1160 = vmatpush.bf16.msra.mxu0 %v949
        %1161 = vmatpush.bf16.msra.mxu0 %v948
        %1162 = vmatpush.bf16.msra.mxu0 %v947
        %1163 = vmatpush.bf16.msra.mxu0 %v946
        %1164 = vmatmul.bf16.gmra.mxu0 %v740
        %v1165 = vpop.f32.mrf.mxu0
        %v1166 = vadd.f32 %v1077, %v1165
        %v1167 = vpop.f32.mrf.mxu0
        %v1168 = vadd.f32 %v1079, %v1167
        %1169 = vmatmul.bf16.gmra.mxu0 %v743
        %v1170 = vpop.f32.mrf.mxu0
        %v1171 = vadd.f32 %v1082, %v1170
        %v1172 = vpop.f32.mrf.mxu0
        %v1173 = vadd.f32 %v1084, %v1172
        %1174 = vmatmul.bf16.gmra.mxu0 %v746
        %v1175 = vpop.f32.mrf.mxu0
        %v1176 = vadd.f32 %v1087, %v1175
        %v1177 = vpop.f32.mrf.mxu0
        %v1178 = vadd.f32 %v1089, %v1177
        %1179 = vmatmul.bf16.gmra.mxu0 %v749
        %v1180 = vpop.f32.mrf.mxu0
        %v1181 = vadd.f32 %v1092, %v1180
        %v1182 = vpop.f32.mrf.mxu0
        %v1183 = vadd.f32 %v1094, %v1182
        %1184 = vmatmul.bf16.gmra.mxu0 %v752
        %v1185 = vpop.f32.mrf.mxu0
        %v1186 = vadd.f32 %v1097, %v1185
        %v1187 = vpop.f32.mrf.mxu0
        %v1188 = vadd.f32 %v1099, %v1187
        %1189 = vmatmul.bf16.gmra.mxu0 %v755
        %v1190 = vpop.f32.mrf.mxu0
        %v1191 = vadd.f32 %v1102, %v1190
        %v1192 = vpop.f32.mrf.mxu0
        %v1193 = vadd.f32 %v1104, %v1192
        %1194 = vmatmul.bf16.gmra.mxu0 %v758
        %v1195 = vpop.f32.mrf.mxu0
        %v1196 = vadd.f32 %v1107, %v1195
        %v1197 = vpop.f32.mrf.mxu0
        %v1198 = vadd.f32 %v1109, %v1197
        %1199 = vmatmul.bf16.gmra.mxu0 %v761
        %v1200 = vpop.f32.mrf.mxu0
        %v1201 = vadd.f32 %v1112, %v1200
        %v1202 = vpop.f32.mrf.mxu0
        %v1203 = vadd.f32 %v1114, %v1202
        %1204 = vmatmul.bf16.gmra.mxu0 %v764
        %v1205 = vpop.f32.mrf.mxu0
        %v1206 = vadd.f32 %v1117, %v1205
        %v1207 = vpop.f32.mrf.mxu0
        %v1208 = vadd.f32 %v1119, %v1207
        %1209 = vmatmul.bf16.gmra.mxu0 %v767
        %v1210 = vpop.f32.mrf.mxu0
        %v1211 = vadd.f32 %v1122, %v1210
        %v1212 = vpop.f32.mrf.mxu0
        %v1213 = vadd.f32 %v1124, %v1212
        %1214 = vmatmul.bf16.gmra.mxu0 %v770
        %v1215 = vpop.f32.mrf.mxu0
        %v1216 = vadd.f32 %v1127, %v1215
        %v1217 = vpop.f32.mrf.mxu0
        %v1218 = vadd.f32 %v1129, %v1217
        %1219 = vmatmul.bf16.gmra.mxu0 %v773
        %v1220 = vpop.f32.mrf.mxu0
        %v1221 = vadd.f32 %v1132, %v1220
        %v1222 = vpop.f32.mrf.mxu0
        %v1223 = vadd.f32 %v1134, %v1222
        %1224 = vmatmul.bf16.gmra.mxu0 %v776
        %v1225 = vpop.f32.mrf.mxu0
        %v1226 = vadd.f32 %v1137, %v1225
        %v1227 = vpop.f32.mrf.mxu0
        %v1228 = vadd.f32 %v1139, %v1227
        %1229 = vmatmul.bf16.gmra.mxu0 %v779
        %v1230 = vpop.f32.mrf.mxu0
        %v1231 = vadd.f32 %v1142, %v1230
        %v1232 = vpop.f32.mrf.mxu0
        %v1233 = vadd.f32 %v1144, %v1232
        %1234 = vmatmul.bf16.gmra.mxu0 %v782
        %v1235 = vpop.f32.mrf.mxu0
        %v1236 = vadd.f32 %v1147, %v1235
        %v1237 = vpop.f32.mrf.mxu0
        %v1238 = vadd.f32 %v1149, %v1237
        %1239 = vmatmul.bf16.gmra.mxu0 %v785
        %v1240 = vpop.f32.mrf.mxu0
        %v1241 = vadd.f32 %v1152, %v1240
        %v1242 = vpop.f32.mrf.mxu0
        %v1243 = vadd.f32 %v1154, %v1242
        %1244 = vdwg.mxu0
        %v1245 = vadd.f32 %v434, %v1166
        %v1246 = vadd.f32 %v435, %v1168
        %v1247 = vadd.f32 %v436, %v1171
        %v1248 = vadd.f32 %v437, %v1173
        %v1249 = vadd.f32 %v438, %v1176
        %v1250 = vadd.f32 %v439, %v1178
        %v1251 = vadd.f32 %v440, %v1181
        %v1252 = vadd.f32 %v441, %v1183
        %v1253 = vadd.f32 %v442, %v1186
        %v1254 = vadd.f32 %v443, %v1188
        %v1255 = vadd.f32 %v444, %v1191
        %v1256 = vadd.f32 %v445, %v1193
        %v1257 = vadd.f32 %v446, %v1196
        %v1258 = vadd.f32 %v447, %v1198
        %v1259 = vadd.f32 %v448, %v1201
        %v1260 = vadd.f32 %v449, %v1203
        %v1261 = vadd.f32 %v450, %v1206
        %v1262 = vadd.f32 %v451, %v1208
        %v1263 = vadd.f32 %v452, %v1211
        %v1264 = vadd.f32 %v453, %v1213
        %v1265 = vadd.f32 %v454, %v1216
        %v1266 = vadd.f32 %v455, %v1218
        %v1267 = vadd.f32 %v456, %v1221
        %v1268 = vadd.f32 %v457, %v1223
        %v1269 = vadd.f32 %v458, %v1226
        %v1270 = vadd.f32 %v459, %v1228
        %v1271 = vadd.f32 %v460, %v1231
        %v1272 = vadd.f32 %v461, %v1233
        %v1273 = vadd.f32 %v462, %v1236
        %v1274 = vadd.f32 %v463, %v1238
        %v1275 = vadd.f32 %v464, %v1241
        %v1276 = vadd.f32 %v465, %v1243
        %1277 = vst [vmem:[#allocation2] sm:$0xff] %v1245
        %1278 = vst [vmem:[#allocation2 + $0x8] sm:$0xff] %v1246
        %1279 = vst [vmem:[#allocation2 + $0x10] sm:$0xff] %v1247
        %1280 = vst [vmem:[#allocation2 + $0x18] sm:$0xff] %v1248
        %1281 = vst [vmem:[#allocation2 + $0x20] sm:$0xff] %v1249
        %1282 = vst [vmem:[#allocation2 + $0x28] sm:$0xff] %v1250
        %1283 = vst [vmem:[#allocation2 + $0x30] sm:$0xff] %v1251
        %1284 = vst [vmem:[#allocation2 + $0x38] sm:$0xff] %v1252
        %1285 = vst [vmem:[#allocation2 + $0x40] sm:$0xff] %v1253
        %1286 = vst [vmem:[#allocation2 + $0x48] sm:$0xff] %v1254
        %1287 = vst [vmem:[#allocation2 + $0x50] sm:$0xff] %v1255
        %1288 = vst [vmem:[#allocation2 + $0x58] sm:$0xff] %v1256
        %1289 = vst [vmem:[#allocation2 + $0x60] sm:$0xff] %v1257
        %1290 = vst [vmem:[#allocation2 + $0x68] sm:$0xff] %v1258
        %1291 = vst [vmem:[#allocation2 + $0x70] sm:$0xff] %v1259
        %1292 = vst [vmem:[#allocation2 + $0x78] sm:$0xff] %v1260
        %1293 = vst [vmem:[#allocation2 + $0x80] sm:$0xff] %v1261
        %1294 = vst [vmem:[#allocation2 + $0x88] sm:$0xff] %v1262
        %1295 = vst [vmem:[#allocation2 + $0x90] sm:$0xff] %v1263
        %1296 = vst [vmem:[#allocation2 + $0x98] sm:$0xff] %v1264
        %1297 = vst [vmem:[#allocation2 + $0xa0] sm:$0xff] %v1265
        %1298 = vst [vmem:[#allocation2 + $0xa8] sm:$0xff] %v1266
        %1299 = vst [vmem:[#allocation2 + $0xb0] sm:$0xff] %v1267
        %1300 = vst [vmem:[#allocation2 + $0xb8] sm:$0xff] %v1268
        %1301 = vst [vmem:[#allocation2 + $0xc0] sm:$0xff] %v1269
        %1302 = vst [vmem:[#allocation2 + $0xc8] sm:$0xff] %v1270
        %1303 = vst [vmem:[#allocation2 + $0xd0] sm:$0xff] %v1271
        %1304 = vst [vmem:[#allocation2 + $0xd8] sm:$0xff] %v1272
        %1305 = vst [vmem:[#allocation2 + $0xe0] sm:$0xff] %v1273
        %1306 = vst [vmem:[#allocation2 + $0xe8] sm:$0xff] %v1274
        %1307 = vst [vmem:[#allocation2 + $0xf0] sm:$0xff] %v1275
        %1308 = vst [vmem:[#allocation2 + $0xf8] sm:$0xff] %v1276
        %p1309 = scmp.eq.s32.totalorder %s21, 2
        // Predicated region
        $region63: #{basic_block_forward.10} parent=49 // pred_check
          %p1310 = pneg %p1309
        $region64: #{basic_block_forward.10} parent=49 // pred_check_branch
          %1312 = sbr.rel (%p1310) target = $region66
        $region65: #{basic_block_forward.10} parent=49 // pred_region
          %v1313 = vld [vmem:[#allocation2] sm:$0xff]
          %v1314 = vld [vmem:[#allocation2 + $0x8] sm:$0xff]
          %v1315 = vld [vmem:[#allocation2 + $0x10] sm:$0xff]
          %v1316 = vld [vmem:[#allocation2 + $0x18] sm:$0xff]
          %v1317 = vld [vmem:[#allocation2 + $0x20] sm:$0xff]
          %v1318 = vld [vmem:[#allocation2 + $0x28] sm:$0xff]
          %v1319 = vld [vmem:[#allocation2 + $0x30] sm:$0xff]
          %v1320 = vld [vmem:[#allocation2 + $0x38] sm:$0xff]
          %v1321 = vld [vmem:[#allocation2 + $0x40] sm:$0xff]
          %v1322 = vld [vmem:[#allocation2 + $0x48] sm:$0xff]
          %v1323 = vld [vmem:[#allocation2 + $0x50] sm:$0xff]
          %v1324 = vld [vmem:[#allocation2 + $0x58] sm:$0xff]
          %v1325 = vld [vmem:[#allocation2 + $0x60] sm:$0xff]
          %v1326 = vld [vmem:[#allocation2 + $0x68] sm:$0xff]
          %v1327 = vld [vmem:[#allocation2 + $0x70] sm:$0xff]
          %v1328 = vld [vmem:[#allocation2 + $0x78] sm:$0xff]
          %v1329 = vld [vmem:[#allocation2 + $0x80] sm:$0xff]
          %v1330 = vld [vmem:[#allocation2 + $0x88] sm:$0xff]
          %v1331 = vld [vmem:[#allocation2 + $0x90] sm:$0xff]
          %v1332 = vld [vmem:[#allocation2 + $0x98] sm:$0xff]
          %v1333 = vld [vmem:[#allocation2 + $0xa0] sm:$0xff]
          %v1334 = vld [vmem:[#allocation2 + $0xa8] sm:$0xff]
          %v1335 = vld [vmem:[#allocation2 + $0xb0] sm:$0xff]
          %v1336 = vld [vmem:[#allocation2 + $0xb8] sm:$0xff]
          %v1337 = vld [vmem:[#allocation2 + $0xc0] sm:$0xff]
          %v1338 = vld [vmem:[#allocation2 + $0xc8] sm:$0xff]
          %v1339 = vld [vmem:[#allocation2 + $0xd0] sm:$0xff]
          %v1340 = vld [vmem:[#allocation2 + $0xd8] sm:$0xff]
          %v1341 = vld [vmem:[#allocation2 + $0xe0] sm:$0xff]
          %v1342 = vld [vmem:[#allocation2 + $0xe8] sm:$0xff]
          %v1343 = vld [vmem:[#allocation2 + $0xf0] sm:$0xff]
          %v1344 = vld [vmem:[#allocation2 + $0xf8] sm:$0xff]
          %1345 = vst [vmem:[%s389] sm:$0xff] %v1313
          %1346 = vst [vmem:[%s389 + $0x8] sm:$0xff] %v1314
          %1347 = vst [vmem:[%s389 + $0x10] sm:$0xff] %v1315
          %1348 = vst [vmem:[%s389 + $0x18] sm:$0xff] %v1316
          %1349 = vst [vmem:[%s389 + $0x20] sm:$0xff] %v1317
          %1350 = vst [vmem:[%s389 + $0x28] sm:$0xff] %v1318
          %1351 = vst [vmem:[%s389 + $0x30] sm:$0xff] %v1319
          %1352 = vst [vmem:[%s389 + $0x38] sm:$0xff] %v1320
          %1353 = vst [vmem:[%s389 + $0x40] sm:$0xff] %v1321
          %1354 = vst [vmem:[%s389 + $0x48] sm:$0xff] %v1322
          %1355 = vst [vmem:[%s389 + $0x50] sm:$0xff] %v1323
          %1356 = vst [vmem:[%s389 + $0x58] sm:$0xff] %v1324
          %1357 = vst [vmem:[%s389 + $0x60] sm:$0xff] %v1325
          %1358 = vst [vmem:[%s389 + $0x68] sm:$0xff] %v1326
          %1359 = vst [vmem:[%s389 + $0x70] sm:$0xff] %v1327
          %1360 = vst [vmem:[%s389 + $0x78] sm:$0xff] %v1328
          %1361 = vst [vmem:[%s389 + $0x80] sm:$0xff] %v1329
          %1362 = vst [vmem:[%s389 + $0x88] sm:$0xff] %v1330
          %1363 = vst [vmem:[%s389 + $0x90] sm:$0xff] %v1331
          %1364 = vst [vmem:[%s389 + $0x98] sm:$0xff] %v1332
          %1365 = vst [vmem:[%s389 + $0xa0] sm:$0xff] %v1333
          %1366 = vst [vmem:[%s389 + $0xa8] sm:$0xff] %v1334
          %1367 = vst [vmem:[%s389 + $0xb0] sm:$0xff] %v1335
          %1368 = vst [vmem:[%s389 + $0xb8] sm:$0xff] %v1336
          %1369 = vst [vmem:[%s389 + $0xc0] sm:$0xff] %v1337
          %1370 = vst [vmem:[%s389 + $0xc8] sm:$0xff] %v1338
          %1371 = vst [vmem:[%s389 + $0xd0] sm:$0xff] %v1339
          %1372 = vst [vmem:[%s389 + $0xd8] sm:$0xff] %v1340
          %1373 = vst [vmem:[%s389 + $0xe0] sm:$0xff] %v1341
          %1374 = vst [vmem:[%s389 + $0xe8] sm:$0xff] %v1342
          %1375 = vst [vmem:[%s389 + $0xf0] sm:$0xff] %v1343
          %1376 = vst [vmem:[%s389 + $0xf8] sm:$0xff] %v1344
          %v1377 = vld [vmem:[%s3] sm:$0x1]
          %v1378 = vadd.f32 %v1313, %v1314
          %v1379 = vadd.f32 %v1378, %v1315
          %v1380 = vadd.f32 %v1379, %v1316
          %v1381 = vadd.f32 %v1380, %v1317
          %v1382 = vadd.f32 %v1381, %v1318
          %v1383 = vadd.f32 %v1382, %v1319
          %v1384 = vadd.f32 %v1383, %v1320
          %v1385 = vadd.f32 %v1384, %v1321
          %v1386 = vadd.f32 %v1385, %v1322
          %v1387 = vadd.f32 %v1386, %v1323
          %v1388 = vadd.f32 %v1387, %v1324
          %v1389 = vadd.f32 %v1388, %v1325
          %v1390 = vadd.f32 %v1389, %v1326
          %v1391 = vadd.f32 %v1390, %v1327
          %v1392 = vadd.f32 %v1391, %v1328
          %v1393 = vadd.f32 %v1392, %v1329
          %v1394 = vadd.f32 %v1393, %v1330
          %v1395 = vadd.f32 %v1394, %v1331
          %v1396 = vadd.f32 %v1395, %v1332
          %v1397 = vadd.f32 %v1396, %v1333
          %v1398 = vadd.f32 %v1397, %v1334
          %v1399 = vadd.f32 %v1398, %v1335
          %v1400 = vadd.f32 %v1399, %v1336
          %v1401 = vadd.f32 %v1400, %v1337
          %v1402 = vadd.f32 %v1401, %v1338
          %v1403 = vadd.f32 %v1402, %v1339
          %v1404 = vadd.f32 %v1403, %v1340
          %v1405 = vadd.f32 %v1404, %v1341
          %v1406 = vadd.f32 %v1405, %v1342
          %v1407 = vadd.f32 %v1406, %v1343
          %v1408 = vadd.f32 %v1407, %v1344
          %v1409 = vrot.slane %v1408, 4
          %v1410 = vadd.f32 %v1408, %v1409
          %v1411 = vrot.slane %v1410, 2
          %v1412 = vadd.f32 %v1410, %v1411
          %v1413 = vrot.slane %v1412, 1
          %v1414 = vadd.f32 %v1412, %v1413
          %v1415 = vadd.f32 %v1377, %v1414
          %1416 = vst [vmem:[%s3] sm:$0x1] %v1415
          %v1417 = vld [vmem:[%s4] sm:$0x1]
          %v1418 = vmul.f32 %v1313, %v1313
          %v1419 = vmul.f32 %v1314, %v1314
          %v1420 = vmul.f32 %v1315, %v1315
          %v1421 = vmul.f32 %v1316, %v1316
          %v1422 = vmul.f32 %v1317, %v1317
          %v1423 = vmul.f32 %v1318, %v1318
          %v1424 = vmul.f32 %v1319, %v1319
          %v1425 = vmul.f32 %v1320, %v1320
          %v1426 = vmul.f32 %v1321, %v1321
          %v1427 = vmul.f32 %v1322, %v1322
          %v1428 = vmul.f32 %v1323, %v1323
          %v1429 = vmul.f32 %v1324, %v1324
          %v1430 = vmul.f32 %v1325, %v1325
          %v1431 = vmul.f32 %v1326, %v1326
          %v1432 = vmul.f32 %v1327, %v1327
          %v1433 = vmul.f32 %v1328, %v1328
          %v1434 = vmul.f32 %v1329, %v1329
          %v1435 = vmul.f32 %v1330, %v1330
          %v1436 = vmul.f32 %v1331, %v1331
          %v1437 = vmul.f32 %v1332, %v1332
          %v1438 = vmul.f32 %v1333, %v1333
          %v1439 = vmul.f32 %v1334, %v1334
          %v1440 = vmul.f32 %v1335, %v1335
          %v1441 = vmul.f32 %v1336, %v1336
          %v1442 = vmul.f32 %v1337, %v1337
          %v1443 = vmul.f32 %v1338, %v1338
          %v1444 = vmul.f32 %v1339, %v1339
          %v1445 = vmul.f32 %v1340, %v1340
          %v1446 = vmul.f32 %v1341, %v1341
          %v1447 = vmul.f32 %v1342, %v1342
          %v1448 = vmul.f32 %v1343, %v1343
          %v1449 = vmul.f32 %v1344, %v1344
          %v1450 = vadd.f32 %v1418, %v1419
          %v1451 = vadd.f32 %v1450, %v1420
          %v1452 = vadd.f32 %v1451, %v1421
          %v1453 = vadd.f32 %v1452, %v1422
          %v1454 = vadd.f32 %v1453, %v1423
          %v1455 = vadd.f32 %v1454, %v1424
          %v1456 = vadd.f32 %v1455, %v1425
          %v1457 = vadd.f32 %v1456, %v1426
          %v1458 = vadd.f32 %v1457, %v1427
          %v1459 = vadd.f32 %v1458, %v1428
          %v1460 = vadd.f32 %v1459, %v1429
          %v1461 = vadd.f32 %v1460, %v1430
          %v1462 = vadd.f32 %v1461, %v1431
          %v1463 = vadd.f32 %v1462, %v1432
          %v1464 = vadd.f32 %v1463, %v1433
          %v1465 = vadd.f32 %v1464, %v1434
          %v1466 = vadd.f32 %v1465, %v1435
          %v1467 = vadd.f32 %v1466, %v1436
          %v1468 = vadd.f32 %v1467, %v1437
          %v1469 = vadd.f32 %v1468, %v1438
          %v1470 = vadd.f32 %v1469, %v1439
          %v1471 = vadd.f32 %v1470, %v1440
          %v1472 = vadd.f32 %v1471, %v1441
          %v1473 = vadd.f32 %v1472, %v1442
          %v1474 = vadd.f32 %v1473, %v1443
          %v1475 = vadd.f32 %v1474, %v1444
          %v1476 = vadd.f32 %v1475, %v1445
          %v1477 = vadd.f32 %v1476, %v1446
          %v1478 = vadd.f32 %v1477, %v1447
          %v1479 = vadd.f32 %v1478, %v1448
          %v1480 = vadd.f32 %v1479, %v1449
          %v1481 = vrot.slane %v1480, 4
          %v1482 = vadd.f32 %v1480, %v1481
          %v1483 = vrot.slane %v1482, 2
          %v1484 = vadd.f32 %v1482, %v1483
          %v1485 = vrot.slane %v1484, 1
          %v1486 = vadd.f32 %v1484, %v1485
          %v1487 = vadd.f32 %v1417, %v1486
          %1488 = vst [vmem:[%s4] sm:$0x1] %v1487
        $region66: #{basic_block_forward.10} parent=49 // pred_fallthru
          _
        %s1489 = smul.u32 32, %s20
        %p1490 = scmp.lt.s32.totalorder %s1489, 63
        %s1491 = scalar_select %p1490, %s1489, 63
        %s1492 = smul.addr %s1491, 8
        %s1493 = scalar_lea.vmem %s2, %s1492
        // Predicated region
        $region67: #{basic_block_forward.10} parent=49 // pred_check
          %p1494 = pneg %p100
        $region68: #{basic_block_forward.10} parent=49 // pred_check_branch
          %1496 = sbr.rel (%p1494) target = $region70
        $region69: #{basic_block_forward.10} parent=49 // pred_region
          %s1497 = smul.u32 32, %s20
        $region70: #{basic_block_forward.10} parent=49 // pred_fallthru
          _
        // Predicated region
        $region71: #{basic_block_forward.10} parent=49 // pred_check
          %p1498 = pneg %p121
        $region72: #{basic_block_forward.10} parent=49 // pred_check_branch
          %1500 = sbr.rel (%p1498) target = $region74
        $region73: #{basic_block_forward.10} parent=49 // pred_region
          _
        $region74: #{basic_block_forward.10} parent=49 // pred_fallthru
          _
        // Predicated region
        $region75: #{basic_block_forward.10} parent=49 // pred_check
          %p1501 = pneg %p142
        $region76: #{basic_block_forward.10} parent=49 // pred_check_branch
          %1503 = sbr.rel (%p1501) target = $region78
        $region77: #{basic_block_forward.10} parent=49 // pred_region
          _
        $region78: #{basic_block_forward.10} parent=49 // pred_fallthru
          _
        // Predicated region
        $region79: #{basic_block_forward.10} parent=49 // pred_check
          %p1504 = pneg %p121
        $region80: #{basic_block_forward.10} parent=49 // pred_check_branch
          %1506 = sbr.rel (%p1504) target = $region82
        $region81: #{basic_block_forward.10} parent=49 // pred_region
          _
        $region82: #{basic_block_forward.10} parent=49 // pred_fallthru
          _
        // Predicated region
        $region83: #{basic_block_forward.10} parent=49 // pred_check
          %p1507 = pneg %p142
        $region84: #{basic_block_forward.10} parent=49 // pred_check_branch
          %1509 = sbr.rel (%p1507) target = $region86
        $region85: #{basic_block_forward.10} parent=49 // pred_region
          _
        $region86: #{basic_block_forward.10} parent=49 // pred_fallthru
          _
      $region50: #{basic_block_forward.10} parent=5 // pred_fallthru
        _
      %p1510 = scmp.le.s32.totalorder 2, %s11
      // Predicated region
      $region87: #{basic_block_forward.10} parent=5 // pred_check
        %p1511 = pneg %p1510
      $region88: #{basic_block_forward.10} parent=5 // pred_check_branch
        %1513 = sbr.rel (%p1511) target = $region90
      $region89: #{basic_block_forward.10} parent=5 // pred_region
        %s1514 = ssub.s32 %s11, 2
        // Predicated region
        $region91: #{basic_block_forward.10} parent=89 // pred_check
          %p1515 = pneg %p106
        $region92: #{basic_block_forward.10} parent=89 // pred_check_branch
          %1517 = sbr.rel (%p1515) target = $region94
        $region93: #{basic_block_forward.10} parent=89 // pred_region
          %s1518 = smul.u32 32, %s22
          %p1519 = scmp.lt.s32.totalorder %s1518, 63
          %s1520 = scalar_select %p1519, %s1518, 63
          %s1521 = smul.addr %s1520, 8
          %s1522 = scalar_lea.vmem %s2, %s1521
        $region94: #{basic_block_forward.10} parent=89 // pred_fallthru
          _
      $region90: #{basic_block_forward.10} parent=5 // pred_fallthru
        _
    $region6: #{basic_block_forward.10} parent=1 // loop_footer
      %s15 = sadd.s32 1, %s11
    $region7: #{basic_block_forward.10} parent=1 // loop_footer_branch
      %10 = sbr.rel target = $region3
    $region8: #{basic_block_forward.10} parent=1 // loop_exit
      _

</llo_original>
